<compile_context>
chip_gen: v7x
topology: tpu7x:2x2x1
jax: 0.10.0
libtpu: 0.0.40
codegen_flags: <defaults>
</compile_context>

<pallas_src>
import functools

import jax
import jax.numpy as jnp
from jax.experimental import pallas as pl
from jax.experimental.pallas import tpu as pltpu

BN_EPS = 1e-5    # torch BatchNorm1d default eps
L2_EPS = 1e-8    # l2norm eps in the reference code
NEG_BIG = -1e30  # softmax masking value for padded region rows


def _round_up(x, m):
    return ((x + m - 1) // m) * m


def encoder_kernel(imgf_ref,           # VMEM (TB, NP, D) regions, zero-padded rows
                   lens_ref,           # VMEM (TB, 1) int32 valid-region counts
                   wl_ref, bl_ref,     # (D, D), (1, D)   SGE.embedding_local Linear (BN folded)
                   wg_ref, bg_ref,     # (D, D), (1, D)   SGE.embedding_global Linear (BN folded)
                   wc_ref,             # (1, D)           SGE.embedding_common Linear(D,1) weight
                   wfc_ref, bfc_ref,   # (D, E), (1, E)   EncoderImageAggr.fc
                   out_ref,            # VMEM (TB, E)
                   *, attention_lamda, num_region, n_pad, tb):
    d = imgf_ref.shape[-1]
    x = imgf_ref[...]                                            # (TB, NP, D) f32

    # ---------------- SGE local embedding: one dense MXU matmul over all TB*NP rows ----------------
    # Linear -> BN(eval, folded into weights) -> Tanh -> Dropout(id)
    x2 = x.reshape(tb * n_pad, d)                                # tile-aligned: n_pad % 8 == 0
    l2 = jnp.tanh(jnp.dot(x2, wl_ref[...], preferred_element_type=jnp.float32) + bl_ref[...])
    l_emb = l2.reshape(tb, n_pad, d)                             # (TB, NP, D)

    # ---------------- SGE global embedding: batched (TB, D) matmul ----------------
    # reference: torch.mean(images_rg, dim=1) over ALL num_region regions (padded rows are zero)
    avg = jnp.sum(x, axis=1) * (1.0 / float(num_region))         # (TB, D)
    g_emb = jnp.tanh(jnp.dot(avg, wg_ref[...], preferred_element_type=jnp.float32)
                     + bg_ref[...])                              # (TB, D)

    # Static region-validity mask (rows >= num_region are zero padding added by the wrapper).
    ridx = jax.lax.broadcasted_iota(jnp.int32, (1, n_pad, 1), 1)  # (1, NP, 1)
    region_valid = ridx < num_region

    # ---------------- attention weights over regions (softmax dim=regions), batched ----------------
    # embedding_common: Linear(D, 1); its bias is constant over regions and cancels exactly in
    # softmax(dim=regions), so it is omitted.
    common = l_emb * g_emb[:, None, :]                            # (TB, NP, D)
    w = jnp.sum(common * wc_ref[...], axis=-1, keepdims=True)     # (TB, NP, 1)
    w = jnp.where(region_valid, w, NEG_BIG)
    w = jnp.exp(w - jnp.max(w, axis=1, keepdims=True))
    w = w * pl.reciprocal(jnp.sum(w, axis=1, keepdims=True), approx=True)

    new_g = jnp.sum(w * x, axis=1)                                # (TB, D)
    ng_norm = jnp.sqrt(jnp.sum(new_g * new_g, axis=-1, keepdims=True)) + L2_EPS
    new_g = new_g * pl.reciprocal(ng_norm, approx=True)           # l2norm

    # ---------------- region_attention: attn softmax -> l2norm -> residual add ----------------
    attn = jnp.sum(x * new_g[:, None, :], axis=-1, keepdims=True) * attention_lamda  # (TB, NP, 1)
    attn = jnp.where(region_valid, attn, NEG_BIG)
    attn = jnp.exp(attn - jnp.max(attn, axis=1, keepdims=True))
    attn = attn * pl.reciprocal(jnp.sum(attn, axis=1, keepdims=True), approx=True)
    a_norm = jnp.sqrt(jnp.sum(attn * attn, axis=1, keepdims=True)) + L2_EPS
    attn = attn * pl.reciprocal(a_norm, approx=True)

    feats = x + attn * new_g[:, None, :]                          # (TB, NP, D)  SGE output

    # ---------------- GPO stand-in: length-masked mean, applied BEFORE the (affine) fc ----------------
    lens = lens_ref[...]                                          # (TB, 1) int32
    pool_mask = (ridx < lens[:, None, :]).astype(jnp.float32)     # (TB, NP, 1)
    n_valid = jnp.maximum(lens, 1).astype(jnp.float32)            # (TB, 1), guard n == 0
    pooled = jnp.sum(feats * pool_mask, axis=1) * pl.reciprocal(n_valid, approx=True)  # (TB, D)

    # ---------------- fc + final l2norm, batched; one dense (TB, E) store ----------------
    f = jnp.dot(pooled, wfc_ref[...], preferred_element_type=jnp.float32) + bfc_ref[...]
    f_norm = jnp.sqrt(jnp.sum(f * f, axis=-1, keepdims=True)) + L2_EPS
    out_ref[...] = (f * pl.reciprocal(f_norm, approx=True)).astype(out_ref.dtype)


def init_params(key, img_dim, embed_size):
    """Deterministic Xavier-uniform init (matches the module's init_weights), biases = 0."""
    D, E = img_dim, embed_size
    ks = jax.random.split(key, 4)

    def xavier(k, fan_in, fan_out, shape):
        r = jnp.sqrt(6.0) / jnp.sqrt(float(fan_in + fan_out))
        return jax.random.uniform(k, shape, jnp.float32, -r, r)

    return dict(
        wl=xavier(ks[0], D, D, (D, D)),       # embedding_local Linear, stored as (in, out)
        bl=jnp.zeros((1, D), jnp.float32),
        wg=xavier(ks[1], D, D, (D, D)),       # embedding_global Linear
        bg=jnp.zeros((1, D), jnp.float32),
        wc=xavier(ks[2], D, 1, (1, D)),       # embedding_common Linear(D, 1) weight
        bc=jnp.zeros((1, 1), jnp.float32),    # kept for parity; cancels in softmax -> unused
        wfc=xavier(ks[3], D, E, (D, E)),      # fc Linear, stored as (in, out)
        bfc=jnp.zeros((1, E), jnp.float32),
    )


def fold_bn_into_params(params):
    """Fold eval-mode BatchNorm1d (fresh stats => x / sqrt(1+eps)) into the preceding Linear."""
    s = float(1.0 / (1.0 + BN_EPS) ** 0.5)
    p = dict(params)
    for k in ("wl", "bl", "wg", "bg"):
        p[k] = params[k] * s
    return p


def encoder_image_aggr(images_rg, image_lengths, params, attention_lamda=9.0, block_b=8):
    """params must already have the BN scale folded in (see fold_bn_into_params)."""
    B, N, D = images_rg.shape
    E = params["wfc"].shape[1]

    # batch tile: a multiple of 8 (sublane tile) so every (tb, *) block is layout-legal
    tb = min(_round_up(max(1, block_b), 8), _round_up(B, 8))
    b_pad = _round_up(B, tb)
    n_pad = _round_up(N, 8)                      # sublane-align the region axis

    x = images_rg.astype(jnp.float32)
    if b_pad != B or n_pad != N:
        x = jnp.pad(x, ((0, b_pad - B), (0, n_pad - N), (0, 0)))

    lens = image_lengths.astype(jnp.int32).reshape(B, 1)
    if b_pad != B:
        lens = jnp.pad(lens, ((0, b_pad - B), (0, 0)), constant_values=N)

    kernel = functools.partial(encoder_kernel,
                               attention_lamda=float(attention_lamda),
                               num_region=N, n_pad=n_pad, tb=tb)

    grid_spec = pltpu.PrefetchScalarGridSpec(
        num_scalar_prefetch=0,
        grid=(b_pad // tb,),
        in_specs=[
            pl.BlockSpec((tb, n_pad, D), lambda b: (b, 0, 0)),   # region block
            pl.BlockSpec((tb, 1), lambda b: (b, 0)),             # lengths
            pl.BlockSpec((D, D), lambda b: (0, 0)),              # wl
            pl.BlockSpec((1, D), lambda b: (0, 0)),              # bl
            pl.BlockSpec((D, D), lambda b: (0, 0)),              # wg
            pl.BlockSpec((1, D), lambda b: (0, 0)),              # bg
            pl.BlockSpec((1, D), lambda b: (0, 0)),              # wc
            pl.BlockSpec((D, E), lambda b: (0, 0)),              # wfc
            pl.BlockSpec((1, E), lambda b: (0, 0)),              # bfc
        ],
        out_specs=pl.BlockSpec((tb, E), lambda b: (b, 0)),
    )

    out = pl.pallas_call(
        kernel,
        out_shape=jax.ShapeDtypeStruct((b_pad, E), jnp.float32),
        grid_spec=grid_spec,
        compiler_params=pltpu.CompilerParams(dimension_semantics=("parallel",)),
    )(x, lens,
      params["wl"], params["bl"], params["wg"], params["bg"],
      params["wc"], params["wfc"], params["bfc"])
    return out[:B]


if __name__ == "__main__":
    B = 16
    N = 36            # num_region is hard-coded to 36 in the module (BatchNorm1d(36))
    IMG_DIM = 32      # img_dim
    EMBED = 16        # embed_size

    key = jax.random.PRNGKey(0)
    k_img, k_param = jax.random.split(key)

    images_rg = jax.random.normal(k_img, (B, N, IMG_DIM), dtype=jnp.float32)
    image_lengths = jnp.array([36, 30, 36, 25, 36, 36, 18, 36,
                               36, 28, 33, 36, 21, 36, 30, 36], dtype=jnp.int32)
    params = fold_bn_into_params(init_params(k_param, IMG_DIM, EMBED))

    out = encoder_image_aggr(images_rg, image_lengths, params,
                             attention_lamda=9.0, block_b=8)
    out = jax.block_until_ready(out)
    assert out.shape == (B, EMBED)
    assert bool(jnp.all(jnp.isfinite(out)))
    print("KERNEL_OK")
</pallas_src>

<mosaic_0001>
module attributes {stable_mosaic.version = 11 : i64} {
  func.func @encoder_kernel(%arg0: i32, %arg1: memref<8x40x32xf32, #tpu.memory_space<vmem>>, %arg2: memref<8x1xi32, #tpu.memory_space<vmem>>, %arg3: memref<32x32xf32, #tpu.memory_space<vmem>>, %arg4: memref<1x32xf32, #tpu.memory_space<vmem>>, %arg5: memref<32x32xf32, #tpu.memory_space<vmem>>, %arg6: memref<1x32xf32, #tpu.memory_space<vmem>>, %arg7: memref<1x32xf32, #tpu.memory_space<vmem>>, %arg8: memref<32x16xf32, #tpu.memory_space<vmem>>, %arg9: memref<1x16xf32, #tpu.memory_space<vmem>>, %arg10: memref<8x16xf32, #tpu.memory_space<vmem>>) attributes {dimension_semantics = [#tpu.dimension_semantics<parallel>], iteration_bounds = array<i64: 2>, scalar_prefetch = 0 : i64, scratch_operands = 0 : i64, tpu.core_type = #tpu.core_type<tc>, window_params = [{transform_indices = @transform_0, window_bounds = array<i64: 8, 40, 32>}, {transform_indices = @transform_1, window_bounds = array<i64: 8, 1>}, {pipeline_mode = #tpu.pipeline_mode<synchronous>, transform_indices = @transform_2, window_bounds = array<i64: 32, 32>}, {pipeline_mode = #tpu.pipeline_mode<synchronous>, transform_indices = @transform_3, window_bounds = array<i64: 1, 32>}, {pipeline_mode = #tpu.pipeline_mode<synchronous>, transform_indices = @transform_4, window_bounds = array<i64: 32, 32>}, {pipeline_mode = #tpu.pipeline_mode<synchronous>, transform_indices = @transform_5, window_bounds = array<i64: 1, 32>}, {pipeline_mode = #tpu.pipeline_mode<synchronous>, transform_indices = @transform_6, window_bounds = array<i64: 1, 32>}, {pipeline_mode = #tpu.pipeline_mode<synchronous>, transform_indices = @transform_7, window_bounds = array<i64: 32, 16>}, {pipeline_mode = #tpu.pipeline_mode<synchronous>, transform_indices = @transform_8, window_bounds = array<i64: 1, 16>}, {transform_indices = @transform_9, window_bounds = array<i64: 8, 16>}]} {
    %c0 = arith.constant 0 : index
    %c0_0 = arith.constant 0 : index
    %c0_1 = arith.constant 0 : index
    %0 = vector.load %arg1[%c0, %c0_0, %c0_1] : memref<8x40x32xf32, #tpu.memory_space<vmem>>, vector<8x40x32xf32>
    %1 = vector.shape_cast %0 : vector<8x40x32xf32> to vector<320x32xf32>
    %c0_2 = arith.constant 0 : index
    %c0_3 = arith.constant 0 : index
    %2 = vector.load %arg3[%c0_2, %c0_3] : memref<32x32xf32, #tpu.memory_space<vmem>>, vector<32x32xf32>
    %cst = arith.constant dense<0.000000e+00> : vector<320x32xf32>
    %3 = tpu.matmul %1, %2, %cst {dimension_numbers = #tpu.dot_dimension_numbers<[1], [0], [0], [1], [0, 0, 1, 1], [], []>} : vector<320x32xf32>, vector<32x32xf32>, vector<320x32xf32> -> vector<320x32xf32>
    %c0_4 = arith.constant 0 : index
    %c0_5 = arith.constant 0 : index
    %4 = vector.load %arg4[%c0_4, %c0_5] : memref<1x32xf32, #tpu.memory_space<vmem>>, vector<1x32xf32>
    %5 = vector.broadcast %4 : vector<1x32xf32> to vector<320x32xf32>
    %6 = arith.addf %3, %5 : vector<320x32xf32>
    %7 = math.tanh %6 : vector<320x32xf32>
    %8 = vector.shape_cast %7 : vector<320x32xf32> to vector<8x40x32xf32>
    %cst_6 = arith.constant dense<0.000000e+00> : vector<8x32xf32>
    %9 = vector.multi_reduction <add>, %0, %cst_6 [1] : vector<8x40x32xf32> to vector<8x32xf32>
    %cst_7 = arith.constant 0.027777778 : f32
    %10 = vector.broadcast %cst_7 : f32 to vector<8x32xf32>
    %11 = arith.mulf %9, %10 : vector<8x32xf32>
    %c0_8 = arith.constant 0 : index
    %c0_9 = arith.constant 0 : index
    %12 = vector.load %arg5[%c0_8, %c0_9] : memref<32x32xf32, #tpu.memory_space<vmem>>, vector<32x32xf32>
    %cst_10 = arith.constant dense<0.000000e+00> : vector<8x32xf32>
    %13 = tpu.matmul %11, %12, %cst_10 {dimension_numbers = #tpu.dot_dimension_numbers<[1], [0], [0], [1], [0, 0, 1, 1], [], []>} : vector<8x32xf32>, vector<32x32xf32>, vector<8x32xf32> -> vector<8x32xf32>
    %c0_11 = arith.constant 0 : index
    %c0_12 = arith.constant 0 : index
    %14 = vector.load %arg6[%c0_11, %c0_12] : memref<1x32xf32, #tpu.memory_space<vmem>>, vector<1x32xf32>
    %15 = vector.broadcast %14 : vector<1x32xf32> to vector<8x32xf32>
    %16 = arith.addf %13, %15 : vector<8x32xf32>
    %17 = math.tanh %16 : vector<8x32xf32>
    %18 = tpu.iota {dimensions = array<i32: 1>} : vector<1x40x1xi32>
    %c36_i32 = arith.constant 36 : i32
    %19 = vector.broadcast %c36_i32 : i32 to vector<1x40x1xi32>
    %20 = arith.cmpi slt, %18, %19 : vector<1x40x1xi32>
    %21 = vector.shape_cast %17 : vector<8x32xf32> to vector<8x1x32xf32>
    %22 = vector.broadcast %21 : vector<8x1x32xf32> to vector<8x40x32xf32>
    %23 = arith.mulf %8, %22 : vector<8x40x32xf32>
    %c0_13 = arith.constant 0 : index
    %c0_14 = arith.constant 0 : index
    %24 = vector.load %arg7[%c0_13, %c0_14] : memref<1x32xf32, #tpu.memory_space<vmem>>, vector<1x32xf32>
    %25 = vector.shape_cast %24 : vector<1x32xf32> to vector<1x1x32xf32>
    %26 = vector.broadcast %25 : vector<1x1x32xf32> to vector<8x40x32xf32>
    %27 = arith.mulf %23, %26 : vector<8x40x32xf32>
    %cst_15 = arith.constant dense<0.000000e+00> : vector<8x40xf32>
    %28 = vector.multi_reduction <add>, %27, %cst_15 [2] : vector<8x40x32xf32> to vector<8x40xf32>
    %29 = vector.shape_cast %28 : vector<8x40xf32> to vector<8x40x1xf32>
    %cst_16 = arith.constant -1.000000e+30 : f32
    %30 = vector.shape_cast %20 : vector<1x40x1xi1> to vector<1x40x1xi1>
    %31 = vector.broadcast %30 : vector<1x40x1xi1> to vector<8x40x1xi1>
    %32 = vector.broadcast %cst_16 : f32 to vector<8x40x1xf32>
    %33 = arith.select %31, %29, %32 : vector<8x40x1xi1>, vector<8x40x1xf32>
    %cst_17 = arith.constant dense<0xFF800000> : vector<8x1xf32>
    %34 = vector.multi_reduction <maximumf>, %33, %cst_17 [1] : vector<8x40x1xf32> to vector<8x1xf32>
    %35 = vector.shape_cast %34 : vector<8x1xf32> to vector<8x1x1xf32>
    %36 = vector.broadcast %35 : vector<8x1x1xf32> to vector<8x40x1xf32>
    %37 = arith.subf %33, %36 : vector<8x40x1xf32>
    %38 = math.exp %37 : vector<8x40x1xf32>
    %cst_18 = arith.constant dense<0.000000e+00> : vector<8x1xf32>
    %39 = vector.multi_reduction <add>, %38, %cst_18 [1] : vector<8x40x1xf32> to vector<8x1xf32>
    %40 = vector.shape_cast %39 : vector<8x1xf32> to vector<8x1x1xf32>
    %41 = tpu.reciprocal %40 {approx = true} : vector<8x1x1xf32> -> vector<8x1x1xf32>
    %42 = vector.broadcast %41 : vector<8x1x1xf32> to vector<8x40x1xf32>
    %43 = arith.mulf %38, %42 : vector<8x40x1xf32>
    %44 = vector.broadcast %43 : vector<8x40x1xf32> to vector<8x40x32xf32>
    %45 = arith.mulf %44, %0 : vector<8x40x32xf32>
    %cst_19 = arith.constant dense<0.000000e+00> : vector<8x32xf32>
    %46 = vector.multi_reduction <add>, %45, %cst_19 [1] : vector<8x40x32xf32> to vector<8x32xf32>
    %47 = arith.mulf %46, %46 : vector<8x32xf32>
    %cst_20 = arith.constant dense<0.000000e+00> : vector<8xf32>
    %48 = vector.multi_reduction <add>, %47, %cst_20 [1] : vector<8x32xf32> to vector<8xf32>
    %49 = vector.shape_cast %48 : vector<8xf32> to vector<8x1xf32>
    %50 = math.sqrt %49 : vector<8x1xf32>
    %cst_21 = arith.constant 9.99999993E-9 : f32
    %51 = vector.broadcast %cst_21 : f32 to vector<8x1xf32>
    %52 = arith.addf %50, %51 : vector<8x1xf32>
    %53 = tpu.reciprocal %52 {approx = true} : vector<8x1xf32> -> vector<8x1xf32>
    %54 = vector.broadcast %53 : vector<8x1xf32> to vector<8x32xf32>
    %55 = arith.mulf %46, %54 : vector<8x32xf32>
    %56 = vector.shape_cast %55 : vector<8x32xf32> to vector<8x1x32xf32>
    %57 = vector.broadcast %56 : vector<8x1x32xf32> to vector<8x40x32xf32>
    %58 = arith.mulf %0, %57 : vector<8x40x32xf32>
    %cst_22 = arith.constant dense<0.000000e+00> : vector<8x40xf32>
    %59 = vector.multi_reduction <add>, %58, %cst_22 [2] : vector<8x40x32xf32> to vector<8x40xf32>
    %60 = vector.shape_cast %59 : vector<8x40xf32> to vector<8x40x1xf32>
    %cst_23 = arith.constant 9.000000e+00 : f32
    %61 = vector.broadcast %cst_23 : f32 to vector<8x40x1xf32>
    %62 = arith.mulf %60, %61 : vector<8x40x1xf32>
    %cst_24 = arith.constant -1.000000e+30 : f32
    %63 = vector.shape_cast %20 : vector<1x40x1xi1> to vector<1x40x1xi1>
    %64 = vector.broadcast %63 : vector<1x40x1xi1> to vector<8x40x1xi1>
    %65 = vector.broadcast %cst_24 : f32 to vector<8x40x1xf32>
    %66 = arith.select %64, %62, %65 : vector<8x40x1xi1>, vector<8x40x1xf32>
    %cst_25 = arith.constant dense<0xFF800000> : vector<8x1xf32>
    %67 = vector.multi_reduction <maximumf>, %66, %cst_25 [1] : vector<8x40x1xf32> to vector<8x1xf32>
    %68 = vector.shape_cast %67 : vector<8x1xf32> to vector<8x1x1xf32>
    %69 = vector.broadcast %68 : vector<8x1x1xf32> to vector<8x40x1xf32>
    %70 = arith.subf %66, %69 : vector<8x40x1xf32>
    %71 = math.exp %70 : vector<8x40x1xf32>
    %cst_26 = arith.constant dense<0.000000e+00> : vector<8x1xf32>
    %72 = vector.multi_reduction <add>, %71, %cst_26 [1] : vector<8x40x1xf32> to vector<8x1xf32>
    %73 = vector.shape_cast %72 : vector<8x1xf32> to vector<8x1x1xf32>
    %74 = tpu.reciprocal %73 {approx = true} : vector<8x1x1xf32> -> vector<8x1x1xf32>
    %75 = vector.broadcast %74 : vector<8x1x1xf32> to vector<8x40x1xf32>
    %76 = arith.mulf %71, %75 : vector<8x40x1xf32>
    %77 = arith.mulf %76, %76 : vector<8x40x1xf32>
    %cst_27 = arith.constant dense<0.000000e+00> : vector<8x1xf32>
    %78 = vector.multi_reduction <add>, %77, %cst_27 [1] : vector<8x40x1xf32> to vector<8x1xf32>
    %79 = vector.shape_cast %78 : vector<8x1xf32> to vector<8x1x1xf32>
    %80 = math.sqrt %79 : vector<8x1x1xf32>
    %cst_28 = arith.constant 9.99999993E-9 : f32
    %81 = vector.broadcast %cst_28 : f32 to vector<8x1x1xf32>
    %82 = arith.addf %80, %81 : vector<8x1x1xf32>
    %83 = tpu.reciprocal %82 {approx = true} : vector<8x1x1xf32> -> vector<8x1x1xf32>
    %84 = vector.broadcast %83 : vector<8x1x1xf32> to vector<8x40x1xf32>
    %85 = arith.mulf %76, %84 : vector<8x40x1xf32>
    %86 = vector.shape_cast %55 : vector<8x32xf32> to vector<8x1x32xf32>
    %87 = vector.broadcast %85 : vector<8x40x1xf32> to vector<8x40x32xf32>
    %88 = vector.broadcast %86 : vector<8x1x32xf32> to vector<8x40x32xf32>
    %89 = arith.mulf %87, %88 : vector<8x40x32xf32>
    %90 = arith.addf %0, %89 : vector<8x40x32xf32>
    %c0_29 = arith.constant 0 : index
    %c0_30 = arith.constant 0 : index
    %91 = vector.load %arg2[%c0_29, %c0_30] : memref<8x1xi32, #tpu.memory_space<vmem>>, vector<8x1xi32>
    %92 = vector.shape_cast %91 : vector<8x1xi32> to vector<8x1x1xi32>
    %93 = vector.broadcast %18 : vector<1x40x1xi32> to vector<8x40x1xi32>
    %94 = vector.broadcast %92 : vector<8x1x1xi32> to vector<8x40x1xi32>
    %95 = arith.cmpi slt, %93, %94 : vector<8x40x1xi32>
    %96 = arith.extui %95 : vector<8x40x1xi1> to vector<8x40x1xi32>
    %97 = arith.sitofp %96 : vector<8x40x1xi32> to vector<8x40x1xf32>
    %c1_i32 = arith.constant 1 : i32
    %98 = vector.broadcast %c1_i32 : i32 to vector<8x1xi32>
    %99 = arith.maxsi %91, %98 : vector<8x1xi32>
    %100 = arith.sitofp %99 : vector<8x1xi32> to vector<8x1xf32>
    %101 = vector.broadcast %97 : vector<8x40x1xf32> to vector<8x40x32xf32>
    %102 = arith.mulf %90, %101 : vector<8x40x32xf32>
    %cst_31 = arith.constant dense<0.000000e+00> : vector<8x32xf32>
    %103 = vector.multi_reduction <add>, %102, %cst_31 [1] : vector<8x40x32xf32> to vector<8x32xf32>
    %104 = tpu.reciprocal %100 {approx = true} : vector<8x1xf32> -> vector<8x1xf32>
    %105 = vector.broadcast %104 : vector<8x1xf32> to vector<8x32xf32>
    %106 = arith.mulf %103, %105 : vector<8x32xf32>
    %c0_32 = arith.constant 0 : index
    %c0_33 = arith.constant 0 : index
    %107 = vector.load %arg8[%c0_32, %c0_33] : memref<32x16xf32, #tpu.memory_space<vmem>>, vector<32x16xf32>
    %cst_34 = arith.constant dense<0.000000e+00> : vector<8x16xf32>
    %108 = tpu.matmul %106, %107, %cst_34 {dimension_numbers = #tpu.dot_dimension_numbers<[1], [0], [0], [1], [0, 0, 1, 1], [], []>} : vector<8x32xf32>, vector<32x16xf32>, vector<8x16xf32> -> vector<8x16xf32>
    %c0_35 = arith.constant 0 : index
    %c0_36 = arith.constant 0 : index
    %109 = vector.load %arg9[%c0_35, %c0_36] : memref<1x16xf32, #tpu.memory_space<vmem>>, vector<1x16xf32>
    %110 = vector.broadcast %109 : vector<1x16xf32> to vector<8x16xf32>
    %111 = arith.addf %108, %110 : vector<8x16xf32>
    %112 = arith.mulf %111, %111 : vector<8x16xf32>
    %cst_37 = arith.constant dense<0.000000e+00> : vector<8xf32>
    %113 = vector.multi_reduction <add>, %112, %cst_37 [1] : vector<8x16xf32> to vector<8xf32>
    %114 = vector.shape_cast %113 : vector<8xf32> to vector<8x1xf32>
    %115 = math.sqrt %114 : vector<8x1xf32>
    %cst_38 = arith.constant 9.99999993E-9 : f32
    %116 = vector.broadcast %cst_38 : f32 to vector<8x1xf32>
    %117 = arith.addf %115, %116 : vector<8x1xf32>
    %118 = tpu.reciprocal %117 {approx = true} : vector<8x1xf32> -> vector<8x1xf32>
    %119 = vector.broadcast %118 : vector<8x1xf32> to vector<8x16xf32>
    %120 = arith.mulf %111, %119 : vector<8x16xf32>
    %c0_39 = arith.constant 0 : index
    %c0_40 = arith.constant 0 : index
    %121 = vector.load %arg10[%c0_39, %c0_40] : memref<8x16xf32, #tpu.memory_space<vmem>>, vector<8x16xf32>
    tpu.vector_store %arg10[%c0_39, %c0_40], %120 {strides = array<i32>} : memref<8x16xf32, #tpu.memory_space<vmem>>, vector<8x16xf32>,
    return
  }
  func.func @transform_0(%arg0: i32) -> (i32, i32, i32) {
    %c0_i32 = arith.constant 0 : i32
    %c0_i32_0 = arith.constant 0 : i32
    %c0_i32_1 = arith.constant 0 : i32
    return %arg0, %c0_i32, %c0_i32_0 : i32, i32, i32
  }
  func.func @transform_1(%arg0: i32) -> (i32, i32) {
    %c0_i32 = arith.constant 0 : i32
    %c0_i32_0 = arith.constant 0 : i32
    return %arg0, %c0_i32 : i32, i32
  }
  func.func @transform_2(%arg0: i32) -> (i32, i32) {
    %c0_i32 = arith.constant 0 : i32
    %c0_i32_0 = arith.constant 0 : i32
    %c0_i32_1 = arith.constant 0 : i32
    return %c0_i32, %c0_i32_0 : i32, i32
  }
  func.func @transform_3(%arg0: i32) -> (i32, i32) {
    %c0_i32 = arith.constant 0 : i32
    %c0_i32_0 = arith.constant 0 : i32
    %c0_i32_1 = arith.constant 0 : i32
    return %c0_i32, %c0_i32_0 : i32, i32
  }
  func.func @transform_4(%arg0: i32) -> (i32, i32) {
    %c0_i32 = arith.constant 0 : i32
    %c0_i32_0 = arith.constant 0 : i32
    %c0_i32_1 = arith.constant 0 : i32
    return %c0_i32, %c0_i32_0 : i32, i32
  }
  func.func @transform_5(%arg0: i32) -> (i32, i32) {
    %c0_i32 = arith.constant 0 : i32
    %c0_i32_0 = arith.constant 0 : i32
    %c0_i32_1 = arith.constant 0 : i32
    return %c0_i32, %c0_i32_0 : i32, i32
  }
  func.func @transform_6(%arg0: i32) -> (i32, i32) {
    %c0_i32 = arith.constant 0 : i32
    %c0_i32_0 = arith.constant 0 : i32
    %c0_i32_1 = arith.constant 0 : i32
    return %c0_i32, %c0_i32_0 : i32, i32
  }
  func.func @transform_7(%arg0: i32) -> (i32, i32) {
    %c0_i32 = arith.constant 0 : i32
    %c0_i32_0 = arith.constant 0 : i32
    %c0_i32_1 = arith.constant 0 : i32
    return %c0_i32, %c0_i32_0 : i32, i32
  }
  func.func @transform_8(%arg0: i32) -> (i32, i32) {
    %c0_i32 = arith.constant 0 : i32
    %c0_i32_0 = arith.constant 0 : i32
    %c0_i32_1 = arith.constant 0 : i32
    return %c0_i32, %c0_i32_0 : i32, i32
  }
  func.func @transform_9(%arg0: i32) -> (i32, i32) {
    %c0_i32 = arith.constant 0 : i32
    %c0_i32_0 = arith.constant 0 : i32
    return %arg0, %c0_i32 : i32, i32
  }
}

</mosaic_0001>

<llo_original>
// kernel: tpu_custom_call.1
$region0: #{tpu_custom_call.1}
  #allocation0 [shape = 'u32[]', space=smem, size = 0x4, offset = 0x4, fixed_abs, tag = 'smem constant byte address 0x4 - core index']
  #allocation1 [shape = 'u32[144,128]{1,0:T(1,128)}', space=vmem, size = 0x12000, scoped, tag = 'internal scratch']
  %s0 = inlined_call_operand.vmem [shape: f32[16,40,32], index: 0, kind: input, shape index: {}]
  %s1 = inlined_call_operand.vmem [shape: s32[16,1], index: 1, kind: input, shape index: {}]
  %s2 = inlined_call_operand.vmem [shape: f32[32,32], index: 2, kind: input, shape index: {}]
  %s3 = inlined_call_operand.vmem [shape: f32[1,32], index: 3, kind: input, shape index: {}]
  %s4 = inlined_call_operand.vmem [shape: f32[32,32], index: 4, kind: input, shape index: {}]
  %s5 = inlined_call_operand.vmem [shape: f32[1,32], index: 5, kind: input, shape index: {}]
  %s6 = inlined_call_operand.vmem [shape: f32[1,32], index: 6, kind: input, shape index: {}]
  %s7 = inlined_call_operand.vmem [shape: f32[32,16], index: 7, kind: input, shape index: {}]
  %s8 = inlined_call_operand.vmem [shape: f32[1,16], index: 8, kind: input, shape index: {}]
  %s9 = inlined_call_operand.hbm [shape: f32[16,16], index: 9, kind: output, shape index: {}]
  %s10 = sld [smem:[#allocation0]]
  $region69: #{tpu_custom_call.1} parent=0
    _
  %s12 = ssub.s32 1, %s10
  %s13 = scalar_select 0, %s12, %s10
  $region1: #{tpu_custom_call.1} parent=0
    #allocation2 [shape = 'u8[8192]{0}', space=vmem, size = 0x2000, scoped, tag = 'output window, operand 0']
    #allocation3 [shape = 's32[2]{0}', space=sflag, size = 0x8, scoped, tag = 'scoped memory for tpu_custom_call.1']
    %14 = vsyncpa [#allocation3], 0
    %s15 = scalar_lea.sflag [#allocation3], 1
    %16 = vsyncpa %s15, 0
    loop: start=0, step=1, limit=4
    $region2: #{tpu_custom_call.1} parent=1 // loop_pre_header
      _
    $region3: #{tpu_custom_call.1} parent=1 // loop_header
      %s18 = sphi 0, %s22
      %p19 = scmp.ge.s32.totalorder %s18, 4
      %s28 = sphi 0, %s30
      %s31 = sphi 0, %s28
      %s32 = sphi 0, %s31
      %s48 = sphi 0, %s32
      %s54 = sphi 0, %s56
      %s57 = sphi 0, %s54
      %s58 = sphi 0, %s57
      %s74 = sphi 0, %s58
      %s78 = sphi 0, %s78
      %s80 = sphi 0, %s78
      %s81 = sphi 0, %s80
      %s95 = sphi 0, %s81
      %s99 = sphi 0, %s99
      %s101 = sphi 0, %s99
      %s102 = sphi 0, %s101
      %s116 = sphi 0, %s102
      %s120 = sphi 0, %s120
      %s122 = sphi 0, %s120
      %s123 = sphi 0, %s122
      %s137 = sphi 0, %s123
      %s141 = sphi 0, %s141
      %s143 = sphi 0, %s141
      %s144 = sphi 0, %s143
      %s158 = sphi 0, %s144
      %s162 = sphi 0, %s162
      %s164 = sphi 0, %s162
      %s165 = sphi 0, %s164
      %s179 = sphi 0, %s165
      %s183 = sphi 0, %s183
      %s185 = sphi 0, %s183
      %s186 = sphi 0, %s185
      %s200 = sphi 0, %s186
      %s204 = sphi 0, %s204
      %s206 = sphi 0, %s204
      %s207 = sphi 0, %s206
      %s221 = sphi 0, %s207
      %s227 = sphi 0, %s229
      %s230 = sphi 0, %s227
      %s231 = sphi 0, %s230
      %s247 = sphi 0, %s231
    $region4: #{tpu_custom_call.1} parent=1 // loop_header_branch
      %21 = sbr.rel (%p19) target = $region8
    $region5: #{tpu_custom_call.1} parent=1 // loop_body
      %s23 = ssub.s32 %s18, 1
      %s24 = ssub.s32 %s18, 2
      %s25 = sadd.s32 %s18, 1
      %s26 = ssub.s32 %s18, %s25
      %p27 = scmp.eq.s32.totalorder %s26, 0
      %s29 = sadd.s32 %s28, 1
      %s30 = scalar_select %p27, %s28, %s29
      %p33 = pneg %p27
      %p34 = scmp.eq.s32.totalorder %s18, 1
      %p35 = por %p33, %p34
      %p36 = scmp.ne.s32.totalorder %s28, %s31
      %p37 = scmp.eq.s32.totalorder %s18, 0
      %p38 = por %p36, %p37
      %p39 = scmp.ne.s32.totalorder %s28, %s31
      %p40 = scmp.eq.s32.totalorder %s23, 1
      %p41 = por %p39, %p40
      %p42 = scmp.ne.s32.totalorder %s31, %s32
      %p43 = scmp.eq.s32.totalorder %s23, 0
      %p44 = por %p42, %p43
      %p45 = scmp.ne.s32.totalorder %s31, %s32
      %p46 = scmp.eq.s32.totalorder %s24, 1
      %p47 = por %p45, %p46
      %p49 = scmp.ne.s32.totalorder %s32, %s48
      %p50 = scmp.eq.s32.totalorder %s24, 0
      %p51 = por %p49, %p50
      %s52 = ssub.s32 %s18, %s25
      %p53 = scmp.eq.s32.totalorder %s52, 0
      %s55 = sadd.s32 %s54, 1
      %s56 = scalar_select %p53, %s54, %s55
      %p59 = pneg %p53
      %p60 = scmp.eq.s32.totalorder %s18, 1
      %p61 = por %p59, %p60
      %p62 = scmp.ne.s32.totalorder %s54, %s57
      %p63 = scmp.eq.s32.totalorder %s18, 0
      %p64 = por %p62, %p63
      %p65 = scmp.ne.s32.totalorder %s54, %s57
      %p66 = scmp.eq.s32.totalorder %s23, 1
      %p67 = por %p65, %p66
      %p68 = scmp.ne.s32.totalorder %s57, %s58
      %p69 = scmp.eq.s32.totalorder %s23, 0
      %p70 = por %p68, %p69
      %p71 = scmp.ne.s32.totalorder %s57, %s58
      %p72 = scmp.eq.s32.totalorder %s24, 1
      %p73 = por %p71, %p72
      %p75 = scmp.ne.s32.totalorder %s58, %s74
      %p76 = scmp.eq.s32.totalorder %s24, 0
      %p77 = por %p75, %p76
      %s79 = sadd.s32 %s78, 1
      %p82 = scmp.eq.s32.totalorder %s18, 1
      %p83 = scmp.ne.s32.totalorder %s78, %s80
      %p84 = scmp.eq.s32.totalorder %s18, 0
      %p85 = por %p83, %p84
      %p86 = scmp.ne.s32.totalorder %s78, %s80
      %p87 = scmp.eq.s32.totalorder %s23, 1
      %p88 = por %p86, %p87
      %p89 = scmp.ne.s32.totalorder %s80, %s81
      %p90 = scmp.eq.s32.totalorder %s23, 0
      %p91 = por %p89, %p90
      %p92 = scmp.ne.s32.totalorder %s80, %s81
      %p93 = scmp.eq.s32.totalorder %s24, 1
      %p94 = por %p92, %p93
      %p96 = scmp.ne.s32.totalorder %s81, %s95
      %p97 = scmp.eq.s32.totalorder %s24, 0
      %p98 = por %p96, %p97
      %s100 = sadd.s32 %s99, 1
      %p103 = scmp.eq.s32.totalorder %s18, 1
      %p104 = scmp.ne.s32.totalorder %s99, %s101
      %p105 = scmp.eq.s32.totalorder %s18, 0
      %p106 = por %p104, %p105
      %p107 = scmp.ne.s32.totalorder %s99, %s101
      %p108 = scmp.eq.s32.totalorder %s23, 1
      %p109 = por %p107, %p108
      %p110 = scmp.ne.s32.totalorder %s101, %s102
      %p111 = scmp.eq.s32.totalorder %s23, 0
      %p112 = por %p110, %p111
      %p113 = scmp.ne.s32.totalorder %s101, %s102
      %p114 = scmp.eq.s32.totalorder %s24, 1
      %p115 = por %p113, %p114
      %p117 = scmp.ne.s32.totalorder %s102, %s116
      %p118 = scmp.eq.s32.totalorder %s24, 0
      %p119 = por %p117, %p118
      %s121 = sadd.s32 %s120, 1
      %p124 = scmp.eq.s32.totalorder %s18, 1
      %p125 = scmp.ne.s32.totalorder %s120, %s122
      %p126 = scmp.eq.s32.totalorder %s18, 0
      %p127 = por %p125, %p126
      %p128 = scmp.ne.s32.totalorder %s120, %s122
      %p129 = scmp.eq.s32.totalorder %s23, 1
      %p130 = por %p128, %p129
      %p131 = scmp.ne.s32.totalorder %s122, %s123
      %p132 = scmp.eq.s32.totalorder %s23, 0
      %p133 = por %p131, %p132
      %p134 = scmp.ne.s32.totalorder %s122, %s123
      %p135 = scmp.eq.s32.totalorder %s24, 1
      %p136 = por %p134, %p135
      %p138 = scmp.ne.s32.totalorder %s123, %s137
      %p139 = scmp.eq.s32.totalorder %s24, 0
      %p140 = por %p138, %p139
      %s142 = sadd.s32 %s141, 1
      %p145 = scmp.eq.s32.totalorder %s18, 1
      %p146 = scmp.ne.s32.totalorder %s141, %s143
      %p147 = scmp.eq.s32.totalorder %s18, 0
      %p148 = por %p146, %p147
      %p149 = scmp.ne.s32.totalorder %s141, %s143
      %p150 = scmp.eq.s32.totalorder %s23, 1
      %p151 = por %p149, %p150
      %p152 = scmp.ne.s32.totalorder %s143, %s144
      %p153 = scmp.eq.s32.totalorder %s23, 0
      %p154 = por %p152, %p153
      %p155 = scmp.ne.s32.totalorder %s143, %s144
      %p156 = scmp.eq.s32.totalorder %s24, 1
      %p157 = por %p155, %p156
      %p159 = scmp.ne.s32.totalorder %s144, %s158
      %p160 = scmp.eq.s32.totalorder %s24, 0
      %p161 = por %p159, %p160
      %s163 = sadd.s32 %s162, 1
      %p166 = scmp.eq.s32.totalorder %s18, 1
      %p167 = scmp.ne.s32.totalorder %s162, %s164
      %p168 = scmp.eq.s32.totalorder %s18, 0
      %p169 = por %p167, %p168
      %p170 = scmp.ne.s32.totalorder %s162, %s164
      %p171 = scmp.eq.s32.totalorder %s23, 1
      %p172 = por %p170, %p171
      %p173 = scmp.ne.s32.totalorder %s164, %s165
      %p174 = scmp.eq.s32.totalorder %s23, 0
      %p175 = por %p173, %p174
      %p176 = scmp.ne.s32.totalorder %s164, %s165
      %p177 = scmp.eq.s32.totalorder %s24, 1
      %p178 = por %p176, %p177
      %p180 = scmp.ne.s32.totalorder %s165, %s179
      %p181 = scmp.eq.s32.totalorder %s24, 0
      %p182 = por %p180, %p181
      %s184 = sadd.s32 %s183, 1
      %p187 = scmp.eq.s32.totalorder %s18, 1
      %p188 = scmp.ne.s32.totalorder %s183, %s185
      %p189 = scmp.eq.s32.totalorder %s18, 0
      %p190 = por %p188, %p189
      %p191 = scmp.ne.s32.totalorder %s183, %s185
      %p192 = scmp.eq.s32.totalorder %s23, 1
      %p193 = por %p191, %p192
      %p194 = scmp.ne.s32.totalorder %s185, %s186
      %p195 = scmp.eq.s32.totalorder %s23, 0
      %p196 = por %p194, %p195
      %p197 = scmp.ne.s32.totalorder %s185, %s186
      %p198 = scmp.eq.s32.totalorder %s24, 1
      %p199 = por %p197, %p198
      %p201 = scmp.ne.s32.totalorder %s186, %s200
      %p202 = scmp.eq.s32.totalorder %s24, 0
      %p203 = por %p201, %p202
      %s205 = sadd.s32 %s204, 1
      %p208 = scmp.eq.s32.totalorder %s18, 1
      %p209 = scmp.ne.s32.totalorder %s204, %s206
      %p210 = scmp.eq.s32.totalorder %s18, 0
      %p211 = por %p209, %p210
      %p212 = scmp.ne.s32.totalorder %s204, %s206
      %p213 = scmp.eq.s32.totalorder %s23, 1
      %p214 = por %p212, %p213
      %p215 = scmp.ne.s32.totalorder %s206, %s207
      %p216 = scmp.eq.s32.totalorder %s23, 0
      %p217 = por %p215, %p216
      %p218 = scmp.ne.s32.totalorder %s206, %s207
      %p219 = scmp.eq.s32.totalorder %s24, 1
      %p220 = por %p218, %p219
      %p222 = scmp.ne.s32.totalorder %s207, %s221
      %p223 = scmp.eq.s32.totalorder %s24, 0
      %p224 = por %p222, %p223
      %s225 = ssub.s32 %s18, %s25
      %p226 = scmp.eq.s32.totalorder %s225, 0
      %s228 = sadd.s32 %s227, 1
      %s229 = scalar_select %p226, %s227, %s228
      %p232 = pneg %p226
      %p233 = scmp.eq.s32.totalorder %s18, 1
      %p234 = por %p232, %p233
      %p235 = scmp.ne.s32.totalorder %s227, %s230
      %p236 = scmp.eq.s32.totalorder %s18, 0
      %p237 = por %p235, %p236
      %p238 = scmp.ne.s32.totalorder %s227, %s230
      %p239 = scmp.eq.s32.totalorder %s23, 1
      %p240 = por %p238, %p239
      %p241 = scmp.ne.s32.totalorder %s230, %s231
      %p242 = scmp.eq.s32.totalorder %s23, 0
      %p243 = por %p241, %p242
      %p244 = scmp.ne.s32.totalorder %s230, %s231
      %p245 = scmp.eq.s32.totalorder %s24, 1
      %p246 = por %p244, %p245
      %p248 = scmp.ne.s32.totalorder %s231, %s247
      %p249 = scmp.eq.s32.totalorder %s24, 0
      %p250 = por %p248, %p249
      %p251 = scmp.le.s32.totalorder 1, %s18
      %p252 = scmp.lt.s32.totalorder %s18, 3
      %p253 = pnand %p251, %p252
      %p254 = pneg %p253
      // Predicated region
      $region9: #{tpu_custom_call.1} parent=5 // pred_check
        _
      $region10: #{tpu_custom_call.1} parent=5 // pred_check_branch
        %256 = sbr.rel (%p253) target = $region12
      $region11: #{tpu_custom_call.1} parent=5 // pred_region
        %s257 = ssub.s32 %s18, 1
        // Predicated region
        $region13: #{tpu_custom_call.1} parent=11 // pred_check
          %p258 = pneg %p91
        $region14: #{tpu_custom_call.1} parent=11 // pred_check_branch
          %260 = sbr.rel (%p258) target = $region16
        $region15: #{tpu_custom_call.1} parent=11 // pred_region
          _
        $region16: #{tpu_custom_call.1} parent=11 // pred_fallthru
          _
        // Predicated region
        $region17: #{tpu_custom_call.1} parent=11 // pred_check
          %p261 = pneg %p112
        $region18: #{tpu_custom_call.1} parent=11 // pred_check_branch
          %263 = sbr.rel (%p261) target = $region20
        $region19: #{tpu_custom_call.1} parent=11 // pred_region
          _
        $region20: #{tpu_custom_call.1} parent=11 // pred_fallthru
          _
        // Predicated region
        $region21: #{tpu_custom_call.1} parent=11 // pred_check
          %p264 = pneg %p133
        $region22: #{tpu_custom_call.1} parent=11 // pred_check_branch
          %266 = sbr.rel (%p264) target = $region24
        $region23: #{tpu_custom_call.1} parent=11 // pred_region
          _
        $region24: #{tpu_custom_call.1} parent=11 // pred_fallthru
          _
        // Predicated region
        $region25: #{tpu_custom_call.1} parent=11 // pred_check
          %p267 = pneg %p154
        $region26: #{tpu_custom_call.1} parent=11 // pred_check_branch
          %269 = sbr.rel (%p267) target = $region28
        $region27: #{tpu_custom_call.1} parent=11 // pred_region
          _
        $region28: #{tpu_custom_call.1} parent=11 // pred_fallthru
          _
        // Predicated region
        $region29: #{tpu_custom_call.1} parent=11 // pred_check
          %p270 = pneg %p175
        $region30: #{tpu_custom_call.1} parent=11 // pred_check_branch
          %272 = sbr.rel (%p270) target = $region32
        $region31: #{tpu_custom_call.1} parent=11 // pred_region
          _
        $region32: #{tpu_custom_call.1} parent=11 // pred_fallthru
          _
        // Predicated region
        $region33: #{tpu_custom_call.1} parent=11 // pred_check
          %p273 = pneg %p196
        $region34: #{tpu_custom_call.1} parent=11 // pred_check_branch
          %275 = sbr.rel (%p273) target = $region36
        $region35: #{tpu_custom_call.1} parent=11 // pred_region
          _
        $region36: #{tpu_custom_call.1} parent=11 // pred_fallthru
          _
        // Predicated region
        $region37: #{tpu_custom_call.1} parent=11 // pred_check
          %p276 = pneg %p217
        $region38: #{tpu_custom_call.1} parent=11 // pred_check_branch
          %278 = sbr.rel (%p276) target = $region40
        $region39: #{tpu_custom_call.1} parent=11 // pred_region
          _
        $region40: #{tpu_custom_call.1} parent=11 // pred_fallthru
          _
      $region12: #{tpu_custom_call.1} parent=5 // pred_fallthru
        _
      %p279 = scmp.lt.s32.totalorder %s18, 2
      // Predicated region
      $region41: #{tpu_custom_call.1} parent=5 // pred_check
        %p280 = pneg %p279
      $region42: #{tpu_custom_call.1} parent=5 // pred_check_branch
        %282 = sbr.rel (%p280) target = $region44
      $region43: #{tpu_custom_call.1} parent=5 // pred_region
        // Predicated region
        $region45: #{tpu_custom_call.1} parent=43 // pred_check
          %p283 = pneg %p38
        $region46: #{tpu_custom_call.1} parent=43 // pred_check_branch
          %285 = sbr.rel (%p283) target = $region48
        $region47: #{tpu_custom_call.1} parent=43 // pred_region
          %s286 = smul.u32 8, %s18
          %p287 = scmp.lt.s32.totalorder %s286, 15
          %s288 = scalar_select %p287, %s286, 15
          %s289 = smul.addr %s288, 5
          %s290 = smul.addr %s289, 8
          %s291 = scalar_lea.vmem %s0, %s290
          %s292 = smul.u32 8, %s18
        $region48: #{tpu_custom_call.1} parent=43 // pred_fallthru
          _
        // Predicated region
        $region49: #{tpu_custom_call.1} parent=43 // pred_check
          %p293 = pneg %p64
        $region50: #{tpu_custom_call.1} parent=43 // pred_check_branch
          %295 = sbr.rel (%p293) target = $region52
        $region51: #{tpu_custom_call.1} parent=43 // pred_region
          %p296 = scmp.lt.s32.totalorder %s18, 1
          %s297 = scalar_select %p296, %s18, 1
          %s298 = smul.addr %s297, 8
          %s299 = scalar_lea.vmem %s1, %s298
        $region52: #{tpu_custom_call.1} parent=43 // pred_fallthru
          _
      $region44: #{tpu_custom_call.1} parent=5 // pred_fallthru
        _
      %p300 = scmp.le.s32.totalorder 1, %s18
      %p301 = scmp.lt.s32.totalorder %s18, 3
      %p302 = pnand %p300, %p301
      %p303 = pneg %p302
      // Predicated region
      $region53: #{tpu_custom_call.1} parent=5 // pred_check
        _
      $region54: #{tpu_custom_call.1} parent=5 // pred_check_branch
        %305 = sbr.rel (%p302) target = $region56
      $region55: #{tpu_custom_call.1} parent=5 // pred_region
        %s306 = ssub.s32 %s18, 1
        %s307 = smul.u32 8, %s23
        %p308 = scmp.lt.s32.totalorder %s307, 15
        %s309 = scalar_select %p308, %s307, 15
        %s310 = smul.addr %s309, 5
        %s311 = smul.addr %s310, 8
        %s312 = scalar_lea.vmem %s0, %s311
        %p313 = pneg %p44
        %p314 = pneg %p41
        %p315 = scmp.lt.s32.totalorder %s23, 1
        %s316 = scalar_select %p315, %s23, 1
        %s317 = smul.addr %s316, 8
        %s318 = scalar_lea.vmem %s1, %s317
        %p319 = pneg %p70
        %p320 = pneg %p67
        %p321 = pneg %p91
        %p322 = pneg %p88
        %p323 = pneg %p112
        %p324 = pneg %p109
        %p325 = pneg %p133
        %p326 = pneg %p130
        %p327 = pneg %p154
        %p328 = pneg %p151
        %p329 = pneg %p175
        %p330 = pneg %p172
        %p331 = pneg %p196
        %p332 = pneg %p193
        %p333 = pneg %p217
        %p334 = pneg %p214
        %p335 = pneg %p243
        %p336 = pneg %p240
        %s337 = sand.u32 %s230, 1
        %s338 = scalar_lea.sflag [#allocation3], %s337
        %s339 = sand.u32 %s230, 1
        %s340 = smul.addr %s339, 8
        %s341 = scalar_lea.vmem [#allocation2], %s340
        %s342 = smul.u32 8, %s23
        %p343 = scmp.lt.s32.totalorder %s342, 15
        %s344 = scalar_select %p343, %s342, 15
        %s345 = smul.addr %s344, 5
        %s346 = smul.addr %s345, 8
        %s347 = scalar_lea.vmem %s0, %s346
        %s348 = smul.u32 8, %s23
        %p349 = scmp.lt.s32.totalorder %s23, 1
        %s350 = scalar_select %p349, %s23, 1
        %s351 = smul.addr %s350, 8
        %s352 = scalar_lea.vmem %s1, %s351
        %v353 = vld [vmem:[%s347] sm:$0xff]
        %v354 = vld [vmem:[%s347 + $0x8] sm:$0xff]
        %v355 = vld [vmem:[%s347 + $0x10] sm:$0xff]
        %v356 = vld [vmem:[%s347 + $0x18] sm:$0xff]
        %v357 = vld [vmem:[%s347 + $0x20] sm:$0xff]
        %v358 = vld [vmem:[%s347 + $0x28] sm:$0xff]
        %v359 = vld [vmem:[%s347 + $0x30] sm:$0xff]
        %v360 = vld [vmem:[%s347 + $0x38] sm:$0xff]
        %v361 = vld [vmem:[%s347 + $0x40] sm:$0xff]
        %v362 = vld [vmem:[%s347 + $0x48] sm:$0xff]
        %v363 = vld [vmem:[%s347 + $0x50] sm:$0xff]
        %v364 = vld [vmem:[%s347 + $0x58] sm:$0xff]
        %v365 = vld [vmem:[%s347 + $0x60] sm:$0xff]
        %v366 = vld [vmem:[%s347 + $0x68] sm:$0xff]
        %v367 = vld [vmem:[%s347 + $0x70] sm:$0xff]
        %v368 = vld [vmem:[%s347 + $0x78] sm:$0xff]
        %v369 = vld [vmem:[%s347 + $0x80] sm:$0xff]
        %v370 = vld [vmem:[%s347 + $0x88] sm:$0xff]
        %v371 = vld [vmem:[%s347 + $0x90] sm:$0xff]
        %v372 = vld [vmem:[%s347 + $0x98] sm:$0xff]
        %v373 = vld [vmem:[%s347 + $0xa0] sm:$0xff]
        %v374 = vld [vmem:[%s347 + $0xa8] sm:$0xff]
        %v375 = vld [vmem:[%s347 + $0xb0] sm:$0xff]
        %v376 = vld [vmem:[%s347 + $0xb8] sm:$0xff]
        %v377 = vld [vmem:[%s347 + $0xc0] sm:$0xff]
        %v378 = vld [vmem:[%s347 + $0xc8] sm:$0xff]
        %v379 = vld [vmem:[%s347 + $0xd0] sm:$0xff]
        %v380 = vld [vmem:[%s347 + $0xd8] sm:$0xff]
        %v381 = vld [vmem:[%s347 + $0xe0] sm:$0xff]
        %v382 = vld [vmem:[%s347 + $0xe8] sm:$0xff]
        %v383 = vld [vmem:[%s347 + $0xf0] sm:$0xff]
        %v384 = vld [vmem:[%s347 + $0xf8] sm:$0xff]
        %v385 = vld [vmem:[%s347 + $0x100] sm:$0xff]
        %v386 = vld [vmem:[%s347 + $0x108] sm:$0xff]
        %v387 = vld [vmem:[%s347 + $0x110] sm:$0xff]
        %v388 = vld [vmem:[%s347 + $0x118] sm:$0xff]
        %v389 = vld [vmem:[%s347 + $0x120] sm:$0xff]
        %v390 = vld [vmem:[%s347 + $0x128] sm:$0xff]
        %v391 = vld [vmem:[%s347 + $0x130] sm:$0xff]
        %v392 = vld [vmem:[%s347 + $0x138] sm:$0xff]
        %v393 = vld [vmem:[%s2] sm:$0xff]
        %v394 = vld [vmem:[%s2 + $0x8] sm:$0xff]
        %v395 = vld [vmem:[%s2 + $0x10] sm:$0xff]
        %v396 = vld [vmem:[%s2 + $0x18] sm:$0xff]
        %v397 = vld [vmem:[%s3] sm:$0x1]
        %v399 = vlaneseq
        %v400 = vshrl.u32 %v399, 7
        %v401 = vsub.s32 0, %v400
        %v402 = vrot.slane %v397, %v401
        %vm404 = vcmask 261120
        %v406 = vsel %vm404, %v353, 0
        %v409 = vsel %vm404, %v354, 0
        %v412 = vsel %vm404, %v355, 0
        %v415 = vsel %vm404, %v356, 0
        %v418 = vsel %vm404, %v357, 0
        %v421 = vsel %vm404, %v358, 0
        %v424 = vsel %vm404, %v359, 0
        %v427 = vsel %vm404, %v360, 0
        %v430 = vsel %vm404, %v361, 0
        %v433 = vsel %vm404, %v362, 0
        %v436 = vsel %vm404, %v363, 0
        %v439 = vsel %vm404, %v364, 0
        %v442 = vsel %vm404, %v365, 0
        %v445 = vsel %vm404, %v366, 0
        %v448 = vsel %vm404, %v367, 0
        %v451 = vsel %vm404, %v368, 0
        %v454 = vsel %vm404, %v369, 0
        %v457 = vsel %vm404, %v370, 0
        %v460 = vsel %vm404, %v371, 0
        %v463 = vsel %vm404, %v372, 0
        %v466 = vsel %vm404, %v373, 0
        %v469 = vsel %vm404, %v374, 0
        %v472 = vsel %vm404, %v375, 0
        %v475 = vsel %vm404, %v376, 0
        %v478 = vsel %vm404, %v377, 0
        %v481 = vsel %vm404, %v378, 0
        %v484 = vsel %vm404, %v379, 0
        %v487 = vsel %vm404, %v380, 0
        %v490 = vsel %vm404, %v381, 0
        %v493 = vsel %vm404, %v382, 0
        %v496 = vsel %vm404, %v383, 0
        %v499 = vsel %vm404, %v384, 0
        %v502 = vsel %vm404, %v385, 0
        %v505 = vsel %vm404, %v386, 0
        %v508 = vsel %vm404, %v387, 0
        %v511 = vsel %vm404, %v388, 0
        %v514 = vsel %vm404, %v389, 0
        %v517 = vsel %vm404, %v390, 0
        %v520 = vsel %vm404, %v391, 0
        %v523 = vsel %vm404, %v392, 0
        %525 = vmatprep.subr.mxu0 0.0
        %526 = vmatpush1.msra.mxu0 %v393
        %527 = vmatprep.subr.mxu0 0.0
        %528 = vmatpush1.msra.mxu0 %v394
        %529 = vmatprep.subr.mxu0 0.0
        %530 = vmatpush1.msra.mxu0 %v395
        %531 = vmatprep.subr.mxu0 0.0
        %532 = vmatpush1.msra.mxu0 %v396
        %533 = vmatprep.subr.mxu0 0.0
        %534 = vmatpush1.msra.mxu0 0.0
        %535 = vmatprep.subr.mxu0 0.0
        %536 = vmatpush1.msra.mxu0 0.0
        %537 = vmatprep.subr.mxu0 0.0
        %538 = vmatpush1.msra.mxu0 0.0
        %539 = vmatprep.subr.mxu0 0.0
        %540 = vmatpush1.msra.mxu0 0.0
        %541 = vmatprep.subr.mxu0 0.0
        %542 = vmatpush1.msra.mxu0 0.0
        %543 = vmatprep.subr.mxu0 0.0
        %544 = vmatpush1.msra.mxu0 0.0
        %545 = vmatprep.subr.mxu0 0.0
        %546 = vmatpush1.msra.mxu0 0.0
        %547 = vmatprep.subr.mxu0 0.0
        %548 = vmatpush1.msra.mxu0 0.0
        %549 = vmatprep.subr.mxu0 0.0
        %550 = vmatpush1.msra.mxu0 0.0
        %551 = vmatprep.subr.mxu0 0.0
        %552 = vmatpush1.msra.mxu0 0.0
        %553 = vmatprep.subr.mxu0 0.0
        %554 = vmatpush1.msra.mxu0 0.0
        %555 = vmatprep.subr.mxu0 0.0
        %556 = vmatpush1.msra.mxu0 0.0
        %557 = vmatprep.subr.mxu0 0.0
        %558 = vmatpush1.msra.mxu0 0.0
        %559 = vmatprep.subr.mxu0 0.0
        %560 = vmatpush1.msra.mxu0 0.0
        %561 = vmatprep.subr.mxu0 0.0
        %562 = vmatpush1.msra.mxu0 0.0
        %563 = vmatprep.subr.mxu0 0.0
        %564 = vmatpush1.msra.mxu0 0.0
        %565 = vmatprep.subr.mxu0 0.0
        %566 = vmatpush1.msra.mxu0 0.0
        %567 = vmatprep.subr.mxu0 0.0
        %568 = vmatpush1.msra.mxu0 0.0
        %569 = vmatprep.subr.mxu0 0.0
        %570 = vmatpush1.msra.mxu0 0.0
        %571 = vmatprep.subr.mxu0 0.0
        %572 = vmatpush1.msra.mxu0 0.0
        %573 = vmatprep.subr.mxu0 0.0
        %574 = vmatpush1.msra.mxu0 0.0
        %575 = vmatprep.subr.mxu0 0.0
        %576 = vmatpush1.msra.mxu0 0.0
        %577 = vmatprep.subr.mxu0 0.0
        %578 = vmatpush1.msra.mxu0 0.0
        %579 = vmatprep.subr.mxu0 0.0
        %580 = vmatpush1.msra.mxu0 0.0
        %581 = vmatprep.subr.mxu0 0.0
        %582 = vmatpush1.msra.mxu0 0.0
        %583 = vmatprep.subr.mxu0 0.0
        %584 = vmatpush1.msra.mxu0 0.0
        %585 = vmatprep.subr.mxu0 0.0
        %586 = vmatpush1.msra.mxu0 0.0
        %587 = vmatprep.subr.mxu0 0.0
        %588 = vmatpush1.msra.mxu0 0.0
        %589 = vmatprep.mubr.f32.mxu0 0.0
        %590 = vmatmul.mubr.f32.gmra.mrb[0].mxu0 %v406
        %v591 = vpop.f32.mrb[0].mxu0
        %v592 = vadd.f32 %v402, %v591
        %v593 = vpop.f32.mrb[0].mxu0
        %594 = vmatprep.mubr.f32.mxu0 0.0
        %595 = vmatmul.mubr.f32.gmra.mrb[0].mxu0 %v409
        %v596 = vpop.f32.mrb[0].mxu0
        %v597 = vadd.f32 %v402, %v596
        %v598 = vpop.f32.mrb[0].mxu0
        %599 = vmatprep.mubr.f32.mxu0 0.0
        %600 = vmatmul.mubr.f32.gmra.mrb[0].mxu0 %v412
        %v601 = vpop.f32.mrb[0].mxu0
        %v602 = vadd.f32 %v402, %v601
        %v603 = vpop.f32.mrb[0].mxu0
        %604 = vmatprep.mubr.f32.mxu0 0.0
        %605 = vmatmul.mubr.f32.gmra.mrb[0].mxu0 %v415
        %v606 = vpop.f32.mrb[0].mxu0
        %v607 = vadd.f32 %v402, %v606
        %v608 = vpop.f32.mrb[0].mxu0
        %609 = vmatprep.mubr.f32.mxu0 0.0
        %610 = vmatmul.mubr.f32.gmra.mrb[0].mxu0 %v418
        %v611 = vpop.f32.mrb[0].mxu0
        %v612 = vadd.f32 %v402, %v611
        %v613 = vpop.f32.mrb[0].mxu0
        %614 = vmatprep.mubr.f32.mxu0 0.0
        %615 = vmatmul.mubr.f32.gmra.mrb[0].mxu0 %v421
        %v616 = vpop.f32.mrb[0].mxu0
        %v617 = vadd.f32 %v402, %v616
        %v618 = vpop.f32.mrb[0].mxu0
        %619 = vmatprep.mubr.f32.mxu0 0.0
        %620 = vmatmul.mubr.f32.gmra.mrb[0].mxu0 %v424
        %v621 = vpop.f32.mrb[0].mxu0
        %v622 = vadd.f32 %v402, %v621
        %v623 = vpop.f32.mrb[0].mxu0
        %624 = vmatprep.mubr.f32.mxu0 0.0
        %625 = vmatmul.mubr.f32.gmra.mrb[0].mxu0 %v427
        %v626 = vpop.f32.mrb[0].mxu0
        %v627 = vadd.f32 %v402, %v626
        %v628 = vpop.f32.mrb[0].mxu0
        %629 = vmatprep.mubr.f32.mxu0 0.0
        %630 = vmatmul.mubr.f32.gmra.mrb[0].mxu0 %v430
        %v631 = vpop.f32.mrb[0].mxu0
        %v632 = vadd.f32 %v402, %v631
        %v633 = vpop.f32.mrb[0].mxu0
        %634 = vmatprep.mubr.f32.mxu0 0.0
        %635 = vmatmul.mubr.f32.gmra.mrb[0].mxu0 %v433
        %v636 = vpop.f32.mrb[0].mxu0
        %v637 = vadd.f32 %v402, %v636
        %v638 = vpop.f32.mrb[0].mxu0
        %639 = vmatprep.mubr.f32.mxu0 0.0
        %640 = vmatmul.mubr.f32.gmra.mrb[0].mxu0 %v436
        %v641 = vpop.f32.mrb[0].mxu0
        %v642 = vadd.f32 %v402, %v641
        %v643 = vpop.f32.mrb[0].mxu0
        %644 = vmatprep.mubr.f32.mxu0 0.0
        %645 = vmatmul.mubr.f32.gmra.mrb[0].mxu0 %v439
        %v646 = vpop.f32.mrb[0].mxu0
        %v647 = vadd.f32 %v402, %v646
        %v648 = vpop.f32.mrb[0].mxu0
        %649 = vmatprep.mubr.f32.mxu0 0.0
        %650 = vmatmul.mubr.f32.gmra.mrb[0].mxu0 %v442
        %v651 = vpop.f32.mrb[0].mxu0
        %v652 = vadd.f32 %v402, %v651
        %v653 = vpop.f32.mrb[0].mxu0
        %654 = vmatprep.mubr.f32.mxu0 0.0
        %655 = vmatmul.mubr.f32.gmra.mrb[0].mxu0 %v445
        %v656 = vpop.f32.mrb[0].mxu0
        %v657 = vadd.f32 %v402, %v656
        %v658 = vpop.f32.mrb[0].mxu0
        %659 = vmatprep.mubr.f32.mxu0 0.0
        %660 = vmatmul.mubr.f32.gmra.mrb[0].mxu0 %v448
        %v661 = vpop.f32.mrb[0].mxu0
        %v662 = vadd.f32 %v402, %v661
        %v663 = vpop.f32.mrb[0].mxu0
        %664 = vmatprep.mubr.f32.mxu0 0.0
        %665 = vmatmul.mubr.f32.gmra.mrb[0].mxu0 %v451
        %v666 = vpop.f32.mrb[0].mxu0
        %v667 = vadd.f32 %v402, %v666
        %v668 = vpop.f32.mrb[0].mxu0
        %669 = vmatprep.mubr.f32.mxu0 0.0
        %670 = vmatmul.mubr.f32.gmra.mrb[0].mxu0 %v454
        %v671 = vpop.f32.mrb[0].mxu0
        %v672 = vadd.f32 %v402, %v671
        %v673 = vpop.f32.mrb[0].mxu0
        %674 = vmatprep.mubr.f32.mxu0 0.0
        %675 = vmatmul.mubr.f32.gmra.mrb[0].mxu0 %v457
        %v676 = vpop.f32.mrb[0].mxu0
        %v677 = vadd.f32 %v402, %v676
        %v678 = vpop.f32.mrb[0].mxu0
        %679 = vmatprep.mubr.f32.mxu0 0.0
        %680 = vmatmul.mubr.f32.gmra.mrb[0].mxu0 %v460
        %v681 = vpop.f32.mrb[0].mxu0
        %v682 = vadd.f32 %v402, %v681
        %v683 = vpop.f32.mrb[0].mxu0
        %684 = vmatprep.mubr.f32.mxu0 0.0
        %685 = vmatmul.mubr.f32.gmra.mrb[0].mxu0 %v463
        %v686 = vpop.f32.mrb[0].mxu0
        %v687 = vadd.f32 %v402, %v686
        %v688 = vpop.f32.mrb[0].mxu0
        %689 = vmatprep.mubr.f32.mxu0 0.0
        %690 = vmatmul.mubr.f32.gmra.mrb[0].mxu0 %v466
        %v691 = vpop.f32.mrb[0].mxu0
        %v692 = vadd.f32 %v402, %v691
        %v693 = vpop.f32.mrb[0].mxu0
        %694 = vmatprep.mubr.f32.mxu0 0.0
        %695 = vmatmul.mubr.f32.gmra.mrb[0].mxu0 %v469
        %v696 = vpop.f32.mrb[0].mxu0
        %v697 = vadd.f32 %v402, %v696
        %v698 = vpop.f32.mrb[0].mxu0
        %699 = vmatprep.mubr.f32.mxu0 0.0
        %700 = vmatmul.mubr.f32.gmra.mrb[0].mxu0 %v472
        %v701 = vpop.f32.mrb[0].mxu0
        %v702 = vadd.f32 %v402, %v701
        %v703 = vpop.f32.mrb[0].mxu0
        %704 = vmatprep.mubr.f32.mxu0 0.0
        %705 = vmatmul.mubr.f32.gmra.mrb[0].mxu0 %v475
        %v706 = vpop.f32.mrb[0].mxu0
        %v707 = vadd.f32 %v402, %v706
        %v708 = vpop.f32.mrb[0].mxu0
        %709 = vmatprep.mubr.f32.mxu0 0.0
        %710 = vmatmul.mubr.f32.gmra.mrb[0].mxu0 %v478
        %v711 = vpop.f32.mrb[0].mxu0
        %v712 = vadd.f32 %v402, %v711
        %v713 = vpop.f32.mrb[0].mxu0
        %714 = vmatprep.mubr.f32.mxu0 0.0
        %715 = vmatmul.mubr.f32.gmra.mrb[0].mxu0 %v481
        %v716 = vpop.f32.mrb[0].mxu0
        %v717 = vadd.f32 %v402, %v716
        %v718 = vpop.f32.mrb[0].mxu0
        %719 = vmatprep.mubr.f32.mxu0 0.0
        %720 = vmatmul.mubr.f32.gmra.mrb[0].mxu0 %v484
        %v721 = vpop.f32.mrb[0].mxu0
        %v722 = vadd.f32 %v402, %v721
        %v723 = vpop.f32.mrb[0].mxu0
        %724 = vmatprep.mubr.f32.mxu0 0.0
        %725 = vmatmul.mubr.f32.gmra.mrb[0].mxu0 %v487
        %v726 = vpop.f32.mrb[0].mxu0
        %v727 = vadd.f32 %v402, %v726
        %v728 = vpop.f32.mrb[0].mxu0
        %729 = vmatprep.mubr.f32.mxu0 0.0
        %730 = vmatmul.mubr.f32.gmra.mrb[0].mxu0 %v490
        %v731 = vpop.f32.mrb[0].mxu0
        %v732 = vadd.f32 %v402, %v731
        %v733 = vpop.f32.mrb[0].mxu0
        %734 = vmatprep.mubr.f32.mxu0 0.0
        %735 = vmatmul.mubr.f32.gmra.mrb[0].mxu0 %v493
        %v736 = vpop.f32.mrb[0].mxu0
        %v737 = vadd.f32 %v402, %v736
        %v738 = vpop.f32.mrb[0].mxu0
        %739 = vmatprep.mubr.f32.mxu0 0.0
        %740 = vmatmul.mubr.f32.gmra.mrb[0].mxu0 %v496
        %v741 = vpop.f32.mrb[0].mxu0
        %v742 = vadd.f32 %v402, %v741
        %v743 = vpop.f32.mrb[0].mxu0
        %744 = vmatprep.mubr.f32.mxu0 0.0
        %745 = vmatmul.mubr.f32.gmra.mrb[0].mxu0 %v499
        %v746 = vpop.f32.mrb[0].mxu0
        %v747 = vadd.f32 %v402, %v746
        %v748 = vpop.f32.mrb[0].mxu0
        %749 = vmatprep.mubr.f32.mxu0 0.0
        %750 = vmatmul.mubr.f32.gmra.mrb[0].mxu0 %v502
        %v751 = vpop.f32.mrb[0].mxu0
        %v752 = vadd.f32 %v402, %v751
        %v753 = vpop.f32.mrb[0].mxu0
        %754 = vmatprep.mubr.f32.mxu0 0.0
        %755 = vmatmul.mubr.f32.gmra.mrb[0].mxu0 %v505
        %v756 = vpop.f32.mrb[0].mxu0
        %v757 = vadd.f32 %v402, %v756
        %v758 = vpop.f32.mrb[0].mxu0
        %759 = vmatprep.mubr.f32.mxu0 0.0
        %760 = vmatmul.mubr.f32.gmra.mrb[0].mxu0 %v508
        %v761 = vpop.f32.mrb[0].mxu0
        %v762 = vadd.f32 %v402, %v761
        %v763 = vpop.f32.mrb[0].mxu0
        %764 = vmatprep.mubr.f32.mxu0 0.0
        %765 = vmatmul.mubr.f32.gmra.mrb[0].mxu0 %v511
        %v766 = vpop.f32.mrb[0].mxu0
        %v767 = vadd.f32 %v402, %v766
        %v768 = vpop.f32.mrb[0].mxu0
        %769 = vmatprep.mubr.f32.mxu0 0.0
        %770 = vmatmul.mubr.f32.gmra.mrb[0].mxu0 %v514
        %v771 = vpop.f32.mrb[0].mxu0
        %v772 = vadd.f32 %v402, %v771
        %v773 = vpop.f32.mrb[0].mxu0
        %774 = vmatprep.mubr.f32.mxu0 0.0
        %775 = vmatmul.mubr.f32.gmra.mrb[0].mxu0 %v517
        %v776 = vpop.f32.mrb[0].mxu0
        %v777 = vadd.f32 %v402, %v776
        %v778 = vpop.f32.mrb[0].mxu0
        %779 = vmatprep.mubr.f32.mxu0 0.0
        %780 = vmatmul.mubr.f32.gmra.mrb[0].mxu0 %v520
        %v781 = vpop.f32.mrb[0].mxu0
        %v782 = vadd.f32 %v402, %v781
        %v783 = vpop.f32.mrb[0].mxu0
        %784 = vmatprep.mubr.f32.mxu0 0.0
        %785 = vmatmul.mubr.f32.gmra.mrb[0].mxu0 %v523
        %v786 = vpop.f32.mrb[0].mxu0
        %v787 = vadd.f32 %v402, %v786
        %v788 = vpop.f32.mrb[0].mxu0
        %789 = vdwg.mxu0
        %v790 = vtanh.pop %v592
        %v791 = vtanh.pop %v597
        %v792 = vtanh.pop %v602
        %v793 = vtanh.pop %v607
        %v794 = vtanh.pop %v612
        %v795 = vtanh.pop %v617
        %v796 = vtanh.pop %v622
        %v797 = vtanh.pop %v627
        %v798 = vtanh.pop %v632
        %v799 = vtanh.pop %v637
        %v800 = vtanh.pop %v642
        %v801 = vtanh.pop %v647
        %v802 = vtanh.pop %v652
        %v803 = vtanh.pop %v657
        %v804 = vtanh.pop %v662
        %v805 = vtanh.pop %v667
        %v806 = vtanh.pop %v672
        %v807 = vtanh.pop %v677
        %v808 = vtanh.pop %v682
        %v809 = vtanh.pop %v687
        %v810 = vtanh.pop %v692
        %v811 = vtanh.pop %v697
        %v812 = vtanh.pop %v702
        %v813 = vtanh.pop %v707
        %v814 = vtanh.pop %v712
        %v815 = vtanh.pop %v717
        %v816 = vtanh.pop %v722
        %v817 = vtanh.pop %v727
        %v818 = vtanh.pop %v732
        %v819 = vtanh.pop %v737
        %v820 = vtanh.pop %v742
        %v821 = vtanh.pop %v747
        %v822 = vtanh.pop %v752
        %v823 = vtanh.pop %v757
        %v824 = vtanh.pop %v762
        %v825 = vtanh.pop %v767
        %v826 = vtanh.pop %v772
        %v827 = vtanh.pop %v777
        %v828 = vtanh.pop %v782
        %v829 = vtanh.pop %v787
        %v830 = vsel %vm404, %v353, 0.0
        %v831 = vsel %vm404, %v354, 0.0
        %v832 = vadd.f32 %v830, %v831
        %v833 = vsel %vm404, %v355, 0.0
        %v834 = vadd.f32 %v832, %v833
        %v835 = vsel %vm404, %v356, 0.0
        %v836 = vadd.f32 %v834, %v835
        %v837 = vsel %vm404, %v357, 0.0
        %v838 = vadd.f32 %v836, %v837
        %v839 = vrot.slane %v838, 4
        %v840 = vadd.f32 %v838, %v839
        %v841 = vrot.slane %v840, 2
        %v842 = vadd.f32 %v840, %v841
        %v843 = vrot.slane %v842, 1
        %v844 = vadd.f32 %v842, %v843
        %v845 = vsel %vm404, %v358, 0.0
        %v846 = vsel %vm404, %v359, 0.0
        %v847 = vadd.f32 %v845, %v846
        %v848 = vsel %vm404, %v360, 0.0
        %v849 = vadd.f32 %v847, %v848
        %v850 = vsel %vm404, %v361, 0.0
        %v851 = vadd.f32 %v849, %v850
        %v852 = vsel %vm404, %v362, 0.0
        %v853 = vadd.f32 %v851, %v852
        %v854 = vrot.slane %v853, 4
        %v855 = vadd.f32 %v853, %v854
        %v856 = vrot.slane %v855, 2
        %v857 = vadd.f32 %v855, %v856
        %v858 = vrot.slane %v857, 1
        %v859 = vadd.f32 %v857, %v858
        %v860 = vsel %vm404, %v363, 0.0
        %v861 = vsel %vm404, %v364, 0.0
        %v862 = vadd.f32 %v860, %v861
        %v863 = vsel %vm404, %v365, 0.0
        %v864 = vadd.f32 %v862, %v863
        %v865 = vsel %vm404, %v366, 0.0
        %v866 = vadd.f32 %v864, %v865
        %v867 = vsel %vm404, %v367, 0.0
        %v868 = vadd.f32 %v866, %v867
        %v869 = vrot.slane %v868, 4
        %v870 = vadd.f32 %v868, %v869
        %v871 = vrot.slane %v870, 2
        %v872 = vadd.f32 %v870, %v871
        %v873 = vrot.slane %v872, 1
        %v874 = vadd.f32 %v872, %v873
        %v875 = vsel %vm404, %v368, 0.0
        %v876 = vsel %vm404, %v369, 0.0
        %v877 = vadd.f32 %v875, %v876
        %v878 = vsel %vm404, %v370, 0.0
        %v879 = vadd.f32 %v877, %v878
        %v880 = vsel %vm404, %v371, 0.0
        %v881 = vadd.f32 %v879, %v880
        %v882 = vsel %vm404, %v372, 0.0
        %v883 = vadd.f32 %v881, %v882
        %v884 = vrot.slane %v883, 4
        %v885 = vadd.f32 %v883, %v884
        %v886 = vrot.slane %v885, 2
        %v887 = vadd.f32 %v885, %v886
        %v888 = vrot.slane %v887, 1
        %v889 = vadd.f32 %v887, %v888
        %v890 = vsel %vm404, %v373, 0.0
        %v891 = vsel %vm404, %v374, 0.0
        %v892 = vadd.f32 %v890, %v891
        %v893 = vsel %vm404, %v375, 0.0
        %v894 = vadd.f32 %v892, %v893
        %v895 = vsel %vm404, %v376, 0.0
        %v896 = vadd.f32 %v894, %v895
        %v897 = vsel %vm404, %v377, 0.0
        %v898 = vadd.f32 %v896, %v897
        %v899 = vrot.slane %v898, 4
        %v900 = vadd.f32 %v898, %v899
        %v901 = vrot.slane %v900, 2
        %v902 = vadd.f32 %v900, %v901
        %v903 = vrot.slane %v902, 1
        %v904 = vadd.f32 %v902, %v903
        %v905 = vsel %vm404, %v378, 0.0
        %v906 = vsel %vm404, %v379, 0.0
        %v907 = vadd.f32 %v905, %v906
        %v908 = vsel %vm404, %v380, 0.0
        %v909 = vadd.f32 %v907, %v908
        %v910 = vsel %vm404, %v381, 0.0
        %v911 = vadd.f32 %v909, %v910
        %v912 = vsel %vm404, %v382, 0.0
        %v913 = vadd.f32 %v911, %v912
        %v914 = vrot.slane %v913, 4
        %v915 = vadd.f32 %v913, %v914
        %v916 = vrot.slane %v915, 2
        %v917 = vadd.f32 %v915, %v916
        %v918 = vrot.slane %v917, 1
        %v919 = vadd.f32 %v917, %v918
        %v920 = vsel %vm404, %v383, 0.0
        %v921 = vsel %vm404, %v384, 0.0
        %v922 = vadd.f32 %v920, %v921
        %v923 = vsel %vm404, %v385, 0.0
        %v924 = vadd.f32 %v922, %v923
        %v925 = vsel %vm404, %v386, 0.0
        %v926 = vadd.f32 %v924, %v925
        %v927 = vsel %vm404, %v387, 0.0
        %v928 = vadd.f32 %v926, %v927
        %v929 = vrot.slane %v928, 4
        %v930 = vadd.f32 %v928, %v929
        %v931 = vrot.slane %v930, 2
        %v932 = vadd.f32 %v930, %v931
        %v933 = vrot.slane %v932, 1
        %v934 = vadd.f32 %v932, %v933
        %v935 = vsel %vm404, %v388, 0.0
        %v936 = vsel %vm404, %v389, 0.0
        %v937 = vadd.f32 %v935, %v936
        %v938 = vsel %vm404, %v390, 0.0
        %v939 = vadd.f32 %v937, %v938
        %v940 = vsel %vm404, %v391, 0.0
        %v941 = vadd.f32 %v939, %v940
        %v942 = vsel %vm404, %v392, 0.0
        %v943 = vadd.f32 %v941, %v942
        %v944 = vrot.slane %v943, 4
        %v945 = vadd.f32 %v943, %v944
        %v946 = vrot.slane %v945, 2
        %v947 = vadd.f32 %v945, %v946
        %v948 = vrot.slane %v947, 1
        %v949 = vadd.f32 %v947, %v948
        %v950 = vmul.f32 %v844, 0.027777778
        %v951 = vmul.f32 %v859, 0.027777778
        %v952 = vmul.f32 %v874, 0.027777778
        %v953 = vmul.f32 %v889, 0.027777778
        %v954 = vmul.f32 %v904, 0.027777778
        %v955 = vmul.f32 %v919, 0.027777778
        %v956 = vmul.f32 %v934, 0.027777778
        %v957 = vmul.f32 %v949, 0.027777778
        %v958 = vld [vmem:[%s4] sm:$0xff]
        %v959 = vld [vmem:[%s4 + $0x8] sm:$0xff]
        %v960 = vld [vmem:[%s4 + $0x10] sm:$0xff]
        %v961 = vld [vmem:[%s4 + $0x18] sm:$0xff]
        %v962 = vld [vmem:[%s5] sm:$0x1]
        %v964 = vlaneseq
        %v965 = vshrl.u32 %v964, 7
        %v966 = vsub.s32 0, %v965
        %v967 = vrot.slane %v962, %v966
        %vm977 = vcmask 1041409
        %v978 = vsel %vm977, %v951, %v950
        %vm979 = vcmask 1042434
        %v980 = vsel %vm979, %v952, %v978
        %vm981 = vcmask 1043459
        %v982 = vsel %vm981, %v953, %v980
        %vm983 = vcmask 1044484
        %v984 = vsel %vm983, %v954, %v982
        %vm985 = vcmask 1045509
        %v986 = vsel %vm985, %v955, %v984
        %vm987 = vcmask 1046534
        %v988 = vsel %vm987, %v956, %v986
        %vm989 = vcmask 1047559
        %v990 = vsel %vm989, %v957, %v988
        %v991 = vsel %vm404, %v990, 0
        %993 = vmatprep.subr.mxu0 0.0
        %994 = vmatpush1.msra.mxu0 %v958
        %995 = vmatprep.subr.mxu0 0.0
        %996 = vmatpush1.msra.mxu0 %v959
        %997 = vmatprep.subr.mxu0 0.0
        %998 = vmatpush1.msra.mxu0 %v960
        %999 = vmatprep.subr.mxu0 0.0
        %1000 = vmatpush1.msra.mxu0 %v961
        %1001 = vmatprep.subr.mxu0 0.0
        %1002 = vmatpush1.msra.mxu0 0.0
        %1003 = vmatprep.subr.mxu0 0.0
        %1004 = vmatpush1.msra.mxu0 0.0
        %1005 = vmatprep.subr.mxu0 0.0
        %1006 = vmatpush1.msra.mxu0 0.0
        %1007 = vmatprep.subr.mxu0 0.0
        %1008 = vmatpush1.msra.mxu0 0.0
        %1009 = vmatprep.subr.mxu0 0.0
        %1010 = vmatpush1.msra.mxu0 0.0
        %1011 = vmatprep.subr.mxu0 0.0
        %1012 = vmatpush1.msra.mxu0 0.0
        %1013 = vmatprep.subr.mxu0 0.0
        %1014 = vmatpush1.msra.mxu0 0.0
        %1015 = vmatprep.subr.mxu0 0.0
        %1016 = vmatpush1.msra.mxu0 0.0
        %1017 = vmatprep.subr.mxu0 0.0
        %1018 = vmatpush1.msra.mxu0 0.0
        %1019 = vmatprep.subr.mxu0 0.0
        %1020 = vmatpush1.msra.mxu0 0.0
        %1021 = vmatprep.subr.mxu0 0.0
        %1022 = vmatpush1.msra.mxu0 0.0
        %1023 = vmatprep.subr.mxu0 0.0
        %1024 = vmatpush1.msra.mxu0 0.0
        %1025 = vmatprep.subr.mxu0 0.0
        %1026 = vmatpush1.msra.mxu0 0.0
        %1027 = vmatprep.subr.mxu0 0.0
        %1028 = vmatpush1.msra.mxu0 0.0
        %1029 = vmatprep.subr.mxu0 0.0
        %1030 = vmatpush1.msra.mxu0 0.0
        %1031 = vmatprep.subr.mxu0 0.0
        %1032 = vmatpush1.msra.mxu0 0.0
        %1033 = vmatprep.subr.mxu0 0.0
        %1034 = vmatpush1.msra.mxu0 0.0
        %1035 = vmatprep.subr.mxu0 0.0
        %1036 = vmatpush1.msra.mxu0 0.0
        %1037 = vmatprep.subr.mxu0 0.0
        %1038 = vmatpush1.msra.mxu0 0.0
        %1039 = vmatprep.subr.mxu0 0.0
        %1040 = vmatpush1.msra.mxu0 0.0
        %1041 = vmatprep.subr.mxu0 0.0
        %1042 = vmatpush1.msra.mxu0 0.0
        %1043 = vmatprep.subr.mxu0 0.0
        %1044 = vmatpush1.msra.mxu0 0.0
        %1045 = vmatprep.subr.mxu0 0.0
        %1046 = vmatpush1.msra.mxu0 0.0
        %1047 = vmatprep.subr.mxu0 0.0
        %1048 = vmatpush1.msra.mxu0 0.0
        %1049 = vmatprep.subr.mxu0 0.0
        %1050 = vmatpush1.msra.mxu0 0.0
        %1051 = vmatprep.subr.mxu0 0.0
        %1052 = vmatpush1.msra.mxu0 0.0
        %1053 = vmatprep.subr.mxu0 0.0
        %1054 = vmatpush1.msra.mxu0 0.0
        %1055 = vmatprep.subr.mxu0 0.0
        %1056 = vmatpush1.msra.mxu0 0.0
        %1057 = vmatprep.mubr.f32.mxu0 0.0
        %1058 = vmatmul.mubr.f32.gmra.mrb[0].mxu0 %v991
        %v1059 = vpop.f32.mrb[0].mxu0
        %v1060 = vadd.f32 %v967, %v1059
        %v1061 = vpop.f32.mrb[0].mxu0
        %1062 = vdwg.mxu0
        %v1063 = vtanh.pop %v1060
        %v1064 = vlaneseq
        %v1065 = vshrl.u32 %v1064, 7
        %v1066 = vadd.s32 %v1065, 8
        %v1067 = vadd.s32 %v1065, 16
        %v1068 = vadd.s32 %v1065, 24
        %v1069 = vadd.s32 %v1065, 32
        %vm1070 = vcmp.lt.s32.totalorder %v1065, 36
        %vm1071 = vcmp.lt.s32.totalorder %v1066, 36
        %vm1072 = vcmp.lt.s32.totalorder %v1067, 36
        %vm1073 = vcmp.lt.s32.totalorder %v1068, 36
        %vm1074 = vcmp.lt.s32.totalorder %v1069, 36
        %v1076 = vcombine.high %v1063, %v1063
        %v1078 = vunpack.c.l.s4 1966171168
        %v1079 = vunpack.c.0.s8 %v1078
        %v1080 = vlaneseq
        %v1081 = vshrl.u32 %v1080, 7
        %v1082 = vsub.s32 %v1079, %v1081
        %v1083 = vrot.slane %v1063, %v1082
        %v1085 = vunpack.c.l.s4 1966171168
        %v1086 = vunpack.c.0.s8 %v1085
        %v1087 = vlaneseq
        %v1088 = vshrl.u32 %v1087, 7
        %v1089 = vsub.s32 %v1086, %v1088
        %v1090 = vrot.slane %v1076, %v1089
        %v1091 = vcombine.high %v1083, %v1083
        %v1092 = vcombine.high %v1090, %v1090
        %v1094 = vunpack.c.l.s4 1966171168
        %v1095 = vunpack.c.0.s8 %v1094
        %v1096 = vlaneseq
        %v1097 = vshrl.u32 %v1096, 7
        %v1098 = vsub.s32 %v1095, %v1097
        %v1099 = vrot.slane %v1083, %v1098
        %v1101 = vunpack.c.l.s4 1966171168
        %v1102 = vunpack.c.0.s8 %v1101
        %v1103 = vlaneseq
        %v1104 = vshrl.u32 %v1103, 7
        %v1105 = vsub.s32 %v1102, %v1104
        %v1106 = vrot.slane %v1090, %v1105
        %v1108 = vunpack.c.l.s4 1966171168
        %v1109 = vunpack.c.0.s8 %v1108
        %v1110 = vlaneseq
        %v1111 = vshrl.u32 %v1110, 7
        %v1112 = vsub.s32 %v1109, %v1111
        %v1113 = vrot.slane %v1091, %v1112
        %v1115 = vunpack.c.l.s4 1966171168
        %v1116 = vunpack.c.0.s8 %v1115
        %v1117 = vlaneseq
        %v1118 = vshrl.u32 %v1117, 7
        %v1119 = vsub.s32 %v1116, %v1118
        %v1120 = vrot.slane %v1092, %v1119
        %v1121 = vcombine.high %v1099, %v1099
        %v1122 = vcombine.high %v1106, %v1106
        %v1123 = vcombine.high %v1113, %v1113
        %v1124 = vcombine.high %v1120, %v1120
        %v1125 = vlaneseq
        %v1126 = vshrl.u32 %v1125, 7
        %v1127 = vsub.s32 0, %v1126
        %v1128 = vrot.slane %v1099, %v1127
        %v1129 = vlaneseq
        %v1130 = vshrl.u32 %v1129, 7
        %v1131 = vsub.s32 0, %v1130
        %v1132 = vrot.slane %v1113, %v1131
        %v1133 = vlaneseq
        %v1134 = vshrl.u32 %v1133, 7
        %v1135 = vsub.s32 0, %v1134
        %v1136 = vrot.slane %v1121, %v1135
        %v1137 = vlaneseq
        %v1138 = vshrl.u32 %v1137, 7
        %v1139 = vsub.s32 0, %v1138
        %v1140 = vrot.slane %v1123, %v1139
        %v1141 = vlaneseq
        %v1142 = vshrl.u32 %v1141, 7
        %v1143 = vsub.s32 0, %v1142
        %v1144 = vrot.slane %v1106, %v1143
        %v1145 = vlaneseq
        %v1146 = vshrl.u32 %v1145, 7
        %v1147 = vsub.s32 0, %v1146
        %v1148 = vrot.slane %v1120, %v1147
        %v1149 = vlaneseq
        %v1150 = vshrl.u32 %v1149, 7
        %v1151 = vsub.s32 0, %v1150
        %v1152 = vrot.slane %v1122, %v1151
        %v1153 = vlaneseq
        %v1154 = vshrl.u32 %v1153, 7
        %v1155 = vsub.s32 0, %v1154
        %v1156 = vrot.slane %v1124, %v1155
        %v1165 = vmul.f32 %v790, %v1128
        %v1166 = vmul.f32 %v791, %v1128
        %v1167 = vmul.f32 %v792, %v1128
        %v1168 = vmul.f32 %v793, %v1128
        %v1169 = vmul.f32 %v794, %v1128
        %v1170 = vmul.f32 %v795, %v1132
        %v1171 = vmul.f32 %v796, %v1132
        %v1172 = vmul.f32 %v797, %v1132
        %v1173 = vmul.f32 %v798, %v1132
        %v1174 = vmul.f32 %v799, %v1132
        %v1175 = vmul.f32 %v800, %v1136
        %v1176 = vmul.f32 %v801, %v1136
        %v1177 = vmul.f32 %v802, %v1136
        %v1178 = vmul.f32 %v803, %v1136
        %v1179 = vmul.f32 %v804, %v1136
        %v1180 = vmul.f32 %v805, %v1140
        %v1181 = vmul.f32 %v806, %v1140
        %v1182 = vmul.f32 %v807, %v1140
        %v1183 = vmul.f32 %v808, %v1140
        %v1184 = vmul.f32 %v809, %v1140
        %v1185 = vmul.f32 %v810, %v1144
        %v1186 = vmul.f32 %v811, %v1144
        %v1187 = vmul.f32 %v812, %v1144
        %v1188 = vmul.f32 %v813, %v1144
        %v1189 = vmul.f32 %v814, %v1144
        %v1190 = vmul.f32 %v815, %v1148
        %v1191 = vmul.f32 %v816, %v1148
        %v1192 = vmul.f32 %v817, %v1148
        %v1193 = vmul.f32 %v818, %v1148
        %v1194 = vmul.f32 %v819, %v1148
        %v1195 = vmul.f32 %v820, %v1152
        %v1196 = vmul.f32 %v821, %v1152
        %v1197 = vmul.f32 %v822, %v1152
        %v1198 = vmul.f32 %v823, %v1152
        %v1199 = vmul.f32 %v824, %v1152
        %v1200 = vmul.f32 %v825, %v1156
        %v1201 = vmul.f32 %v826, %v1156
        %v1202 = vmul.f32 %v827, %v1156
        %v1203 = vmul.f32 %v828, %v1156
        %v1204 = vmul.f32 %v829, %v1156
        %v1205 = vld [vmem:[%s6] sm:$0x1]
        %v1207 = vlaneseq
        %v1208 = vshrl.u32 %v1207, 7
        %v1209 = vsub.s32 0, %v1208
        %v1210 = vrot.slane %v1205, %v1209
        %v1212 = vmul.f32 %v1165, %v1210
        %v1213 = vmul.f32 %v1166, %v1210
        %v1214 = vmul.f32 %v1167, %v1210
        %v1215 = vmul.f32 %v1168, %v1210
        %v1216 = vmul.f32 %v1169, %v1210
        %v1217 = vmul.f32 %v1170, %v1210
        %v1218 = vmul.f32 %v1171, %v1210
        %v1219 = vmul.f32 %v1172, %v1210
        %v1220 = vmul.f32 %v1173, %v1210
        %v1221 = vmul.f32 %v1174, %v1210
        %v1222 = vmul.f32 %v1175, %v1210
        %v1223 = vmul.f32 %v1176, %v1210
        %v1224 = vmul.f32 %v1177, %v1210
        %v1225 = vmul.f32 %v1178, %v1210
        %v1226 = vmul.f32 %v1179, %v1210
        %v1227 = vmul.f32 %v1180, %v1210
        %v1228 = vmul.f32 %v1181, %v1210
        %v1229 = vmul.f32 %v1182, %v1210
        %v1230 = vmul.f32 %v1183, %v1210
        %v1231 = vmul.f32 %v1184, %v1210
        %v1232 = vmul.f32 %v1185, %v1210
        %v1233 = vmul.f32 %v1186, %v1210
        %v1234 = vmul.f32 %v1187, %v1210
        %v1235 = vmul.f32 %v1188, %v1210
        %v1236 = vmul.f32 %v1189, %v1210
        %v1237 = vmul.f32 %v1190, %v1210
        %v1238 = vmul.f32 %v1191, %v1210
        %v1239 = vmul.f32 %v1192, %v1210
        %v1240 = vmul.f32 %v1193, %v1210
        %v1241 = vmul.f32 %v1194, %v1210
        %v1242 = vmul.f32 %v1195, %v1210
        %v1243 = vmul.f32 %v1196, %v1210
        %v1244 = vmul.f32 %v1197, %v1210
        %v1245 = vmul.f32 %v1198, %v1210
        %v1246 = vmul.f32 %v1199, %v1210
        %v1247 = vmul.f32 %v1200, %v1210
        %v1248 = vmul.f32 %v1201, %v1210
        %v1249 = vmul.f32 %v1202, %v1210
        %v1250 = vmul.f32 %v1203, %v1210
        %v1251 = vmul.f32 %v1204, %v1210
        %v1252 = vsel %vm404, %v1212, 0.0
        %1253 = vadd.xlane.f32.xlu0 %v1252
        %v1254 = vpop.xlane.xlu0 %1253
        %v1255 = vsel %vm404, %v1213, 0.0
        %1256 = vadd.xlane.f32.xlu0 %v1255
        %v1257 = vpop.xlane.xlu0 %1256
        %v1258 = vsel %vm404, %v1214, 0.0
        %1259 = vadd.xlane.f32.xlu0 %v1258
        %v1260 = vpop.xlane.xlu0 %1259
        %v1261 = vsel %vm404, %v1215, 0.0
        %1262 = vadd.xlane.f32.xlu0 %v1261
        %v1263 = vpop.xlane.xlu0 %1262
        %v1264 = vsel %vm404, %v1216, 0.0
        %1265 = vadd.xlane.f32.xlu0 %v1264
        %v1266 = vpop.xlane.xlu0 %1265
        %v1267 = vsel %vm404, %v1217, 0.0
        %1268 = vadd.xlane.f32.xlu0 %v1267
        %v1269 = vpop.xlane.xlu0 %1268
        %v1270 = vsel %vm404, %v1218, 0.0
        %1271 = vadd.xlane.f32.xlu0 %v1270
        %v1272 = vpop.xlane.xlu0 %1271
        %v1273 = vsel %vm404, %v1219, 0.0
        %1274 = vadd.xlane.f32.xlu0 %v1273
        %v1275 = vpop.xlane.xlu0 %1274
        %v1276 = vsel %vm404, %v1220, 0.0
        %1277 = vadd.xlane.f32.xlu0 %v1276
        %v1278 = vpop.xlane.xlu0 %1277
        %v1279 = vsel %vm404, %v1221, 0.0
        %1280 = vadd.xlane.f32.xlu0 %v1279
        %v1281 = vpop.xlane.xlu0 %1280
        %v1282 = vsel %vm404, %v1222, 0.0
        %1283 = vadd.xlane.f32.xlu0 %v1282
        %v1284 = vpop.xlane.xlu0 %1283
        %v1285 = vsel %vm404, %v1223, 0.0
        %1286 = vadd.xlane.f32.xlu0 %v1285
        %v1287 = vpop.xlane.xlu0 %1286
        %v1288 = vsel %vm404, %v1224, 0.0
        %1289 = vadd.xlane.f32.xlu0 %v1288
        %v1290 = vpop.xlane.xlu0 %1289
        %v1291 = vsel %vm404, %v1225, 0.0
        %1292 = vadd.xlane.f32.xlu0 %v1291
        %v1293 = vpop.xlane.xlu0 %1292
        %v1294 = vsel %vm404, %v1226, 0.0
        %1295 = vadd.xlane.f32.xlu0 %v1294
        %v1296 = vpop.xlane.xlu0 %1295
        %v1297 = vsel %vm404, %v1227, 0.0
        %1298 = vadd.xlane.f32.xlu0 %v1297
        %v1299 = vpop.xlane.xlu0 %1298
        %v1300 = vsel %vm404, %v1228, 0.0
        %1301 = vadd.xlane.f32.xlu0 %v1300
        %v1302 = vpop.xlane.xlu0 %1301
        %v1303 = vsel %vm404, %v1229, 0.0
        %1304 = vadd.xlane.f32.xlu0 %v1303
        %v1305 = vpop.xlane.xlu0 %1304
        %v1306 = vsel %vm404, %v1230, 0.0
        %1307 = vadd.xlane.f32.xlu0 %v1306
        %v1308 = vpop.xlane.xlu0 %1307
        %v1309 = vsel %vm404, %v1231, 0.0
        %1310 = vadd.xlane.f32.xlu0 %v1309
        %v1311 = vpop.xlane.xlu0 %1310
        %v1312 = vsel %vm404, %v1232, 0.0
        %1313 = vadd.xlane.f32.xlu0 %v1312
        %v1314 = vpop.xlane.xlu0 %1313
        %v1315 = vsel %vm404, %v1233, 0.0
        %1316 = vadd.xlane.f32.xlu0 %v1315
        %v1317 = vpop.xlane.xlu0 %1316
        %v1318 = vsel %vm404, %v1234, 0.0
        %1319 = vadd.xlane.f32.xlu0 %v1318
        %v1320 = vpop.xlane.xlu0 %1319
        %v1321 = vsel %vm404, %v1235, 0.0
        %1322 = vadd.xlane.f32.xlu0 %v1321
        %v1323 = vpop.xlane.xlu0 %1322
        %v1324 = vsel %vm404, %v1236, 0.0
        %1325 = vadd.xlane.f32.xlu0 %v1324
        %v1326 = vpop.xlane.xlu0 %1325
        %v1327 = vsel %vm404, %v1237, 0.0
        %1328 = vadd.xlane.f32.xlu0 %v1327
        %v1329 = vpop.xlane.xlu0 %1328
        %v1330 = vsel %vm404, %v1238, 0.0
        %1331 = vadd.xlane.f32.xlu0 %v1330
        %v1332 = vpop.xlane.xlu0 %1331
        %v1333 = vsel %vm404, %v1239, 0.0
        %1334 = vadd.xlane.f32.xlu0 %v1333
        %v1335 = vpop.xlane.xlu0 %1334
        %v1336 = vsel %vm404, %v1240, 0.0
        %1337 = vadd.xlane.f32.xlu0 %v1336
        %v1338 = vpop.xlane.xlu0 %1337
        %v1339 = vsel %vm404, %v1241, 0.0
        %1340 = vadd.xlane.f32.xlu0 %v1339
        %v1341 = vpop.xlane.xlu0 %1340
        %v1342 = vsel %vm404, %v1242, 0.0
        %1343 = vadd.xlane.f32.xlu0 %v1342
        %v1344 = vpop.xlane.xlu0 %1343
        %v1345 = vsel %vm404, %v1243, 0.0
        %1346 = vadd.xlane.f32.xlu0 %v1345
        %v1347 = vpop.xlane.xlu0 %1346
        %v1348 = vsel %vm404, %v1244, 0.0
        %1349 = vadd.xlane.f32.xlu0 %v1348
        %v1350 = vpop.xlane.xlu0 %1349
        %v1351 = vsel %vm404, %v1245, 0.0
        %1352 = vadd.xlane.f32.xlu0 %v1351
        %v1353 = vpop.xlane.xlu0 %1352
        %v1354 = vsel %vm404, %v1246, 0.0
        %1355 = vadd.xlane.f32.xlu0 %v1354
        %v1356 = vpop.xlane.xlu0 %1355
        %v1357 = vsel %vm404, %v1247, 0.0
        %1358 = vadd.xlane.f32.xlu0 %v1357
        %v1359 = vpop.xlane.xlu0 %1358
        %v1360 = vsel %vm404, %v1248, 0.0
        %1361 = vadd.xlane.f32.xlu0 %v1360
        %v1362 = vpop.xlane.xlu0 %1361
        %v1363 = vsel %vm404, %v1249, 0.0
        %1364 = vadd.xlane.f32.xlu0 %v1363
        %v1365 = vpop.xlane.xlu0 %1364
        %v1366 = vsel %vm404, %v1250, 0.0
        %1367 = vadd.xlane.f32.xlu0 %v1366
        %v1368 = vpop.xlane.xlu0 %1367
        %v1369 = vsel %vm404, %v1251, 0.0
        %1370 = vadd.xlane.f32.xlu0 %v1369
        %v1371 = vpop.xlane.xlu0 %1370
        %v1372 = vsel %vm1070, 1, 0
        %v1373 = vsel %vm1071, 1, 0
        %v1374 = vsel %vm1072, 1, 0
        %v1375 = vsel %vm1073, 1, 0
        %v1376 = vsel %vm1074, 1, 0
        %vm1377 = vcmp.eq.s32.totalorder %v1372, 1
        %vm1378 = vcmp.eq.s32.totalorder %v1373, 1
        %vm1379 = vcmp.eq.s32.totalorder %v1374, 1
        %vm1380 = vcmp.eq.s32.totalorder %v1375, 1
        %vm1381 = vcmp.eq.s32.totalorder %v1376, 1
        %v1382 = vsel %vm1377, %v1254, -1e+30
        %v1383 = vsel %vm1378, %v1257, -1e+30
        %v1384 = vsel %vm1379, %v1260, -1e+30
        %v1385 = vsel %vm1380, %v1263, -1e+30
        %v1386 = vsel %vm1381, %v1266, -1e+30
        %v1387 = vsel %vm1377, %v1269, -1e+30
        %v1388 = vsel %vm1378, %v1272, -1e+30
        %v1389 = vsel %vm1379, %v1275, -1e+30
        %v1390 = vsel %vm1380, %v1278, -1e+30
        %v1391 = vsel %vm1381, %v1281, -1e+30
        %v1392 = vsel %vm1377, %v1284, -1e+30
        %v1393 = vsel %vm1378, %v1287, -1e+30
        %v1394 = vsel %vm1379, %v1290, -1e+30
        %v1395 = vsel %vm1380, %v1293, -1e+30
        %v1396 = vsel %vm1381, %v1296, -1e+30
        %v1397 = vsel %vm1377, %v1299, -1e+30
        %v1398 = vsel %vm1378, %v1302, -1e+30
        %v1399 = vsel %vm1379, %v1305, -1e+30
        %v1400 = vsel %vm1380, %v1308, -1e+30
        %v1401 = vsel %vm1381, %v1311, -1e+30
        %v1402 = vsel %vm1377, %v1314, -1e+30
        %v1403 = vsel %vm1378, %v1317, -1e+30
        %v1404 = vsel %vm1379, %v1320, -1e+30
        %v1405 = vsel %vm1380, %v1323, -1e+30
        %v1406 = vsel %vm1381, %v1326, -1e+30
        %v1407 = vsel %vm1377, %v1329, -1e+30
        %v1408 = vsel %vm1378, %v1332, -1e+30
        %v1409 = vsel %vm1379, %v1335, -1e+30
        %v1410 = vsel %vm1380, %v1338, -1e+30
        %v1411 = vsel %vm1381, %v1341, -1e+30
        %v1412 = vsel %vm1377, %v1344, -1e+30
        %v1413 = vsel %vm1378, %v1347, -1e+30
        %v1414 = vsel %vm1379, %v1350, -1e+30
        %v1415 = vsel %vm1380, %v1353, -1e+30
        %v1416 = vsel %vm1381, %v1356, -1e+30
        %v1417 = vsel %vm1377, %v1359, -1e+30
        %v1418 = vsel %vm1378, %v1362, -1e+30
        %v1419 = vsel %vm1379, %v1365, -1e+30
        %v1420 = vsel %vm1380, %v1368, -1e+30
        %v1421 = vsel %vm1381, %v1371, -1e+30
        %v1422 = vmax.f32 %v1382, %v1383
        %v1423 = vmax.f32 %v1422, %v1384
        %v1424 = vmax.f32 %v1423, %v1385
        %v1425 = vmax.f32 %v1424, %v1386
        %v1426 = vrot.slane %v1425, 4
        %v1427 = vmax.f32 %v1425, %v1426
        %v1428 = vrot.slane %v1427, 2
        %v1429 = vmax.f32 %v1427, %v1428
        %v1430 = vrot.slane %v1429, 1
        %v1431 = vmax.f32 %v1429, %v1430
        %v1432 = vmax.f32 %v1387, %v1388
        %v1433 = vmax.f32 %v1432, %v1389
        %v1434 = vmax.f32 %v1433, %v1390
        %v1435 = vmax.f32 %v1434, %v1391
        %v1436 = vrot.slane %v1435, 4
        %v1437 = vmax.f32 %v1435, %v1436
        %v1438 = vrot.slane %v1437, 2
        %v1439 = vmax.f32 %v1437, %v1438
        %v1440 = vrot.slane %v1439, 1
        %v1441 = vmax.f32 %v1439, %v1440
        %v1442 = vmax.f32 %v1392, %v1393
        %v1443 = vmax.f32 %v1442, %v1394
        %v1444 = vmax.f32 %v1443, %v1395
        %v1445 = vmax.f32 %v1444, %v1396
        %v1446 = vrot.slane %v1445, 4
        %v1447 = vmax.f32 %v1445, %v1446
        %v1448 = vrot.slane %v1447, 2
        %v1449 = vmax.f32 %v1447, %v1448
        %v1450 = vrot.slane %v1449, 1
        %v1451 = vmax.f32 %v1449, %v1450
        %v1452 = vmax.f32 %v1397, %v1398
        %v1453 = vmax.f32 %v1452, %v1399
        %v1454 = vmax.f32 %v1453, %v1400
        %v1455 = vmax.f32 %v1454, %v1401
        %v1456 = vrot.slane %v1455, 4
        %v1457 = vmax.f32 %v1455, %v1456
        %v1458 = vrot.slane %v1457, 2
        %v1459 = vmax.f32 %v1457, %v1458
        %v1460 = vrot.slane %v1459, 1
        %v1461 = vmax.f32 %v1459, %v1460
        %v1462 = vmax.f32 %v1402, %v1403
        %v1463 = vmax.f32 %v1462, %v1404
        %v1464 = vmax.f32 %v1463, %v1405
        %v1465 = vmax.f32 %v1464, %v1406
        %v1466 = vrot.slane %v1465, 4
        %v1467 = vmax.f32 %v1465, %v1466
        %v1468 = vrot.slane %v1467, 2
        %v1469 = vmax.f32 %v1467, %v1468
        %v1470 = vrot.slane %v1469, 1
        %v1471 = vmax.f32 %v1469, %v1470
        %v1472 = vmax.f32 %v1407, %v1408
        %v1473 = vmax.f32 %v1472, %v1409
        %v1474 = vmax.f32 %v1473, %v1410
        %v1475 = vmax.f32 %v1474, %v1411
        %v1476 = vrot.slane %v1475, 4
        %v1477 = vmax.f32 %v1475, %v1476
        %v1478 = vrot.slane %v1477, 2
        %v1479 = vmax.f32 %v1477, %v1478
        %v1480 = vrot.slane %v1479, 1
        %v1481 = vmax.f32 %v1479, %v1480
        %v1482 = vmax.f32 %v1412, %v1413
        %v1483 = vmax.f32 %v1482, %v1414
        %v1484 = vmax.f32 %v1483, %v1415
        %v1485 = vmax.f32 %v1484, %v1416
        %v1486 = vrot.slane %v1485, 4
        %v1487 = vmax.f32 %v1485, %v1486
        %v1488 = vrot.slane %v1487, 2
        %v1489 = vmax.f32 %v1487, %v1488
        %v1490 = vrot.slane %v1489, 1
        %v1491 = vmax.f32 %v1489, %v1490
        %v1492 = vmax.f32 %v1417, %v1418
        %v1493 = vmax.f32 %v1492, %v1419
        %v1494 = vmax.f32 %v1493, %v1420
        %v1495 = vmax.f32 %v1494, %v1421
        %v1496 = vrot.slane %v1495, 4
        %v1497 = vmax.f32 %v1495, %v1496
        %v1498 = vrot.slane %v1497, 2
        %v1499 = vmax.f32 %v1497, %v1498
        %v1500 = vrot.slane %v1499, 1
        %v1501 = vmax.f32 %v1499, %v1500
        %v1502 = vsub.f32 %v1382, %v1431
        %v1503 = vsub.f32 %v1383, %v1431
        %v1504 = vsub.f32 %v1384, %v1431
        %v1505 = vsub.f32 %v1385, %v1431
        %v1506 = vsub.f32 %v1386, %v1431
        %v1507 = vsub.f32 %v1387, %v1441
        %v1508 = vsub.f32 %v1388, %v1441
        %v1509 = vsub.f32 %v1389, %v1441
        %v1510 = vsub.f32 %v1390, %v1441
        %v1511 = vsub.f32 %v1391, %v1441
        %v1512 = vsub.f32 %v1392, %v1451
        %v1513 = vsub.f32 %v1393, %v1451
        %v1514 = vsub.f32 %v1394, %v1451
        %v1515 = vsub.f32 %v1395, %v1451
        %v1516 = vsub.f32 %v1396, %v1451
        %v1517 = vsub.f32 %v1397, %v1461
        %v1518 = vsub.f32 %v1398, %v1461
        %v1519 = vsub.f32 %v1399, %v1461
        %v1520 = vsub.f32 %v1400, %v1461
        %v1521 = vsub.f32 %v1401, %v1461
        %v1522 = vsub.f32 %v1402, %v1471
        %v1523 = vsub.f32 %v1403, %v1471
        %v1524 = vsub.f32 %v1404, %v1471
        %v1525 = vsub.f32 %v1405, %v1471
        %v1526 = vsub.f32 %v1406, %v1471
        %v1527 = vsub.f32 %v1407, %v1481
        %v1528 = vsub.f32 %v1408, %v1481
        %v1529 = vsub.f32 %v1409, %v1481
        %v1530 = vsub.f32 %v1410, %v1481
        %v1531 = vsub.f32 %v1411, %v1481
        %v1532 = vsub.f32 %v1412, %v1491
        %v1533 = vsub.f32 %v1413, %v1491
        %v1534 = vsub.f32 %v1414, %v1491
        %v1535 = vsub.f32 %v1415, %v1491
        %v1536 = vsub.f32 %v1416, %v1491
        %v1537 = vsub.f32 %v1417, %v1501
        %v1538 = vsub.f32 %v1418, %v1501
        %v1539 = vsub.f32 %v1419, %v1501
        %v1540 = vsub.f32 %v1420, %v1501
        %v1541 = vsub.f32 %v1421, %v1501
        %v1542 = vmul.f32 %v1502, 1.442695
        %v1543 = vpow.pop %v1542
        %v1544 = vmul.f32 %v1503, 1.442695
        %v1545 = vpow.pop %v1544
        %v1546 = vmul.f32 %v1504, 1.442695
        %v1547 = vpow.pop %v1546
        %v1548 = vmul.f32 %v1505, 1.442695
        %v1549 = vpow.pop %v1548
        %v1550 = vmul.f32 %v1506, 1.442695
        %v1551 = vpow.pop %v1550
        %v1552 = vmul.f32 %v1507, 1.442695
        %v1553 = vpow.pop %v1552
        %v1554 = vmul.f32 %v1508, 1.442695
        %v1555 = vpow.pop %v1554
        %v1556 = vmul.f32 %v1509, 1.442695
        %v1557 = vpow.pop %v1556
        %v1558 = vmul.f32 %v1510, 1.442695
        %v1559 = vpow.pop %v1558
        %v1560 = vmul.f32 %v1511, 1.442695
        %v1561 = vpow.pop %v1560
        %v1562 = vmul.f32 %v1512, 1.442695
        %v1563 = vpow.pop %v1562
        %v1564 = vmul.f32 %v1513, 1.442695
        %v1565 = vpow.pop %v1564
        %v1566 = vmul.f32 %v1514, 1.442695
        %v1567 = vpow.pop %v1566
        %v1568 = vmul.f32 %v1515, 1.442695
        %v1569 = vpow.pop %v1568
        %v1570 = vmul.f32 %v1516, 1.442695
        %v1571 = vpow.pop %v1570
        %v1572 = vmul.f32 %v1517, 1.442695
        %v1573 = vpow.pop %v1572
        %v1574 = vmul.f32 %v1518, 1.442695
        %v1575 = vpow.pop %v1574
        %v1576 = vmul.f32 %v1519, 1.442695
        %v1577 = vpow.pop %v1576
        %v1578 = vmul.f32 %v1520, 1.442695
        %v1579 = vpow.pop %v1578
        %v1580 = vmul.f32 %v1521, 1.442695
        %v1581 = vpow.pop %v1580
        %v1582 = vmul.f32 %v1522, 1.442695
        %v1583 = vpow.pop %v1582
        %v1584 = vmul.f32 %v1523, 1.442695
        %v1585 = vpow.pop %v1584
        %v1586 = vmul.f32 %v1524, 1.442695
        %v1587 = vpow.pop %v1586
        %v1588 = vmul.f32 %v1525, 1.442695
        %v1589 = vpow.pop %v1588
        %v1590 = vmul.f32 %v1526, 1.442695
        %v1591 = vpow.pop %v1590
        %v1592 = vmul.f32 %v1527, 1.442695
        %v1593 = vpow.pop %v1592
        %v1594 = vmul.f32 %v1528, 1.442695
        %v1595 = vpow.pop %v1594
        %v1596 = vmul.f32 %v1529, 1.442695
        %v1597 = vpow.pop %v1596
        %v1598 = vmul.f32 %v1530, 1.442695
        %v1599 = vpow.pop %v1598
        %v1600 = vmul.f32 %v1531, 1.442695
        %v1601 = vpow.pop %v1600
        %v1602 = vmul.f32 %v1532, 1.442695
        %v1603 = vpow.pop %v1602
        %v1604 = vmul.f32 %v1533, 1.442695
        %v1605 = vpow.pop %v1604
        %v1606 = vmul.f32 %v1534, 1.442695
        %v1607 = vpow.pop %v1606
        %v1608 = vmul.f32 %v1535, 1.442695
        %v1609 = vpow.pop %v1608
        %v1610 = vmul.f32 %v1536, 1.442695
        %v1611 = vpow.pop %v1610
        %v1612 = vmul.f32 %v1537, 1.442695
        %v1613 = vpow.pop %v1612
        %v1614 = vmul.f32 %v1538, 1.442695
        %v1615 = vpow.pop %v1614
        %v1616 = vmul.f32 %v1539, 1.442695
        %v1617 = vpow.pop %v1616
        %v1618 = vmul.f32 %v1540, 1.442695
        %v1619 = vpow.pop %v1618
        %v1620 = vmul.f32 %v1541, 1.442695
        %v1621 = vpow.pop %v1620
        %v1622 = vadd.f32 %v1543, %v1545
        %v1623 = vadd.f32 %v1622, %v1547
        %v1624 = vadd.f32 %v1623, %v1549
        %v1625 = vadd.f32 %v1624, %v1551
        %v1626 = vrot.slane %v1625, 4
        %v1627 = vadd.f32 %v1625, %v1626
        %v1628 = vrot.slane %v1627, 2
        %v1629 = vadd.f32 %v1627, %v1628
        %v1630 = vrot.slane %v1629, 1
        %v1631 = vadd.f32 %v1629, %v1630
        %v1632 = vadd.f32 %v1553, %v1555
        %v1633 = vadd.f32 %v1632, %v1557
        %v1634 = vadd.f32 %v1633, %v1559
        %v1635 = vadd.f32 %v1634, %v1561
        %v1636 = vrot.slane %v1635, 4
        %v1637 = vadd.f32 %v1635, %v1636
        %v1638 = vrot.slane %v1637, 2
        %v1639 = vadd.f32 %v1637, %v1638
        %v1640 = vrot.slane %v1639, 1
        %v1641 = vadd.f32 %v1639, %v1640
        %v1642 = vadd.f32 %v1563, %v1565
        %v1643 = vadd.f32 %v1642, %v1567
        %v1644 = vadd.f32 %v1643, %v1569
        %v1645 = vadd.f32 %v1644, %v1571
        %v1646 = vrot.slane %v1645, 4
        %v1647 = vadd.f32 %v1645, %v1646
        %v1648 = vrot.slane %v1647, 2
        %v1649 = vadd.f32 %v1647, %v1648
        %v1650 = vrot.slane %v1649, 1
        %v1651 = vadd.f32 %v1649, %v1650
        %v1652 = vadd.f32 %v1573, %v1575
        %v1653 = vadd.f32 %v1652, %v1577
        %v1654 = vadd.f32 %v1653, %v1579
        %v1655 = vadd.f32 %v1654, %v1581
        %v1656 = vrot.slane %v1655, 4
        %v1657 = vadd.f32 %v1655, %v1656
        %v1658 = vrot.slane %v1657, 2
        %v1659 = vadd.f32 %v1657, %v1658
        %v1660 = vrot.slane %v1659, 1
        %v1661 = vadd.f32 %v1659, %v1660
        %v1662 = vadd.f32 %v1583, %v1585
        %v1663 = vadd.f32 %v1662, %v1587
        %v1664 = vadd.f32 %v1663, %v1589
        %v1665 = vadd.f32 %v1664, %v1591
        %v1666 = vrot.slane %v1665, 4
        %v1667 = vadd.f32 %v1665, %v1666
        %v1668 = vrot.slane %v1667, 2
        %v1669 = vadd.f32 %v1667, %v1668
        %v1670 = vrot.slane %v1669, 1
        %v1671 = vadd.f32 %v1669, %v1670
        %v1672 = vadd.f32 %v1593, %v1595
        %v1673 = vadd.f32 %v1672, %v1597
        %v1674 = vadd.f32 %v1673, %v1599
        %v1675 = vadd.f32 %v1674, %v1601
        %v1676 = vrot.slane %v1675, 4
        %v1677 = vadd.f32 %v1675, %v1676
        %v1678 = vrot.slane %v1677, 2
        %v1679 = vadd.f32 %v1677, %v1678
        %v1680 = vrot.slane %v1679, 1
        %v1681 = vadd.f32 %v1679, %v1680
        %v1682 = vadd.f32 %v1603, %v1605
        %v1683 = vadd.f32 %v1682, %v1607
        %v1684 = vadd.f32 %v1683, %v1609
        %v1685 = vadd.f32 %v1684, %v1611
        %v1686 = vrot.slane %v1685, 4
        %v1687 = vadd.f32 %v1685, %v1686
        %v1688 = vrot.slane %v1687, 2
        %v1689 = vadd.f32 %v1687, %v1688
        %v1690 = vrot.slane %v1689, 1
        %v1691 = vadd.f32 %v1689, %v1690
        %v1692 = vadd.f32 %v1613, %v1615
        %v1693 = vadd.f32 %v1692, %v1617
        %v1694 = vadd.f32 %v1693, %v1619
        %v1695 = vadd.f32 %v1694, %v1621
        %v1696 = vrot.slane %v1695, 4
        %v1697 = vadd.f32 %v1695, %v1696
        %v1698 = vrot.slane %v1697, 2
        %v1699 = vadd.f32 %v1697, %v1698
        %v1700 = vrot.slane %v1699, 1
        %v1701 = vadd.f32 %v1699, %v1700
        %v1702 = vrcp.pop %v1631
        %v1703 = vrcp.pop %v1641
        %v1704 = vrcp.pop %v1651
        %v1705 = vrcp.pop %v1661
        %v1706 = vrcp.pop %v1671
        %v1707 = vrcp.pop %v1681
        %v1708 = vrcp.pop %v1691
        %v1709 = vrcp.pop %v1701
        %v1710 = vmul.f32 %v1543, %v1702
        %v1711 = vmul.f32 %v1545, %v1702
        %v1712 = vmul.f32 %v1547, %v1702
        %v1713 = vmul.f32 %v1549, %v1702
        %v1714 = vmul.f32 %v1551, %v1702
        %v1715 = vmul.f32 %v1553, %v1703
        %v1716 = vmul.f32 %v1555, %v1703
        %v1717 = vmul.f32 %v1557, %v1703
        %v1718 = vmul.f32 %v1559, %v1703
        %v1719 = vmul.f32 %v1561, %v1703
        %v1720 = vmul.f32 %v1563, %v1704
        %v1721 = vmul.f32 %v1565, %v1704
        %v1722 = vmul.f32 %v1567, %v1704
        %v1723 = vmul.f32 %v1569, %v1704
        %v1724 = vmul.f32 %v1571, %v1704
        %v1725 = vmul.f32 %v1573, %v1705
        %v1726 = vmul.f32 %v1575, %v1705
        %v1727 = vmul.f32 %v1577, %v1705
        %v1728 = vmul.f32 %v1579, %v1705
        %v1729 = vmul.f32 %v1581, %v1705
        %v1730 = vmul.f32 %v1583, %v1706
        %v1731 = vmul.f32 %v1585, %v1706
        %v1732 = vmul.f32 %v1587, %v1706
        %v1733 = vmul.f32 %v1589, %v1706
        %v1734 = vmul.f32 %v1591, %v1706
        %v1735 = vmul.f32 %v1593, %v1707
        %v1736 = vmul.f32 %v1595, %v1707
        %v1737 = vmul.f32 %v1597, %v1707
        %v1738 = vmul.f32 %v1599, %v1707
        %v1739 = vmul.f32 %v1601, %v1707
        %v1740 = vmul.f32 %v1603, %v1708
        %v1741 = vmul.f32 %v1605, %v1708
        %v1742 = vmul.f32 %v1607, %v1708
        %v1743 = vmul.f32 %v1609, %v1708
        %v1744 = vmul.f32 %v1611, %v1708
        %v1745 = vmul.f32 %v1613, %v1709
        %v1746 = vmul.f32 %v1615, %v1709
        %v1747 = vmul.f32 %v1617, %v1709
        %v1748 = vmul.f32 %v1619, %v1709
        %v1749 = vmul.f32 %v1621, %v1709
        %v1750 = vmul.f32 %v1710, %v353
        %v1751 = vmul.f32 %v1711, %v354
        %v1752 = vmul.f32 %v1712, %v355
        %v1753 = vmul.f32 %v1713, %v356
        %v1754 = vmul.f32 %v1714, %v357
        %v1755 = vmul.f32 %v1715, %v358
        %v1756 = vmul.f32 %v1716, %v359
        %v1757 = vmul.f32 %v1717, %v360
        %v1758 = vmul.f32 %v1718, %v361
        %v1759 = vmul.f32 %v1719, %v362
        %v1760 = vmul.f32 %v1720, %v363
        %v1761 = vmul.f32 %v1721, %v364
        %v1762 = vmul.f32 %v1722, %v365
        %v1763 = vmul.f32 %v1723, %v366
        %v1764 = vmul.f32 %v1724, %v367
        %v1765 = vmul.f32 %v1725, %v368
        %v1766 = vmul.f32 %v1726, %v369
        %v1767 = vmul.f32 %v1727, %v370
        %v1768 = vmul.f32 %v1728, %v371
        %v1769 = vmul.f32 %v1729, %v372
        %v1770 = vmul.f32 %v1730, %v373
        %v1771 = vmul.f32 %v1731, %v374
        %v1772 = vmul.f32 %v1732, %v375
        %v1773 = vmul.f32 %v1733, %v376
        %v1774 = vmul.f32 %v1734, %v377
        %v1775 = vmul.f32 %v1735, %v378
        %v1776 = vmul.f32 %v1736, %v379
        %v1777 = vmul.f32 %v1737, %v380
        %v1778 = vmul.f32 %v1738, %v381
        %v1779 = vmul.f32 %v1739, %v382
        %v1780 = vmul.f32 %v1740, %v383
        %v1781 = vmul.f32 %v1741, %v384
        %v1782 = vmul.f32 %v1742, %v385
        %v1783 = vmul.f32 %v1743, %v386
        %v1784 = vmul.f32 %v1744, %v387
        %v1785 = vmul.f32 %v1745, %v388
        %v1786 = vmul.f32 %v1746, %v389
        %v1787 = vmul.f32 %v1747, %v390
        %v1788 = vmul.f32 %v1748, %v391
        %v1789 = vmul.f32 %v1749, %v392
        %v1790 = vsel %vm404, %v1750, 0.0
        %v1791 = vsel %vm404, %v1751, 0.0
        %v1792 = vadd.f32 %v1790, %v1791
        %v1793 = vsel %vm404, %v1752, 0.0
        %v1794 = vadd.f32 %v1792, %v1793
        %v1795 = vsel %vm404, %v1753, 0.0
        %v1796 = vadd.f32 %v1794, %v1795
        %v1797 = vsel %vm404, %v1754, 0.0
        %v1798 = vadd.f32 %v1796, %v1797
        %v1799 = vrot.slane %v1798, 4
        %v1800 = vadd.f32 %v1798, %v1799
        %v1801 = vrot.slane %v1800, 2
        %v1802 = vadd.f32 %v1800, %v1801
        %v1803 = vrot.slane %v1802, 1
        %v1804 = vadd.f32 %v1802, %v1803
        %v1805 = vsel %vm404, %v1755, 0.0
        %v1806 = vsel %vm404, %v1756, 0.0
        %v1807 = vadd.f32 %v1805, %v1806
        %v1808 = vsel %vm404, %v1757, 0.0
        %v1809 = vadd.f32 %v1807, %v1808
        %v1810 = vsel %vm404, %v1758, 0.0
        %v1811 = vadd.f32 %v1809, %v1810
        %v1812 = vsel %vm404, %v1759, 0.0
        %v1813 = vadd.f32 %v1811, %v1812
        %v1814 = vrot.slane %v1813, 4
        %v1815 = vadd.f32 %v1813, %v1814
        %v1816 = vrot.slane %v1815, 2
        %v1817 = vadd.f32 %v1815, %v1816
        %v1818 = vrot.slane %v1817, 1
        %v1819 = vadd.f32 %v1817, %v1818
        %v1820 = vsel %vm404, %v1760, 0.0
        %v1821 = vsel %vm404, %v1761, 0.0
        %v1822 = vadd.f32 %v1820, %v1821
        %v1823 = vsel %vm404, %v1762, 0.0
        %v1824 = vadd.f32 %v1822, %v1823
        %v1825 = vsel %vm404, %v1763, 0.0
        %v1826 = vadd.f32 %v1824, %v1825
        %v1827 = vsel %vm404, %v1764, 0.0
        %v1828 = vadd.f32 %v1826, %v1827
        %v1829 = vrot.slane %v1828, 4
        %v1830 = vadd.f32 %v1828, %v1829
        %v1831 = vrot.slane %v1830, 2
        %v1832 = vadd.f32 %v1830, %v1831
        %v1833 = vrot.slane %v1832, 1
        %v1834 = vadd.f32 %v1832, %v1833
        %v1835 = vsel %vm404, %v1765, 0.0
        %v1836 = vsel %vm404, %v1766, 0.0
        %v1837 = vadd.f32 %v1835, %v1836
        %v1838 = vsel %vm404, %v1767, 0.0
        %v1839 = vadd.f32 %v1837, %v1838
        %v1840 = vsel %vm404, %v1768, 0.0
        %v1841 = vadd.f32 %v1839, %v1840
        %v1842 = vsel %vm404, %v1769, 0.0
        %v1843 = vadd.f32 %v1841, %v1842
        %v1844 = vrot.slane %v1843, 4
        %v1845 = vadd.f32 %v1843, %v1844
        %v1846 = vrot.slane %v1845, 2
        %v1847 = vadd.f32 %v1845, %v1846
        %v1848 = vrot.slane %v1847, 1
        %v1849 = vadd.f32 %v1847, %v1848
        %v1850 = vsel %vm404, %v1770, 0.0
        %v1851 = vsel %vm404, %v1771, 0.0
        %v1852 = vadd.f32 %v1850, %v1851
        %v1853 = vsel %vm404, %v1772, 0.0
        %v1854 = vadd.f32 %v1852, %v1853
        %v1855 = vsel %vm404, %v1773, 0.0
        %v1856 = vadd.f32 %v1854, %v1855
        %v1857 = vsel %vm404, %v1774, 0.0
        %v1858 = vadd.f32 %v1856, %v1857
        %v1859 = vrot.slane %v1858, 4
        %v1860 = vadd.f32 %v1858, %v1859
        %v1861 = vrot.slane %v1860, 2
        %v1862 = vadd.f32 %v1860, %v1861
        %v1863 = vrot.slane %v1862, 1
        %v1864 = vadd.f32 %v1862, %v1863
        %v1865 = vsel %vm404, %v1775, 0.0
        %v1866 = vsel %vm404, %v1776, 0.0
        %v1867 = vadd.f32 %v1865, %v1866
        %v1868 = vsel %vm404, %v1777, 0.0
        %v1869 = vadd.f32 %v1867, %v1868
        %v1870 = vsel %vm404, %v1778, 0.0
        %v1871 = vadd.f32 %v1869, %v1870
        %v1872 = vsel %vm404, %v1779, 0.0
        %v1873 = vadd.f32 %v1871, %v1872
        %v1874 = vrot.slane %v1873, 4
        %v1875 = vadd.f32 %v1873, %v1874
        %v1876 = vrot.slane %v1875, 2
        %v1877 = vadd.f32 %v1875, %v1876
        %v1878 = vrot.slane %v1877, 1
        %v1879 = vadd.f32 %v1877, %v1878
        %v1880 = vsel %vm404, %v1780, 0.0
        %v1881 = vsel %vm404, %v1781, 0.0
        %v1882 = vadd.f32 %v1880, %v1881
        %v1883 = vsel %vm404, %v1782, 0.0
        %v1884 = vadd.f32 %v1882, %v1883
        %v1885 = vsel %vm404, %v1783, 0.0
        %v1886 = vadd.f32 %v1884, %v1885
        %v1887 = vsel %vm404, %v1784, 0.0
        %v1888 = vadd.f32 %v1886, %v1887
        %v1889 = vrot.slane %v1888, 4
        %v1890 = vadd.f32 %v1888, %v1889
        %v1891 = vrot.slane %v1890, 2
        %v1892 = vadd.f32 %v1890, %v1891
        %v1893 = vrot.slane %v1892, 1
        %v1894 = vadd.f32 %v1892, %v1893
        %v1895 = vsel %vm404, %v1785, 0.0
        %v1896 = vsel %vm404, %v1786, 0.0
        %v1897 = vadd.f32 %v1895, %v1896
        %v1898 = vsel %vm404, %v1787, 0.0
        %v1899 = vadd.f32 %v1897, %v1898
        %v1900 = vsel %vm404, %v1788, 0.0
        %v1901 = vadd.f32 %v1899, %v1900
        %v1902 = vsel %vm404, %v1789, 0.0
        %v1903 = vadd.f32 %v1901, %v1902
        %v1904 = vrot.slane %v1903, 4
        %v1905 = vadd.f32 %v1903, %v1904
        %v1906 = vrot.slane %v1905, 2
        %v1907 = vadd.f32 %v1905, %v1906
        %v1908 = vrot.slane %v1907, 1
        %v1909 = vadd.f32 %v1907, %v1908
        %v1910 = vmul.f32 %v1804, %v1804
        %v1911 = vmul.f32 %v1819, %v1819
        %v1912 = vmul.f32 %v1834, %v1834
        %v1913 = vmul.f32 %v1849, %v1849
        %v1914 = vmul.f32 %v1864, %v1864
        %v1915 = vmul.f32 %v1879, %v1879
        %v1916 = vmul.f32 %v1894, %v1894
        %v1917 = vmul.f32 %v1909, %v1909
        %v1926 = vsel %vm977, %v1911, %v1910
        %v1927 = vsel %vm979, %v1912, %v1926
        %v1928 = vsel %vm981, %v1913, %v1927
        %v1929 = vsel %vm983, %v1914, %v1928
        %v1930 = vsel %vm985, %v1915, %v1929
        %v1931 = vsel %vm987, %v1916, %v1930
        %v1932 = vsel %vm989, %v1917, %v1931
        %v1934 = vsel %vm404, %v1932, 0.0
        %1935 = vadd.xlane.f32.xlu0 %v1934
        %v1936 = vpop.xlane.xlu0 %1935
        %v1937 = vrsqrt.pop %v1936
        %v1938 = vmul.f32 %v1936, %v1937
        %vm1939 = vcmp.eq.f32.partialorder %v1936, inf
        %v1940 = vsel %vm1939, %v1936, %v1938
        %vm1941 = vcmp.eq.f32.partialorder %v1936, 0.0
        %v1942 = vand.u32 %v1936, 2147483648
        %v1943 = vsel %vm1941, %v1942, %v1940
        %v1944 = vadd.f32 %v1943, 1e-08
        %v1945 = vrcp.pop %v1944
        %v1947 = vrot.slane %v1945, 1
        %v1948 = vrot.slane %v1945, 2
        %v1949 = vrot.slane %v1945, 3
        %v1950 = vrot.slane %v1945, 4
        %v1951 = vrot.slane %v1945, 5
        %v1952 = vrot.slane %v1945, 6
        %v1953 = vrot.slane %v1945, 7
        %v1962 = vmul.f32 %v1804, %v1945
        %v1963 = vmul.f32 %v1819, %v1947
        %v1964 = vmul.f32 %v1834, %v1948
        %v1965 = vmul.f32 %v1849, %v1949
        %v1966 = vmul.f32 %v1864, %v1950
        %v1967 = vmul.f32 %v1879, %v1951
        %v1968 = vmul.f32 %v1894, %v1952
        %v1969 = vmul.f32 %v1909, %v1953
        %v1970 = vlaneseq
        %v1971 = vshrl.u32 %v1970, 7
        %v1972 = vsub.s32 0, %v1971
        %v1973 = vrot.slane %v1962, %v1972
        %v1974 = vlaneseq
        %v1975 = vshrl.u32 %v1974, 7
        %v1976 = vsub.s32 0, %v1975
        %v1977 = vrot.slane %v1963, %v1976
        %v1978 = vlaneseq
        %v1979 = vshrl.u32 %v1978, 7
        %v1980 = vsub.s32 0, %v1979
        %v1981 = vrot.slane %v1964, %v1980
        %v1982 = vlaneseq
        %v1983 = vshrl.u32 %v1982, 7
        %v1984 = vsub.s32 0, %v1983
        %v1985 = vrot.slane %v1965, %v1984
        %v1986 = vlaneseq
        %v1987 = vshrl.u32 %v1986, 7
        %v1988 = vsub.s32 0, %v1987
        %v1989 = vrot.slane %v1966, %v1988
        %v1990 = vlaneseq
        %v1991 = vshrl.u32 %v1990, 7
        %v1992 = vsub.s32 0, %v1991
        %v1993 = vrot.slane %v1967, %v1992
        %v1994 = vlaneseq
        %v1995 = vshrl.u32 %v1994, 7
        %v1996 = vsub.s32 0, %v1995
        %v1997 = vrot.slane %v1968, %v1996
        %v1998 = vlaneseq
        %v1999 = vshrl.u32 %v1998, 7
        %v2000 = vsub.s32 0, %v1999
        %v2001 = vrot.slane %v1969, %v2000
        %v2002 = vmul.f32 %v353, %v1973
        %v2003 = vmul.f32 %v354, %v1973
        %v2004 = vmul.f32 %v355, %v1973
        %v2005 = vmul.f32 %v356, %v1973
        %v2006 = vmul.f32 %v357, %v1973
        %v2007 = vmul.f32 %v358, %v1977
        %v2008 = vmul.f32 %v359, %v1977
        %v2009 = vmul.f32 %v360, %v1977
        %v2010 = vmul.f32 %v361, %v1977
        %v2011 = vmul.f32 %v362, %v1977
        %v2012 = vmul.f32 %v363, %v1981
        %v2013 = vmul.f32 %v364, %v1981
        %v2014 = vmul.f32 %v365, %v1981
        %v2015 = vmul.f32 %v366, %v1981
        %v2016 = vmul.f32 %v367, %v1981
        %v2017 = vmul.f32 %v368, %v1985
        %v2018 = vmul.f32 %v369, %v1985
        %v2019 = vmul.f32 %v370, %v1985
        %v2020 = vmul.f32 %v371, %v1985
        %v2021 = vmul.f32 %v372, %v1985
        %v2022 = vmul.f32 %v373, %v1989
        %v2023 = vmul.f32 %v374, %v1989
        %v2024 = vmul.f32 %v375, %v1989
        %v2025 = vmul.f32 %v376, %v1989
        %v2026 = vmul.f32 %v377, %v1989
        %v2027 = vmul.f32 %v378, %v1993
        %v2028 = vmul.f32 %v379, %v1993
        %v2029 = vmul.f32 %v380, %v1993
        %v2030 = vmul.f32 %v381, %v1993
        %v2031 = vmul.f32 %v382, %v1993
        %v2032 = vmul.f32 %v383, %v1997
        %v2033 = vmul.f32 %v384, %v1997
        %v2034 = vmul.f32 %v385, %v1997
        %v2035 = vmul.f32 %v386, %v1997
        %v2036 = vmul.f32 %v387, %v1997
        %v2037 = vmul.f32 %v388, %v2001
        %v2038 = vmul.f32 %v389, %v2001
        %v2039 = vmul.f32 %v390, %v2001
        %v2040 = vmul.f32 %v391, %v2001
        %v2041 = vmul.f32 %v392, %v2001
        %v2042 = vsel %vm404, %v2002, 0.0
        %2043 = vadd.xlane.f32.xlu0 %v2042
        %v2044 = vpop.xlane.xlu0 %2043
        %v2045 = vsel %vm404, %v2003, 0.0
        %2046 = vadd.xlane.f32.xlu0 %v2045
        %v2047 = vpop.xlane.xlu0 %2046
        %v2048 = vsel %vm404, %v2004, 0.0
        %2049 = vadd.xlane.f32.xlu0 %v2048
        %v2050 = vpop.xlane.xlu0 %2049
        %v2051 = vsel %vm404, %v2005, 0.0
        %2052 = vadd.xlane.f32.xlu0 %v2051
        %v2053 = vpop.xlane.xlu0 %2052
        %v2054 = vsel %vm404, %v2006, 0.0
        %2055 = vadd.xlane.f32.xlu0 %v2054
        %v2056 = vpop.xlane.xlu0 %2055
        %v2057 = vsel %vm404, %v2007, 0.0
        %2058 = vadd.xlane.f32.xlu0 %v2057
        %v2059 = vpop.xlane.xlu0 %2058
        %v2060 = vsel %vm404, %v2008, 0.0
        %2061 = vadd.xlane.f32.xlu0 %v2060
        %v2062 = vpop.xlane.xlu0 %2061
        %v2063 = vsel %vm404, %v2009, 0.0
        %2064 = vadd.xlane.f32.xlu0 %v2063
        %v2065 = vpop.xlane.xlu0 %2064
        %v2066 = vsel %vm404, %v2010, 0.0
        %2067 = vadd.xlane.f32.xlu0 %v2066
        %v2068 = vpop.xlane.xlu0 %2067
        %v2069 = vsel %vm404, %v2011, 0.0
        %2070 = vadd.xlane.f32.xlu0 %v2069
        %v2071 = vpop.xlane.xlu0 %2070
        %v2072 = vsel %vm404, %v2012, 0.0
        %2073 = vadd.xlane.f32.xlu0 %v2072
        %v2074 = vpop.xlane.xlu0 %2073
        %v2075 = vsel %vm404, %v2013, 0.0
        %2076 = vadd.xlane.f32.xlu0 %v2075
        %v2077 = vpop.xlane.xlu0 %2076
        %v2078 = vsel %vm404, %v2014, 0.0
        %2079 = vadd.xlane.f32.xlu0 %v2078
        %v2080 = vpop.xlane.xlu0 %2079
        %v2081 = vsel %vm404, %v2015, 0.0
        %2082 = vadd.xlane.f32.xlu0 %v2081
        %v2083 = vpop.xlane.xlu0 %2082
        %v2084 = vsel %vm404, %v2016, 0.0
        %2085 = vadd.xlane.f32.xlu0 %v2084
        %v2086 = vpop.xlane.xlu0 %2085
        %v2087 = vsel %vm404, %v2017, 0.0
        %2088 = vadd.xlane.f32.xlu0 %v2087
        %v2089 = vpop.xlane.xlu0 %2088
        %v2090 = vsel %vm404, %v2018, 0.0
        %2091 = vadd.xlane.f32.xlu0 %v2090
        %v2092 = vpop.xlane.xlu0 %2091
        %v2093 = vsel %vm404, %v2019, 0.0
        %2094 = vadd.xlane.f32.xlu0 %v2093
        %v2095 = vpop.xlane.xlu0 %2094
        %v2096 = vsel %vm404, %v2020, 0.0
        %2097 = vadd.xlane.f32.xlu0 %v2096
        %v2098 = vpop.xlane.xlu0 %2097
        %v2099 = vsel %vm404, %v2021, 0.0
        %2100 = vadd.xlane.f32.xlu0 %v2099
        %v2101 = vpop.xlane.xlu0 %2100
        %v2102 = vsel %vm404, %v2022, 0.0
        %2103 = vadd.xlane.f32.xlu0 %v2102
        %v2104 = vpop.xlane.xlu0 %2103
        %v2105 = vsel %vm404, %v2023, 0.0
        %2106 = vadd.xlane.f32.xlu0 %v2105
        %v2107 = vpop.xlane.xlu0 %2106
        %v2108 = vsel %vm404, %v2024, 0.0
        %2109 = vadd.xlane.f32.xlu0 %v2108
        %v2110 = vpop.xlane.xlu0 %2109
        %v2111 = vsel %vm404, %v2025, 0.0
        %2112 = vadd.xlane.f32.xlu0 %v2111
        %v2113 = vpop.xlane.xlu0 %2112
        %v2114 = vsel %vm404, %v2026, 0.0
        %2115 = vadd.xlane.f32.xlu0 %v2114
        %v2116 = vpop.xlane.xlu0 %2115
        %v2117 = vsel %vm404, %v2027, 0.0
        %2118 = vadd.xlane.f32.xlu0 %v2117
        %v2119 = vpop.xlane.xlu0 %2118
        %v2120 = vsel %vm404, %v2028, 0.0
        %2121 = vadd.xlane.f32.xlu0 %v2120
        %v2122 = vpop.xlane.xlu0 %2121
        %v2123 = vsel %vm404, %v2029, 0.0
        %2124 = vadd.xlane.f32.xlu0 %v2123
        %v2125 = vpop.xlane.xlu0 %2124
        %v2126 = vsel %vm404, %v2030, 0.0
        %2127 = vadd.xlane.f32.xlu0 %v2126
        %v2128 = vpop.xlane.xlu0 %2127
        %v2129 = vsel %vm404, %v2031, 0.0
        %2130 = vadd.xlane.f32.xlu0 %v2129
        %v2131 = vpop.xlane.xlu0 %2130
        %v2132 = vsel %vm404, %v2032, 0.0
        %2133 = vadd.xlane.f32.xlu0 %v2132
        %v2134 = vpop.xlane.xlu0 %2133
        %v2135 = vsel %vm404, %v2033, 0.0
        %2136 = vadd.xlane.f32.xlu0 %v2135
        %v2137 = vpop.xlane.xlu0 %2136
        %v2138 = vsel %vm404, %v2034, 0.0
        %2139 = vadd.xlane.f32.xlu0 %v2138
        %v2140 = vpop.xlane.xlu0 %2139
        %v2141 = vsel %vm404, %v2035, 0.0
        %2142 = vadd.xlane.f32.xlu0 %v2141
        %v2143 = vpop.xlane.xlu0 %2142
        %v2144 = vsel %vm404, %v2036, 0.0
        %2145 = vadd.xlane.f32.xlu0 %v2144
        %v2146 = vpop.xlane.xlu0 %2145
        %v2147 = vsel %vm404, %v2037, 0.0
        %2148 = vadd.xlane.f32.xlu0 %v2147
        %v2149 = vpop.xlane.xlu0 %2148
        %v2150 = vsel %vm404, %v2038, 0.0
        %2151 = vadd.xlane.f32.xlu0 %v2150
        %v2152 = vpop.xlane.xlu0 %2151
        %v2153 = vsel %vm404, %v2039, 0.0
        %2154 = vadd.xlane.f32.xlu0 %v2153
        %v2155 = vpop.xlane.xlu0 %2154
        %v2156 = vsel %vm404, %v2040, 0.0
        %2157 = vadd.xlane.f32.xlu0 %v2156
        %v2158 = vpop.xlane.xlu0 %2157
        %v2159 = vsel %vm404, %v2041, 0.0
        %2160 = vadd.xlane.f32.xlu0 %v2159
        %v2161 = vpop.xlane.xlu0 %2160
        %v2162 = vmul.f32 %v2044, 9.0
        %v2163 = vmul.f32 %v2047, 9.0
        %v2164 = vmul.f32 %v2050, 9.0
        %v2165 = vmul.f32 %v2053, 9.0
        %v2166 = vmul.f32 %v2056, 9.0
        %v2167 = vmul.f32 %v2059, 9.0
        %v2168 = vmul.f32 %v2062, 9.0
        %v2169 = vmul.f32 %v2065, 9.0
        %v2170 = vmul.f32 %v2068, 9.0
        %v2171 = vmul.f32 %v2071, 9.0
        %v2172 = vmul.f32 %v2074, 9.0
        %v2173 = vmul.f32 %v2077, 9.0
        %v2174 = vmul.f32 %v2080, 9.0
        %v2175 = vmul.f32 %v2083, 9.0
        %v2176 = vmul.f32 %v2086, 9.0
        %v2177 = vmul.f32 %v2089, 9.0
        %v2178 = vmul.f32 %v2092, 9.0
        %v2179 = vmul.f32 %v2095, 9.0
        %v2180 = vmul.f32 %v2098, 9.0
        %v2181 = vmul.f32 %v2101, 9.0
        %v2182 = vmul.f32 %v2104, 9.0
        %v2183 = vmul.f32 %v2107, 9.0
        %v2184 = vmul.f32 %v2110, 9.0
        %v2185 = vmul.f32 %v2113, 9.0
        %v2186 = vmul.f32 %v2116, 9.0
        %v2187 = vmul.f32 %v2119, 9.0
        %v2188 = vmul.f32 %v2122, 9.0
        %v2189 = vmul.f32 %v2125, 9.0
        %v2190 = vmul.f32 %v2128, 9.0
        %v2191 = vmul.f32 %v2131, 9.0
        %v2192 = vmul.f32 %v2134, 9.0
        %v2193 = vmul.f32 %v2137, 9.0
        %v2194 = vmul.f32 %v2140, 9.0
        %v2195 = vmul.f32 %v2143, 9.0
        %v2196 = vmul.f32 %v2146, 9.0
        %v2197 = vmul.f32 %v2149, 9.0
        %v2198 = vmul.f32 %v2152, 9.0
        %v2199 = vmul.f32 %v2155, 9.0
        %v2200 = vmul.f32 %v2158, 9.0
        %v2201 = vmul.f32 %v2161, 9.0
        %v2202 = vsel %vm1377, %v2162, -1e+30
        %v2203 = vsel %vm1378, %v2163, -1e+30
        %v2204 = vsel %vm1379, %v2164, -1e+30
        %v2205 = vsel %vm1380, %v2165, -1e+30
        %v2206 = vsel %vm1381, %v2166, -1e+30
        %v2207 = vsel %vm1377, %v2167, -1e+30
        %v2208 = vsel %vm1378, %v2168, -1e+30
        %v2209 = vsel %vm1379, %v2169, -1e+30
        %v2210 = vsel %vm1380, %v2170, -1e+30
        %v2211 = vsel %vm1381, %v2171, -1e+30
        %v2212 = vsel %vm1377, %v2172, -1e+30
        %v2213 = vsel %vm1378, %v2173, -1e+30
        %v2214 = vsel %vm1379, %v2174, -1e+30
        %v2215 = vsel %vm1380, %v2175, -1e+30
        %v2216 = vsel %vm1381, %v2176, -1e+30
        %v2217 = vsel %vm1377, %v2177, -1e+30
        %v2218 = vsel %vm1378, %v2178, -1e+30
        %v2219 = vsel %vm1379, %v2179, -1e+30
        %v2220 = vsel %vm1380, %v2180, -1e+30
        %v2221 = vsel %vm1381, %v2181, -1e+30
        %v2222 = vsel %vm1377, %v2182, -1e+30
        %v2223 = vsel %vm1378, %v2183, -1e+30
        %v2224 = vsel %vm1379, %v2184, -1e+30
        %v2225 = vsel %vm1380, %v2185, -1e+30
        %v2226 = vsel %vm1381, %v2186, -1e+30
        %v2227 = vsel %vm1377, %v2187, -1e+30
        %v2228 = vsel %vm1378, %v2188, -1e+30
        %v2229 = vsel %vm1379, %v2189, -1e+30
        %v2230 = vsel %vm1380, %v2190, -1e+30
        %v2231 = vsel %vm1381, %v2191, -1e+30
        %v2232 = vsel %vm1377, %v2192, -1e+30
        %v2233 = vsel %vm1378, %v2193, -1e+30
        %v2234 = vsel %vm1379, %v2194, -1e+30
        %v2235 = vsel %vm1380, %v2195, -1e+30
        %v2236 = vsel %vm1381, %v2196, -1e+30
        %v2237 = vsel %vm1377, %v2197, -1e+30
        %v2238 = vsel %vm1378, %v2198, -1e+30
        %v2239 = vsel %vm1379, %v2199, -1e+30
        %v2240 = vsel %vm1380, %v2200, -1e+30
        %v2241 = vsel %vm1381, %v2201, -1e+30
        %v2242 = vmax.f32 %v2202, %v2203
        %v2243 = vmax.f32 %v2242, %v2204
        %v2244 = vmax.f32 %v2243, %v2205
        %v2245 = vmax.f32 %v2244, %v2206
        %v2246 = vrot.slane %v2245, 4
        %v2247 = vmax.f32 %v2245, %v2246
        %v2248 = vrot.slane %v2247, 2
        %v2249 = vmax.f32 %v2247, %v2248
        %v2250 = vrot.slane %v2249, 1
        %v2251 = vmax.f32 %v2249, %v2250
        %v2252 = vmax.f32 %v2207, %v2208
        %v2253 = vmax.f32 %v2252, %v2209
        %v2254 = vmax.f32 %v2253, %v2210
        %v2255 = vmax.f32 %v2254, %v2211
        %v2256 = vrot.slane %v2255, 4
        %v2257 = vmax.f32 %v2255, %v2256
        %v2258 = vrot.slane %v2257, 2
        %v2259 = vmax.f32 %v2257, %v2258
        %v2260 = vrot.slane %v2259, 1
        %v2261 = vmax.f32 %v2259, %v2260
        %v2262 = vmax.f32 %v2212, %v2213
        %v2263 = vmax.f32 %v2262, %v2214
        %v2264 = vmax.f32 %v2263, %v2215
        %v2265 = vmax.f32 %v2264, %v2216
        %v2266 = vrot.slane %v2265, 4
        %v2267 = vmax.f32 %v2265, %v2266
        %v2268 = vrot.slane %v2267, 2
        %v2269 = vmax.f32 %v2267, %v2268
        %v2270 = vrot.slane %v2269, 1
        %v2271 = vmax.f32 %v2269, %v2270
        %v2272 = vmax.f32 %v2217, %v2218
        %v2273 = vmax.f32 %v2272, %v2219
        %v2274 = vmax.f32 %v2273, %v2220
        %v2275 = vmax.f32 %v2274, %v2221
        %v2276 = vrot.slane %v2275, 4
        %v2277 = vmax.f32 %v2275, %v2276
        %v2278 = vrot.slane %v2277, 2
        %v2279 = vmax.f32 %v2277, %v2278
        %v2280 = vrot.slane %v2279, 1
        %v2281 = vmax.f32 %v2279, %v2280
        %v2282 = vmax.f32 %v2222, %v2223
        %v2283 = vmax.f32 %v2282, %v2224
        %v2284 = vmax.f32 %v2283, %v2225
        %v2285 = vmax.f32 %v2284, %v2226
        %v2286 = vrot.slane %v2285, 4
        %v2287 = vmax.f32 %v2285, %v2286
        %v2288 = vrot.slane %v2287, 2
        %v2289 = vmax.f32 %v2287, %v2288
        %v2290 = vrot.slane %v2289, 1
        %v2291 = vmax.f32 %v2289, %v2290
        %v2292 = vmax.f32 %v2227, %v2228
        %v2293 = vmax.f32 %v2292, %v2229
        %v2294 = vmax.f32 %v2293, %v2230
        %v2295 = vmax.f32 %v2294, %v2231
        %v2296 = vrot.slane %v2295, 4
        %v2297 = vmax.f32 %v2295, %v2296
        %v2298 = vrot.slane %v2297, 2
        %v2299 = vmax.f32 %v2297, %v2298
        %v2300 = vrot.slane %v2299, 1
        %v2301 = vmax.f32 %v2299, %v2300
        %v2302 = vmax.f32 %v2232, %v2233
        %v2303 = vmax.f32 %v2302, %v2234
        %v2304 = vmax.f32 %v2303, %v2235
        %v2305 = vmax.f32 %v2304, %v2236
        %v2306 = vrot.slane %v2305, 4
        %v2307 = vmax.f32 %v2305, %v2306
        %v2308 = vrot.slane %v2307, 2
        %v2309 = vmax.f32 %v2307, %v2308
        %v2310 = vrot.slane %v2309, 1
        %v2311 = vmax.f32 %v2309, %v2310
        %v2312 = vmax.f32 %v2237, %v2238
        %v2313 = vmax.f32 %v2312, %v2239
        %v2314 = vmax.f32 %v2313, %v2240
        %v2315 = vmax.f32 %v2314, %v2241
        %v2316 = vrot.slane %v2315, 4
        %v2317 = vmax.f32 %v2315, %v2316
        %v2318 = vrot.slane %v2317, 2
        %v2319 = vmax.f32 %v2317, %v2318
        %v2320 = vrot.slane %v2319, 1
        %v2321 = vmax.f32 %v2319, %v2320
        %v2322 = vsub.f32 %v2202, %v2251
        %v2323 = vsub.f32 %v2203, %v2251
        %v2324 = vsub.f32 %v2204, %v2251
        %v2325 = vsub.f32 %v2205, %v2251
        %v2326 = vsub.f32 %v2206, %v2251
        %v2327 = vsub.f32 %v2207, %v2261
        %v2328 = vsub.f32 %v2208, %v2261
        %v2329 = vsub.f32 %v2209, %v2261
        %v2330 = vsub.f32 %v2210, %v2261
        %v2331 = vsub.f32 %v2211, %v2261
        %v2332 = vsub.f32 %v2212, %v2271
        %v2333 = vsub.f32 %v2213, %v2271
        %v2334 = vsub.f32 %v2214, %v2271
        %v2335 = vsub.f32 %v2215, %v2271
        %v2336 = vsub.f32 %v2216, %v2271
        %v2337 = vsub.f32 %v2217, %v2281
        %v2338 = vsub.f32 %v2218, %v2281
        %v2339 = vsub.f32 %v2219, %v2281
        %v2340 = vsub.f32 %v2220, %v2281
        %v2341 = vsub.f32 %v2221, %v2281
        %v2342 = vsub.f32 %v2222, %v2291
        %v2343 = vsub.f32 %v2223, %v2291
        %v2344 = vsub.f32 %v2224, %v2291
        %v2345 = vsub.f32 %v2225, %v2291
        %v2346 = vsub.f32 %v2226, %v2291
        %v2347 = vsub.f32 %v2227, %v2301
        %v2348 = vsub.f32 %v2228, %v2301
        %v2349 = vsub.f32 %v2229, %v2301
        %v2350 = vsub.f32 %v2230, %v2301
        %v2351 = vsub.f32 %v2231, %v2301
        %v2352 = vsub.f32 %v2232, %v2311
        %v2353 = vsub.f32 %v2233, %v2311
        %v2354 = vsub.f32 %v2234, %v2311
        %v2355 = vsub.f32 %v2235, %v2311
        %v2356 = vsub.f32 %v2236, %v2311
        %v2357 = vsub.f32 %v2237, %v2321
        %v2358 = vsub.f32 %v2238, %v2321
        %v2359 = vsub.f32 %v2239, %v2321
        %v2360 = vsub.f32 %v2240, %v2321
        %v2361 = vsub.f32 %v2241, %v2321
        %v2362 = vmul.f32 %v2322, 1.442695
        %v2363 = vpow.pop %v2362
        %v2364 = vmul.f32 %v2323, 1.442695
        %v2365 = vpow.pop %v2364
        %v2366 = vmul.f32 %v2324, 1.442695
        %v2367 = vpow.pop %v2366
        %v2368 = vmul.f32 %v2325, 1.442695
        %v2369 = vpow.pop %v2368
        %v2370 = vmul.f32 %v2326, 1.442695
        %v2371 = vpow.pop %v2370
        %v2372 = vmul.f32 %v2327, 1.442695
        %v2373 = vpow.pop %v2372
        %v2374 = vmul.f32 %v2328, 1.442695
        %v2375 = vpow.pop %v2374
        %v2376 = vmul.f32 %v2329, 1.442695
        %v2377 = vpow.pop %v2376
        %v2378 = vmul.f32 %v2330, 1.442695
        %v2379 = vpow.pop %v2378
        %v2380 = vmul.f32 %v2331, 1.442695
        %v2381 = vpow.pop %v2380
        %v2382 = vmul.f32 %v2332, 1.442695
        %v2383 = vpow.pop %v2382
        %v2384 = vmul.f32 %v2333, 1.442695
        %v2385 = vpow.pop %v2384
        %v2386 = vmul.f32 %v2334, 1.442695
        %v2387 = vpow.pop %v2386
        %v2388 = vmul.f32 %v2335, 1.442695
        %v2389 = vpow.pop %v2388
        %v2390 = vmul.f32 %v2336, 1.442695
        %v2391 = vpow.pop %v2390
        %v2392 = vmul.f32 %v2337, 1.442695
        %v2393 = vpow.pop %v2392
        %v2394 = vmul.f32 %v2338, 1.442695
        %v2395 = vpow.pop %v2394
        %v2396 = vmul.f32 %v2339, 1.442695
        %v2397 = vpow.pop %v2396
        %v2398 = vmul.f32 %v2340, 1.442695
        %v2399 = vpow.pop %v2398
        %v2400 = vmul.f32 %v2341, 1.442695
        %v2401 = vpow.pop %v2400
        %v2402 = vmul.f32 %v2342, 1.442695
        %v2403 = vpow.pop %v2402
        %v2404 = vmul.f32 %v2343, 1.442695
        %v2405 = vpow.pop %v2404
        %v2406 = vmul.f32 %v2344, 1.442695
        %v2407 = vpow.pop %v2406
        %v2408 = vmul.f32 %v2345, 1.442695
        %v2409 = vpow.pop %v2408
        %v2410 = vmul.f32 %v2346, 1.442695
        %v2411 = vpow.pop %v2410
        %v2412 = vmul.f32 %v2347, 1.442695
        %v2413 = vpow.pop %v2412
        %v2414 = vmul.f32 %v2348, 1.442695
        %v2415 = vpow.pop %v2414
        %v2416 = vmul.f32 %v2349, 1.442695
        %v2417 = vpow.pop %v2416
        %v2418 = vmul.f32 %v2350, 1.442695
        %v2419 = vpow.pop %v2418
        %v2420 = vmul.f32 %v2351, 1.442695
        %v2421 = vpow.pop %v2420
        %v2422 = vmul.f32 %v2352, 1.442695
        %v2423 = vpow.pop %v2422
        %v2424 = vmul.f32 %v2353, 1.442695
        %v2425 = vpow.pop %v2424
        %v2426 = vmul.f32 %v2354, 1.442695
        %v2427 = vpow.pop %v2426
        %v2428 = vmul.f32 %v2355, 1.442695
        %v2429 = vpow.pop %v2428
        %v2430 = vmul.f32 %v2356, 1.442695
        %v2431 = vpow.pop %v2430
        %v2432 = vmul.f32 %v2357, 1.442695
        %v2433 = vpow.pop %v2432
        %v2434 = vmul.f32 %v2358, 1.442695
        %v2435 = vpow.pop %v2434
        %v2436 = vmul.f32 %v2359, 1.442695
        %v2437 = vpow.pop %v2436
        %v2438 = vmul.f32 %v2360, 1.442695
        %v2439 = vpow.pop %v2438
        %v2440 = vmul.f32 %v2361, 1.442695
        %v2441 = vpow.pop %v2440
        %v2442 = vadd.f32 %v2363, %v2365
        %v2443 = vadd.f32 %v2442, %v2367
        %v2444 = vadd.f32 %v2443, %v2369
        %v2445 = vadd.f32 %v2444, %v2371
        %v2446 = vrot.slane %v2445, 4
        %v2447 = vadd.f32 %v2445, %v2446
        %v2448 = vrot.slane %v2447, 2
        %v2449 = vadd.f32 %v2447, %v2448
        %v2450 = vrot.slane %v2449, 1
        %v2451 = vadd.f32 %v2449, %v2450
        %v2452 = vadd.f32 %v2373, %v2375
        %v2453 = vadd.f32 %v2452, %v2377
        %v2454 = vadd.f32 %v2453, %v2379
        %v2455 = vadd.f32 %v2454, %v2381
        %v2456 = vrot.slane %v2455, 4
        %v2457 = vadd.f32 %v2455, %v2456
        %v2458 = vrot.slane %v2457, 2
        %v2459 = vadd.f32 %v2457, %v2458
        %v2460 = vrot.slane %v2459, 1
        %v2461 = vadd.f32 %v2459, %v2460
        %v2462 = vadd.f32 %v2383, %v2385
        %v2463 = vadd.f32 %v2462, %v2387
        %v2464 = vadd.f32 %v2463, %v2389
        %v2465 = vadd.f32 %v2464, %v2391
        %v2466 = vrot.slane %v2465, 4
        %v2467 = vadd.f32 %v2465, %v2466
        %v2468 = vrot.slane %v2467, 2
        %v2469 = vadd.f32 %v2467, %v2468
        %v2470 = vrot.slane %v2469, 1
        %v2471 = vadd.f32 %v2469, %v2470
        %v2472 = vadd.f32 %v2393, %v2395
        %v2473 = vadd.f32 %v2472, %v2397
        %v2474 = vadd.f32 %v2473, %v2399
        %v2475 = vadd.f32 %v2474, %v2401
        %v2476 = vrot.slane %v2475, 4
        %v2477 = vadd.f32 %v2475, %v2476
        %v2478 = vrot.slane %v2477, 2
        %v2479 = vadd.f32 %v2477, %v2478
        %v2480 = vrot.slane %v2479, 1
        %v2481 = vadd.f32 %v2479, %v2480
        %v2482 = vadd.f32 %v2403, %v2405
        %v2483 = vadd.f32 %v2482, %v2407
        %v2484 = vadd.f32 %v2483, %v2409
        %v2485 = vadd.f32 %v2484, %v2411
        %v2486 = vrot.slane %v2485, 4
        %v2487 = vadd.f32 %v2485, %v2486
        %v2488 = vrot.slane %v2487, 2
        %v2489 = vadd.f32 %v2487, %v2488
        %v2490 = vrot.slane %v2489, 1
        %v2491 = vadd.f32 %v2489, %v2490
        %v2492 = vadd.f32 %v2413, %v2415
        %v2493 = vadd.f32 %v2492, %v2417
        %v2494 = vadd.f32 %v2493, %v2419
        %v2495 = vadd.f32 %v2494, %v2421
        %v2496 = vrot.slane %v2495, 4
        %v2497 = vadd.f32 %v2495, %v2496
        %v2498 = vrot.slane %v2497, 2
        %v2499 = vadd.f32 %v2497, %v2498
        %v2500 = vrot.slane %v2499, 1
        %v2501 = vadd.f32 %v2499, %v2500
        %v2502 = vadd.f32 %v2423, %v2425
        %v2503 = vadd.f32 %v2502, %v2427
        %v2504 = vadd.f32 %v2503, %v2429
        %v2505 = vadd.f32 %v2504, %v2431
        %v2506 = vrot.slane %v2505, 4
        %v2507 = vadd.f32 %v2505, %v2506
        %v2508 = vrot.slane %v2507, 2
        %v2509 = vadd.f32 %v2507, %v2508
        %v2510 = vrot.slane %v2509, 1
        %v2511 = vadd.f32 %v2509, %v2510
        %v2512 = vadd.f32 %v2433, %v2435
        %v2513 = vadd.f32 %v2512, %v2437
        %v2514 = vadd.f32 %v2513, %v2439
        %v2515 = vadd.f32 %v2514, %v2441
        %v2516 = vrot.slane %v2515, 4
        %v2517 = vadd.f32 %v2515, %v2516
        %v2518 = vrot.slane %v2517, 2
        %v2519 = vadd.f32 %v2517, %v2518
        %v2520 = vrot.slane %v2519, 1
        %v2521 = vadd.f32 %v2519, %v2520
        %v2522 = vrcp.pop %v2451
        %v2523 = vrcp.pop %v2461
        %v2524 = vrcp.pop %v2471
        %v2525 = vrcp.pop %v2481
        %v2526 = vrcp.pop %v2491
        %v2527 = vrcp.pop %v2501
        %v2528 = vrcp.pop %v2511
        %v2529 = vrcp.pop %v2521
        %v2530 = vmul.f32 %v2363, %v2522
        %v2531 = vmul.f32 %v2365, %v2522
        %v2532 = vmul.f32 %v2367, %v2522
        %v2533 = vmul.f32 %v2369, %v2522
        %v2534 = vmul.f32 %v2371, %v2522
        %v2535 = vmul.f32 %v2373, %v2523
        %v2536 = vmul.f32 %v2375, %v2523
        %v2537 = vmul.f32 %v2377, %v2523
        %v2538 = vmul.f32 %v2379, %v2523
        %v2539 = vmul.f32 %v2381, %v2523
        %v2540 = vmul.f32 %v2383, %v2524
        %v2541 = vmul.f32 %v2385, %v2524
        %v2542 = vmul.f32 %v2387, %v2524
        %v2543 = vmul.f32 %v2389, %v2524
        %v2544 = vmul.f32 %v2391, %v2524
        %v2545 = vmul.f32 %v2393, %v2525
        %v2546 = vmul.f32 %v2395, %v2525
        %v2547 = vmul.f32 %v2397, %v2525
        %v2548 = vmul.f32 %v2399, %v2525
        %v2549 = vmul.f32 %v2401, %v2525
        %v2550 = vmul.f32 %v2403, %v2526
        %v2551 = vmul.f32 %v2405, %v2526
        %v2552 = vmul.f32 %v2407, %v2526
        %v2553 = vmul.f32 %v2409, %v2526
        %v2554 = vmul.f32 %v2411, %v2526
        %v2555 = vmul.f32 %v2413, %v2527
        %v2556 = vmul.f32 %v2415, %v2527
        %v2557 = vmul.f32 %v2417, %v2527
        %v2558 = vmul.f32 %v2419, %v2527
        %v2559 = vmul.f32 %v2421, %v2527
        %v2560 = vmul.f32 %v2423, %v2528
        %v2561 = vmul.f32 %v2425, %v2528
        %v2562 = vmul.f32 %v2427, %v2528
        %v2563 = vmul.f32 %v2429, %v2528
        %v2564 = vmul.f32 %v2431, %v2528
        %v2565 = vmul.f32 %v2433, %v2529
        %v2566 = vmul.f32 %v2435, %v2529
        %v2567 = vmul.f32 %v2437, %v2529
        %v2568 = vmul.f32 %v2439, %v2529
        %v2569 = vmul.f32 %v2441, %v2529
        %v2570 = vmul.f32 %v2530, %v2530
        %v2571 = vmul.f32 %v2531, %v2531
        %v2572 = vmul.f32 %v2532, %v2532
        %v2573 = vmul.f32 %v2533, %v2533
        %v2574 = vmul.f32 %v2534, %v2534
        %v2575 = vmul.f32 %v2535, %v2535
        %v2576 = vmul.f32 %v2536, %v2536
        %v2577 = vmul.f32 %v2537, %v2537
        %v2578 = vmul.f32 %v2538, %v2538
        %v2579 = vmul.f32 %v2539, %v2539
        %v2580 = vmul.f32 %v2540, %v2540
        %v2581 = vmul.f32 %v2541, %v2541
        %v2582 = vmul.f32 %v2542, %v2542
        %v2583 = vmul.f32 %v2543, %v2543
        %v2584 = vmul.f32 %v2544, %v2544
        %v2585 = vmul.f32 %v2545, %v2545
        %v2586 = vmul.f32 %v2546, %v2546
        %v2587 = vmul.f32 %v2547, %v2547
        %v2588 = vmul.f32 %v2548, %v2548
        %v2589 = vmul.f32 %v2549, %v2549
        %v2590 = vmul.f32 %v2550, %v2550
        %v2591 = vmul.f32 %v2551, %v2551
        %v2592 = vmul.f32 %v2552, %v2552
        %v2593 = vmul.f32 %v2553, %v2553
        %v2594 = vmul.f32 %v2554, %v2554
        %v2595 = vmul.f32 %v2555, %v2555
        %v2596 = vmul.f32 %v2556, %v2556
        %v2597 = vmul.f32 %v2557, %v2557
        %v2598 = vmul.f32 %v2558, %v2558
        %v2599 = vmul.f32 %v2559, %v2559
        %v2600 = vmul.f32 %v2560, %v2560
        %v2601 = vmul.f32 %v2561, %v2561
        %v2602 = vmul.f32 %v2562, %v2562
        %v2603 = vmul.f32 %v2563, %v2563
        %v2604 = vmul.f32 %v2564, %v2564
        %v2605 = vmul.f32 %v2565, %v2565
        %v2606 = vmul.f32 %v2566, %v2566
        %v2607 = vmul.f32 %v2567, %v2567
        %v2608 = vmul.f32 %v2568, %v2568
        %v2609 = vmul.f32 %v2569, %v2569
        %v2610 = vadd.f32 %v2570, %v2571
        %v2611 = vadd.f32 %v2610, %v2572
        %v2612 = vadd.f32 %v2611, %v2573
        %v2613 = vadd.f32 %v2612, %v2574
        %v2614 = vrot.slane %v2613, 4
        %v2615 = vadd.f32 %v2613, %v2614
        %v2616 = vrot.slane %v2615, 2
        %v2617 = vadd.f32 %v2615, %v2616
        %v2618 = vrot.slane %v2617, 1
        %v2619 = vadd.f32 %v2617, %v2618
        %v2620 = vadd.f32 %v2575, %v2576
        %v2621 = vadd.f32 %v2620, %v2577
        %v2622 = vadd.f32 %v2621, %v2578
        %v2623 = vadd.f32 %v2622, %v2579
        %v2624 = vrot.slane %v2623, 4
        %v2625 = vadd.f32 %v2623, %v2624
        %v2626 = vrot.slane %v2625, 2
        %v2627 = vadd.f32 %v2625, %v2626
        %v2628 = vrot.slane %v2627, 1
        %v2629 = vadd.f32 %v2627, %v2628
        %v2630 = vadd.f32 %v2580, %v2581
        %v2631 = vadd.f32 %v2630, %v2582
        %v2632 = vadd.f32 %v2631, %v2583
        %v2633 = vadd.f32 %v2632, %v2584
        %v2634 = vrot.slane %v2633, 4
        %v2635 = vadd.f32 %v2633, %v2634
        %v2636 = vrot.slane %v2635, 2
        %v2637 = vadd.f32 %v2635, %v2636
        %v2638 = vrot.slane %v2637, 1
        %v2639 = vadd.f32 %v2637, %v2638
        %v2640 = vadd.f32 %v2585, %v2586
        %v2641 = vadd.f32 %v2640, %v2587
        %v2642 = vadd.f32 %v2641, %v2588
        %v2643 = vadd.f32 %v2642, %v2589
        %v2644 = vrot.slane %v2643, 4
        %v2645 = vadd.f32 %v2643, %v2644
        %v2646 = vrot.slane %v2645, 2
        %v2647 = vadd.f32 %v2645, %v2646
        %v2648 = vrot.slane %v2647, 1
        %v2649 = vadd.f32 %v2647, %v2648
        %v2650 = vadd.f32 %v2590, %v2591
        %v2651 = vadd.f32 %v2650, %v2592
        %v2652 = vadd.f32 %v2651, %v2593
        %v2653 = vadd.f32 %v2652, %v2594
        %v2654 = vrot.slane %v2653, 4
        %v2655 = vadd.f32 %v2653, %v2654
        %v2656 = vrot.slane %v2655, 2
        %v2657 = vadd.f32 %v2655, %v2656
        %v2658 = vrot.slane %v2657, 1
        %v2659 = vadd.f32 %v2657, %v2658
        %v2660 = vadd.f32 %v2595, %v2596
        %v2661 = vadd.f32 %v2660, %v2597
        %v2662 = vadd.f32 %v2661, %v2598
        %v2663 = vadd.f32 %v2662, %v2599
        %v2664 = vrot.slane %v2663, 4
        %v2665 = vadd.f32 %v2663, %v2664
        %v2666 = vrot.slane %v2665, 2
        %v2667 = vadd.f32 %v2665, %v2666
        %v2668 = vrot.slane %v2667, 1
        %v2669 = vadd.f32 %v2667, %v2668
        %v2670 = vadd.f32 %v2600, %v2601
        %v2671 = vadd.f32 %v2670, %v2602
        %v2672 = vadd.f32 %v2671, %v2603
        %v2673 = vadd.f32 %v2672, %v2604
        %v2674 = vrot.slane %v2673, 4
        %v2675 = vadd.f32 %v2673, %v2674
        %v2676 = vrot.slane %v2675, 2
        %v2677 = vadd.f32 %v2675, %v2676
        %v2678 = vrot.slane %v2677, 1
        %v2679 = vadd.f32 %v2677, %v2678
        %v2680 = vadd.f32 %v2605, %v2606
        %v2681 = vadd.f32 %v2680, %v2607
        %v2682 = vadd.f32 %v2681, %v2608
        %v2683 = vadd.f32 %v2682, %v2609
        %v2684 = vrot.slane %v2683, 4
        %v2685 = vadd.f32 %v2683, %v2684
        %v2686 = vrot.slane %v2685, 2
        %v2687 = vadd.f32 %v2685, %v2686
        %v2688 = vrot.slane %v2687, 1
        %v2689 = vadd.f32 %v2687, %v2688
        %v2690 = vrsqrt.pop %v2619
        %v2691 = vmul.f32 %v2619, %v2690
        %vm2692 = vcmp.eq.f32.partialorder %v2619, inf
        %v2693 = vsel %vm2692, %v2619, %v2691
        %vm2694 = vcmp.eq.f32.partialorder %v2619, 0.0
        %v2695 = vand.u32 %v2619, 2147483648
        %v2696 = vsel %vm2694, %v2695, %v2693
        %v2697 = vrsqrt.pop %v2629
        %v2698 = vmul.f32 %v2629, %v2697
        %vm2699 = vcmp.eq.f32.partialorder %v2629, inf
        %v2700 = vsel %vm2699, %v2629, %v2698
        %vm2701 = vcmp.eq.f32.partialorder %v2629, 0.0
        %v2702 = vand.u32 %v2629, 2147483648
        %v2703 = vsel %vm2701, %v2702, %v2700
        %v2704 = vrsqrt.pop %v2639
        %v2705 = vmul.f32 %v2639, %v2704
        %vm2706 = vcmp.eq.f32.partialorder %v2639, inf
        %v2707 = vsel %vm2706, %v2639, %v2705
        %vm2708 = vcmp.eq.f32.partialorder %v2639, 0.0
        %v2709 = vand.u32 %v2639, 2147483648
        %v2710 = vsel %vm2708, %v2709, %v2707
        %v2711 = vrsqrt.pop %v2649
        %v2712 = vmul.f32 %v2649, %v2711
        %vm2713 = vcmp.eq.f32.partialorder %v2649, inf
        %v2714 = vsel %vm2713, %v2649, %v2712
        %vm2715 = vcmp.eq.f32.partialorder %v2649, 0.0
        %v2716 = vand.u32 %v2649, 2147483648
        %v2717 = vsel %vm2715, %v2716, %v2714
        %v2718 = vrsqrt.pop %v2659
        %v2719 = vmul.f32 %v2659, %v2718
        %vm2720 = vcmp.eq.f32.partialorder %v2659, inf
        %v2721 = vsel %vm2720, %v2659, %v2719
        %vm2722 = vcmp.eq.f32.partialorder %v2659, 0.0
        %v2723 = vand.u32 %v2659, 2147483648
        %v2724 = vsel %vm2722, %v2723, %v2721
        %v2725 = vrsqrt.pop %v2669
        %v2726 = vmul.f32 %v2669, %v2725
        %vm2727 = vcmp.eq.f32.partialorder %v2669, inf
        %v2728 = vsel %vm2727, %v2669, %v2726
        %vm2729 = vcmp.eq.f32.partialorder %v2669, 0.0
        %v2730 = vand.u32 %v2669, 2147483648
        %v2731 = vsel %vm2729, %v2730, %v2728
        %v2732 = vrsqrt.pop %v2679
        %v2733 = vmul.f32 %v2679, %v2732
        %vm2734 = vcmp.eq.f32.partialorder %v2679, inf
        %v2735 = vsel %vm2734, %v2679, %v2733
        %vm2736 = vcmp.eq.f32.partialorder %v2679, 0.0
        %v2737 = vand.u32 %v2679, 2147483648
        %v2738 = vsel %vm2736, %v2737, %v2735
        %v2739 = vrsqrt.pop %v2689
        %v2740 = vmul.f32 %v2689, %v2739
        %vm2741 = vcmp.eq.f32.partialorder %v2689, inf
        %v2742 = vsel %vm2741, %v2689, %v2740
        %vm2743 = vcmp.eq.f32.partialorder %v2689, 0.0
        %v2744 = vand.u32 %v2689, 2147483648
        %v2745 = vsel %vm2743, %v2744, %v2742
        %v2746 = vadd.f32 %v2696, 1e-08
        %v2747 = vadd.f32 %v2703, 1e-08
        %v2748 = vadd.f32 %v2710, 1e-08
        %v2749 = vadd.f32 %v2717, 1e-08
        %v2750 = vadd.f32 %v2724, 1e-08
        %v2751 = vadd.f32 %v2731, 1e-08
        %v2752 = vadd.f32 %v2738, 1e-08
        %v2753 = vadd.f32 %v2745, 1e-08
        %v2754 = vrcp.pop %v2746
        %v2755 = vrcp.pop %v2747
        %v2756 = vrcp.pop %v2748
        %v2757 = vrcp.pop %v2749
        %v2758 = vrcp.pop %v2750
        %v2759 = vrcp.pop %v2751
        %v2760 = vrcp.pop %v2752
        %v2761 = vrcp.pop %v2753
        %v2762 = vmul.f32 %v2530, %v2754
        %v2763 = vmul.f32 %v2531, %v2754
        %v2764 = vmul.f32 %v2532, %v2754
        %v2765 = vmul.f32 %v2533, %v2754
        %v2766 = vmul.f32 %v2534, %v2754
        %v2767 = vmul.f32 %v2535, %v2755
        %v2768 = vmul.f32 %v2536, %v2755
        %v2769 = vmul.f32 %v2537, %v2755
        %v2770 = vmul.f32 %v2538, %v2755
        %v2771 = vmul.f32 %v2539, %v2755
        %v2772 = vmul.f32 %v2540, %v2756
        %v2773 = vmul.f32 %v2541, %v2756
        %v2774 = vmul.f32 %v2542, %v2756
        %v2775 = vmul.f32 %v2543, %v2756
        %v2776 = vmul.f32 %v2544, %v2756
        %v2777 = vmul.f32 %v2545, %v2757
        %v2778 = vmul.f32 %v2546, %v2757
        %v2779 = vmul.f32 %v2547, %v2757
        %v2780 = vmul.f32 %v2548, %v2757
        %v2781 = vmul.f32 %v2549, %v2757
        %v2782 = vmul.f32 %v2550, %v2758
        %v2783 = vmul.f32 %v2551, %v2758
        %v2784 = vmul.f32 %v2552, %v2758
        %v2785 = vmul.f32 %v2553, %v2758
        %v2786 = vmul.f32 %v2554, %v2758
        %v2787 = vmul.f32 %v2555, %v2759
        %v2788 = vmul.f32 %v2556, %v2759
        %v2789 = vmul.f32 %v2557, %v2759
        %v2790 = vmul.f32 %v2558, %v2759
        %v2791 = vmul.f32 %v2559, %v2759
        %v2792 = vmul.f32 %v2560, %v2760
        %v2793 = vmul.f32 %v2561, %v2760
        %v2794 = vmul.f32 %v2562, %v2760
        %v2795 = vmul.f32 %v2563, %v2760
        %v2796 = vmul.f32 %v2564, %v2760
        %v2797 = vmul.f32 %v2565, %v2761
        %v2798 = vmul.f32 %v2566, %v2761
        %v2799 = vmul.f32 %v2567, %v2761
        %v2800 = vmul.f32 %v2568, %v2761
        %v2801 = vmul.f32 %v2569, %v2761
        %v2802 = vmul.f32 %v2762, %v1973
        %v2803 = vmul.f32 %v2763, %v1973
        %v2804 = vmul.f32 %v2764, %v1973
        %v2805 = vmul.f32 %v2765, %v1973
        %v2806 = vmul.f32 %v2766, %v1973
        %v2807 = vmul.f32 %v2767, %v1977
        %v2808 = vmul.f32 %v2768, %v1977
        %v2809 = vmul.f32 %v2769, %v1977
        %v2810 = vmul.f32 %v2770, %v1977
        %v2811 = vmul.f32 %v2771, %v1977
        %v2812 = vmul.f32 %v2772, %v1981
        %v2813 = vmul.f32 %v2773, %v1981
        %v2814 = vmul.f32 %v2774, %v1981
        %v2815 = vmul.f32 %v2775, %v1981
        %v2816 = vmul.f32 %v2776, %v1981
        %v2817 = vmul.f32 %v2777, %v1985
        %v2818 = vmul.f32 %v2778, %v1985
        %v2819 = vmul.f32 %v2779, %v1985
        %v2820 = vmul.f32 %v2780, %v1985
        %v2821 = vmul.f32 %v2781, %v1985
        %v2822 = vmul.f32 %v2782, %v1989
        %v2823 = vmul.f32 %v2783, %v1989
        %v2824 = vmul.f32 %v2784, %v1989
        %v2825 = vmul.f32 %v2785, %v1989
        %v2826 = vmul.f32 %v2786, %v1989
        %v2827 = vmul.f32 %v2787, %v1993
        %v2828 = vmul.f32 %v2788, %v1993
        %v2829 = vmul.f32 %v2789, %v1993
        %v2830 = vmul.f32 %v2790, %v1993
        %v2831 = vmul.f32 %v2791, %v1993
        %v2832 = vmul.f32 %v2792, %v1997
        %v2833 = vmul.f32 %v2793, %v1997
        %v2834 = vmul.f32 %v2794, %v1997
        %v2835 = vmul.f32 %v2795, %v1997
        %v2836 = vmul.f32 %v2796, %v1997
        %v2837 = vmul.f32 %v2797, %v2001
        %v2838 = vmul.f32 %v2798, %v2001
        %v2839 = vmul.f32 %v2799, %v2001
        %v2840 = vmul.f32 %v2800, %v2001
        %v2841 = vmul.f32 %v2801, %v2001
        %v2842 = vadd.f32 %v353, %v2802
        %v2843 = vadd.f32 %v354, %v2803
        %v2844 = vadd.f32 %v355, %v2804
        %v2845 = vadd.f32 %v356, %v2805
        %v2846 = vadd.f32 %v357, %v2806
        %v2847 = vadd.f32 %v358, %v2807
        %v2848 = vadd.f32 %v359, %v2808
        %v2849 = vadd.f32 %v360, %v2809
        %v2850 = vadd.f32 %v361, %v2810
        %v2851 = vadd.f32 %v362, %v2811
        %v2852 = vadd.f32 %v363, %v2812
        %v2853 = vadd.f32 %v364, %v2813
        %v2854 = vadd.f32 %v365, %v2814
        %v2855 = vadd.f32 %v366, %v2815
        %v2856 = vadd.f32 %v367, %v2816
        %v2857 = vadd.f32 %v368, %v2817
        %v2858 = vadd.f32 %v369, %v2818
        %v2859 = vadd.f32 %v370, %v2819
        %v2860 = vadd.f32 %v371, %v2820
        %v2861 = vadd.f32 %v372, %v2821
        %v2862 = vadd.f32 %v373, %v2822
        %v2863 = vadd.f32 %v374, %v2823
        %v2864 = vadd.f32 %v375, %v2824
        %v2865 = vadd.f32 %v376, %v2825
        %v2866 = vadd.f32 %v377, %v2826
        %v2867 = vadd.f32 %v378, %v2827
        %v2868 = vadd.f32 %v379, %v2828
        %v2869 = vadd.f32 %v380, %v2829
        %v2870 = vadd.f32 %v381, %v2830
        %v2871 = vadd.f32 %v382, %v2831
        %v2872 = vadd.f32 %v383, %v2832
        %v2873 = vadd.f32 %v384, %v2833
        %v2874 = vadd.f32 %v385, %v2834
        %v2875 = vadd.f32 %v386, %v2835
        %v2876 = vadd.f32 %v387, %v2836
        %v2877 = vadd.f32 %v388, %v2837
        %v2878 = vadd.f32 %v389, %v2838
        %v2879 = vadd.f32 %v390, %v2839
        %v2880 = vadd.f32 %v391, %v2840
        %v2881 = vadd.f32 %v392, %v2841
        %v2882 = vld [vmem:[%s352] sm:$0xff]
        %v2883 = vcombine.high %v2882, %v2882
        %v2885 = vunpack.c.l.s4 1966171168
        %v2886 = vunpack.c.0.s8 %v2885
        %v2887 = vlaneseq
        %v2888 = vshrl.u32 %v2887, 7
        %v2889 = vsub.s32 %v2886, %v2888
        %v2890 = vrot.slane %v2882, %v2889
        %v2892 = vunpack.c.l.s4 1966171168
        %v2893 = vunpack.c.0.s8 %v2892
        %v2894 = vlaneseq
        %v2895 = vshrl.u32 %v2894, 7
        %v2896 = vsub.s32 %v2893, %v2895
        %v2897 = vrot.slane %v2883, %v2896
        %v2898 = vcombine.high %v2890, %v2890
        %v2899 = vcombine.high %v2897, %v2897
        %v2901 = vunpack.c.l.s4 1966171168
        %v2902 = vunpack.c.0.s8 %v2901
        %v2903 = vlaneseq
        %v2904 = vshrl.u32 %v2903, 7
        %v2905 = vsub.s32 %v2902, %v2904
        %v2906 = vrot.slane %v2890, %v2905
        %v2908 = vunpack.c.l.s4 1966171168
        %v2909 = vunpack.c.0.s8 %v2908
        %v2910 = vlaneseq
        %v2911 = vshrl.u32 %v2910, 7
        %v2912 = vsub.s32 %v2909, %v2911
        %v2913 = vrot.slane %v2897, %v2912
        %v2915 = vunpack.c.l.s4 1966171168
        %v2916 = vunpack.c.0.s8 %v2915
        %v2917 = vlaneseq
        %v2918 = vshrl.u32 %v2917, 7
        %v2919 = vsub.s32 %v2916, %v2918
        %v2920 = vrot.slane %v2898, %v2919
        %v2922 = vunpack.c.l.s4 1966171168
        %v2923 = vunpack.c.0.s8 %v2922
        %v2924 = vlaneseq
        %v2925 = vshrl.u32 %v2924, 7
        %v2926 = vsub.s32 %v2923, %v2925
        %v2927 = vrot.slane %v2899, %v2926
        %v2928 = vcombine.high %v2906, %v2906
        %v2929 = vcombine.high %v2913, %v2913
        %v2930 = vcombine.high %v2920, %v2920
        %v2931 = vcombine.high %v2927, %v2927
        %v2932 = vlaneseq
        %v2933 = vshrl.u32 %v2932, 7
        %v2934 = vsub.s32 0, %v2933
        %v2935 = vrot.slane %v2906, %v2934
        %v2936 = vlaneseq
        %v2937 = vshrl.u32 %v2936, 7
        %v2938 = vsub.s32 0, %v2937
        %v2939 = vrot.slane %v2920, %v2938
        %v2940 = vlaneseq
        %v2941 = vshrl.u32 %v2940, 7
        %v2942 = vsub.s32 0, %v2941
        %v2943 = vrot.slane %v2928, %v2942
        %v2944 = vlaneseq
        %v2945 = vshrl.u32 %v2944, 7
        %v2946 = vsub.s32 0, %v2945
        %v2947 = vrot.slane %v2930, %v2946
        %v2948 = vlaneseq
        %v2949 = vshrl.u32 %v2948, 7
        %v2950 = vsub.s32 0, %v2949
        %v2951 = vrot.slane %v2913, %v2950
        %v2952 = vlaneseq
        %v2953 = vshrl.u32 %v2952, 7
        %v2954 = vsub.s32 0, %v2953
        %v2955 = vrot.slane %v2927, %v2954
        %v2956 = vlaneseq
        %v2957 = vshrl.u32 %v2956, 7
        %v2958 = vsub.s32 0, %v2957
        %v2959 = vrot.slane %v2929, %v2958
        %v2960 = vlaneseq
        %v2961 = vshrl.u32 %v2960, 7
        %v2962 = vsub.s32 0, %v2961
        %v2963 = vrot.slane %v2931, %v2962
        %vm2964 = vcmp.lt.s32.totalorder %v1065, %v2935
        %vm2965 = vcmp.lt.s32.totalorder %v1066, %v2935
        %vm2966 = vcmp.lt.s32.totalorder %v1067, %v2935
        %vm2967 = vcmp.lt.s32.totalorder %v1068, %v2935
        %vm2968 = vcmp.lt.s32.totalorder %v1069, %v2935
        %vm2969 = vcmp.lt.s32.totalorder %v1065, %v2939
        %vm2970 = vcmp.lt.s32.totalorder %v1066, %v2939
        %vm2971 = vcmp.lt.s32.totalorder %v1067, %v2939
        %vm2972 = vcmp.lt.s32.totalorder %v1068, %v2939
        %vm2973 = vcmp.lt.s32.totalorder %v1069, %v2939
        %vm2974 = vcmp.lt.s32.totalorder %v1065, %v2943
        %vm2975 = vcmp.lt.s32.totalorder %v1066, %v2943
        %vm2976 = vcmp.lt.s32.totalorder %v1067, %v2943
        %vm2977 = vcmp.lt.s32.totalorder %v1068, %v2943
        %vm2978 = vcmp.lt.s32.totalorder %v1069, %v2943
        %vm2979 = vcmp.lt.s32.totalorder %v1065, %v2947
        %vm2980 = vcmp.lt.s32.totalorder %v1066, %v2947
        %vm2981 = vcmp.lt.s32.totalorder %v1067, %v2947
        %vm2982 = vcmp.lt.s32.totalorder %v1068, %v2947
        %vm2983 = vcmp.lt.s32.totalorder %v1069, %v2947
        %vm2984 = vcmp.lt.s32.totalorder %v1065, %v2951
        %vm2985 = vcmp.lt.s32.totalorder %v1066, %v2951
        %vm2986 = vcmp.lt.s32.totalorder %v1067, %v2951
        %vm2987 = vcmp.lt.s32.totalorder %v1068, %v2951
        %vm2988 = vcmp.lt.s32.totalorder %v1069, %v2951
        %vm2989 = vcmp.lt.s32.totalorder %v1065, %v2955
        %vm2990 = vcmp.lt.s32.totalorder %v1066, %v2955
        %vm2991 = vcmp.lt.s32.totalorder %v1067, %v2955
        %vm2992 = vcmp.lt.s32.totalorder %v1068, %v2955
        %vm2993 = vcmp.lt.s32.totalorder %v1069, %v2955
        %vm2994 = vcmp.lt.s32.totalorder %v1065, %v2959
        %vm2995 = vcmp.lt.s32.totalorder %v1066, %v2959
        %vm2996 = vcmp.lt.s32.totalorder %v1067, %v2959
        %vm2997 = vcmp.lt.s32.totalorder %v1068, %v2959
        %vm2998 = vcmp.lt.s32.totalorder %v1069, %v2959
        %vm2999 = vcmp.lt.s32.totalorder %v1065, %v2963
        %vm3000 = vcmp.lt.s32.totalorder %v1066, %v2963
        %vm3001 = vcmp.lt.s32.totalorder %v1067, %v2963
        %vm3002 = vcmp.lt.s32.totalorder %v1068, %v2963
        %vm3003 = vcmp.lt.s32.totalorder %v1069, %v2963
        %v3004 = vsel %vm2964, 1, 0
        %v3005 = vsel %vm2965, 1, 0
        %v3006 = vsel %vm2966, 1, 0
        %v3007 = vsel %vm2967, 1, 0
        %v3008 = vsel %vm2968, 1, 0
        %v3009 = vsel %vm2969, 1, 0
        %v3010 = vsel %vm2970, 1, 0
        %v3011 = vsel %vm2971, 1, 0
        %v3012 = vsel %vm2972, 1, 0
        %v3013 = vsel %vm2973, 1, 0
        %v3014 = vsel %vm2974, 1, 0
        %v3015 = vsel %vm2975, 1, 0
        %v3016 = vsel %vm2976, 1, 0
        %v3017 = vsel %vm2977, 1, 0
        %v3018 = vsel %vm2978, 1, 0
        %v3019 = vsel %vm2979, 1, 0
        %v3020 = vsel %vm2980, 1, 0
        %v3021 = vsel %vm2981, 1, 0
        %v3022 = vsel %vm2982, 1, 0
        %v3023 = vsel %vm2983, 1, 0
        %v3024 = vsel %vm2984, 1, 0
        %v3025 = vsel %vm2985, 1, 0
        %v3026 = vsel %vm2986, 1, 0
        %v3027 = vsel %vm2987, 1, 0
        %v3028 = vsel %vm2988, 1, 0
        %v3029 = vsel %vm2989, 1, 0
        %v3030 = vsel %vm2990, 1, 0
        %v3031 = vsel %vm2991, 1, 0
        %v3032 = vsel %vm2992, 1, 0
        %v3033 = vsel %vm2993, 1, 0
        %v3034 = vsel %vm2994, 1, 0
        %v3035 = vsel %vm2995, 1, 0
        %v3036 = vsel %vm2996, 1, 0
        %v3037 = vsel %vm2997, 1, 0
        %v3038 = vsel %vm2998, 1, 0
        %v3039 = vsel %vm2999, 1, 0
        %v3040 = vsel %vm3000, 1, 0
        %v3041 = vsel %vm3001, 1, 0
        %v3042 = vsel %vm3002, 1, 0
        %v3043 = vsel %vm3003, 1, 0
        %v3044 = vcvt.s32.f32 %v3004
        %v3045 = vcvt.s32.f32 %v3005
        %v3046 = vcvt.s32.f32 %v3006
        %v3047 = vcvt.s32.f32 %v3007
        %v3048 = vcvt.s32.f32 %v3008
        %v3049 = vcvt.s32.f32 %v3009
        %v3050 = vcvt.s32.f32 %v3010
        %v3051 = vcvt.s32.f32 %v3011
        %v3052 = vcvt.s32.f32 %v3012
        %v3053 = vcvt.s32.f32 %v3013
        %v3054 = vcvt.s32.f32 %v3014
        %v3055 = vcvt.s32.f32 %v3015
        %v3056 = vcvt.s32.f32 %v3016
        %v3057 = vcvt.s32.f32 %v3017
        %v3058 = vcvt.s32.f32 %v3018
        %v3059 = vcvt.s32.f32 %v3019
        %v3060 = vcvt.s32.f32 %v3020
        %v3061 = vcvt.s32.f32 %v3021
        %v3062 = vcvt.s32.f32 %v3022
        %v3063 = vcvt.s32.f32 %v3023
        %v3064 = vcvt.s32.f32 %v3024
        %v3065 = vcvt.s32.f32 %v3025
        %v3066 = vcvt.s32.f32 %v3026
        %v3067 = vcvt.s32.f32 %v3027
        %v3068 = vcvt.s32.f32 %v3028
        %v3069 = vcvt.s32.f32 %v3029
        %v3070 = vcvt.s32.f32 %v3030
        %v3071 = vcvt.s32.f32 %v3031
        %v3072 = vcvt.s32.f32 %v3032
        %v3073 = vcvt.s32.f32 %v3033
        %v3074 = vcvt.s32.f32 %v3034
        %v3075 = vcvt.s32.f32 %v3035
        %v3076 = vcvt.s32.f32 %v3036
        %v3077 = vcvt.s32.f32 %v3037
        %v3078 = vcvt.s32.f32 %v3038
        %v3079 = vcvt.s32.f32 %v3039
        %v3080 = vcvt.s32.f32 %v3040
        %v3081 = vcvt.s32.f32 %v3041
        %v3082 = vcvt.s32.f32 %v3042
        %v3083 = vcvt.s32.f32 %v3043
        %vm3084 = vcmp.gt.s32.totalorder %v2882, 1
        %v3085 = vsel %vm3084, %v2882, 1
        %v3086 = vcvt.s32.f32 %v3085
        %3088 = vset.pattern.permute.xlu0 0
        %3089 = vperm.xlu0 %3088, %v3044
        %v3090 = vpop.permute.xlu0 %3089
        %3093 = vset.pattern.permute.xlu0 0
        %3094 = vperm.xlu0 %3093, %v3045
        %v3095 = vpop.permute.xlu0 %3094
        %3098 = vset.pattern.permute.xlu0 0
        %3099 = vperm.xlu0 %3098, %v3046
        %v3100 = vpop.permute.xlu0 %3099
        %3103 = vset.pattern.permute.xlu0 0
        %3104 = vperm.xlu0 %3103, %v3047
        %v3105 = vpop.permute.xlu0 %3104
        %3108 = vset.pattern.permute.xlu0 0
        %3109 = vperm.xlu0 %3108, %v3048
        %v3110 = vpop.permute.xlu0 %3109
        %3113 = vset.pattern.permute.xlu0 0
        %3114 = vperm.xlu0 %3113, %v3049
        %v3115 = vpop.permute.xlu0 %3114
        %3118 = vset.pattern.permute.xlu0 0
        %3119 = vperm.xlu0 %3118, %v3050
        %v3120 = vpop.permute.xlu0 %3119
        %3123 = vset.pattern.permute.xlu0 0
        %3124 = vperm.xlu0 %3123, %v3051
        %v3125 = vpop.permute.xlu0 %3124
        %3128 = vset.pattern.permute.xlu0 0
        %3129 = vperm.xlu0 %3128, %v3052
        %v3130 = vpop.permute.xlu0 %3129
        %3133 = vset.pattern.permute.xlu0 0
        %3134 = vperm.xlu0 %3133, %v3053
        %v3135 = vpop.permute.xlu0 %3134
        %3138 = vset.pattern.permute.xlu0 0
        %3139 = vperm.xlu0 %3138, %v3054
        %v3140 = vpop.permute.xlu0 %3139
        %3143 = vset.pattern.permute.xlu0 0
        %3144 = vperm.xlu0 %3143, %v3055
        %v3145 = vpop.permute.xlu0 %3144
        %3148 = vset.pattern.permute.xlu0 0
        %3149 = vperm.xlu0 %3148, %v3056
        %v3150 = vpop.permute.xlu0 %3149
        %3153 = vset.pattern.permute.xlu0 0
        %3154 = vperm.xlu0 %3153, %v3057
        %v3155 = vpop.permute.xlu0 %3154
        %3158 = vset.pattern.permute.xlu0 0
        %3159 = vperm.xlu0 %3158, %v3058
        %v3160 = vpop.permute.xlu0 %3159
        %3163 = vset.pattern.permute.xlu0 0
        %3164 = vperm.xlu0 %3163, %v3059
        %v3165 = vpop.permute.xlu0 %3164
        %3168 = vset.pattern.permute.xlu0 0
        %3169 = vperm.xlu0 %3168, %v3060
        %v3170 = vpop.permute.xlu0 %3169
        %3173 = vset.pattern.permute.xlu0 0
        %3174 = vperm.xlu0 %3173, %v3061
        %v3175 = vpop.permute.xlu0 %3174
        %3178 = vset.pattern.permute.xlu0 0
        %3179 = vperm.xlu0 %3178, %v3062
        %v3180 = vpop.permute.xlu0 %3179
        %3183 = vset.pattern.permute.xlu0 0
        %3184 = vperm.xlu0 %3183, %v3063
        %v3185 = vpop.permute.xlu0 %3184
        %3188 = vset.pattern.permute.xlu0 0
        %3189 = vperm.xlu0 %3188, %v3064
        %v3190 = vpop.permute.xlu0 %3189
        %3193 = vset.pattern.permute.xlu0 0
        %3194 = vperm.xlu0 %3193, %v3065
        %v3195 = vpop.permute.xlu0 %3194
        %3198 = vset.pattern.permute.xlu0 0
        %3199 = vperm.xlu0 %3198, %v3066
        %v3200 = vpop.permute.xlu0 %3199
        %3203 = vset.pattern.permute.xlu0 0
        %3204 = vperm.xlu0 %3203, %v3067
        %v3205 = vpop.permute.xlu0 %3204
        %3208 = vset.pattern.permute.xlu0 0
        %3209 = vperm.xlu0 %3208, %v3068
        %v3210 = vpop.permute.xlu0 %3209
        %3213 = vset.pattern.permute.xlu0 0
        %3214 = vperm.xlu0 %3213, %v3069
        %v3215 = vpop.permute.xlu0 %3214
        %3218 = vset.pattern.permute.xlu0 0
        %3219 = vperm.xlu0 %3218, %v3070
        %v3220 = vpop.permute.xlu0 %3219
        %3223 = vset.pattern.permute.xlu0 0
        %3224 = vperm.xlu0 %3223, %v3071
        %v3225 = vpop.permute.xlu0 %3224
        %3228 = vset.pattern.permute.xlu0 0
        %3229 = vperm.xlu0 %3228, %v3072
        %v3230 = vpop.permute.xlu0 %3229
        %3233 = vset.pattern.permute.xlu0 0
        %3234 = vperm.xlu0 %3233, %v3073
        %v3235 = vpop.permute.xlu0 %3234
        %3238 = vset.pattern.permute.xlu0 0
        %3239 = vperm.xlu0 %3238, %v3074
        %v3240 = vpop.permute.xlu0 %3239
        %3243 = vset.pattern.permute.xlu0 0
        %3244 = vperm.xlu0 %3243, %v3075
        %v3245 = vpop.permute.xlu0 %3244
        %3248 = vset.pattern.permute.xlu0 0
        %3249 = vperm.xlu0 %3248, %v3076
        %v3250 = vpop.permute.xlu0 %3249
        %3253 = vset.pattern.permute.xlu0 0
        %3254 = vperm.xlu0 %3253, %v3077
        %v3255 = vpop.permute.xlu0 %3254
        %3258 = vset.pattern.permute.xlu0 0
        %3259 = vperm.xlu0 %3258, %v3078
        %v3260 = vpop.permute.xlu0 %3259
        %3263 = vset.pattern.permute.xlu0 0
        %3264 = vperm.xlu0 %3263, %v3079
        %v3265 = vpop.permute.xlu0 %3264
        %3268 = vset.pattern.permute.xlu0 0
        %3269 = vperm.xlu0 %3268, %v3080
        %v3270 = vpop.permute.xlu0 %3269
        %3273 = vset.pattern.permute.xlu0 0
        %3274 = vperm.xlu0 %3273, %v3081
        %v3275 = vpop.permute.xlu0 %3274
        %3278 = vset.pattern.permute.xlu0 0
        %3279 = vperm.xlu0 %3278, %v3082
        %v3280 = vpop.permute.xlu0 %3279
        %3283 = vset.pattern.permute.xlu0 0
        %3284 = vperm.xlu0 %3283, %v3083
        %v3285 = vpop.permute.xlu0 %3284
        %v3287 = vmul.f32 %v2842, %v3090
        %v3288 = vmul.f32 %v2843, %v3095
        %v3289 = vmul.f32 %v2844, %v3100
        %v3290 = vmul.f32 %v2845, %v3105
        %v3291 = vmul.f32 %v2846, %v3110
        %v3292 = vmul.f32 %v2847, %v3115
        %v3293 = vmul.f32 %v2848, %v3120
        %v3294 = vmul.f32 %v2849, %v3125
        %v3295 = vmul.f32 %v2850, %v3130
        %v3296 = vmul.f32 %v2851, %v3135
        %v3297 = vmul.f32 %v2852, %v3140
        %v3298 = vmul.f32 %v2853, %v3145
        %v3299 = vmul.f32 %v2854, %v3150
        %v3300 = vmul.f32 %v2855, %v3155
        %v3301 = vmul.f32 %v2856, %v3160
        %v3302 = vmul.f32 %v2857, %v3165
        %v3303 = vmul.f32 %v2858, %v3170
        %v3304 = vmul.f32 %v2859, %v3175
        %v3305 = vmul.f32 %v2860, %v3180
        %v3306 = vmul.f32 %v2861, %v3185
        %v3307 = vmul.f32 %v2862, %v3190
        %v3308 = vmul.f32 %v2863, %v3195
        %v3309 = vmul.f32 %v2864, %v3200
        %v3310 = vmul.f32 %v2865, %v3205
        %v3311 = vmul.f32 %v2866, %v3210
        %v3312 = vmul.f32 %v2867, %v3215
        %v3313 = vmul.f32 %v2868, %v3220
        %v3314 = vmul.f32 %v2869, %v3225
        %v3315 = vmul.f32 %v2870, %v3230
        %v3316 = vmul.f32 %v2871, %v3235
        %v3317 = vmul.f32 %v2872, %v3240
        %v3318 = vmul.f32 %v2873, %v3245
        %v3319 = vmul.f32 %v2874, %v3250
        %v3320 = vmul.f32 %v2875, %v3255
        %v3321 = vmul.f32 %v2876, %v3260
        %v3322 = vmul.f32 %v2877, %v3265
        %v3323 = vmul.f32 %v2878, %v3270
        %v3324 = vmul.f32 %v2879, %v3275
        %v3325 = vmul.f32 %v2880, %v3280
        %v3326 = vmul.f32 %v2881, %v3285
        %v3327 = vsel %vm404, %v3287, 0.0
        %v3328 = vsel %vm404, %v3288, 0.0
        %v3329 = vadd.f32 %v3327, %v3328
        %v3330 = vsel %vm404, %v3289, 0.0
        %v3331 = vadd.f32 %v3329, %v3330
        %v3332 = vsel %vm404, %v3290, 0.0
        %v3333 = vadd.f32 %v3331, %v3332
        %v3334 = vsel %vm404, %v3291, 0.0
        %v3335 = vadd.f32 %v3333, %v3334
        %v3336 = vrot.slane %v3335, 4
        %v3337 = vadd.f32 %v3335, %v3336
        %v3338 = vrot.slane %v3337, 2
        %v3339 = vadd.f32 %v3337, %v3338
        %v3340 = vrot.slane %v3339, 1
        %v3341 = vadd.f32 %v3339, %v3340
        %v3342 = vsel %vm404, %v3292, 0.0
        %v3343 = vsel %vm404, %v3293, 0.0
        %v3344 = vadd.f32 %v3342, %v3343
        %v3345 = vsel %vm404, %v3294, 0.0
        %v3346 = vadd.f32 %v3344, %v3345
        %v3347 = vsel %vm404, %v3295, 0.0
        %v3348 = vadd.f32 %v3346, %v3347
        %v3349 = vsel %vm404, %v3296, 0.0
        %v3350 = vadd.f32 %v3348, %v3349
        %v3351 = vrot.slane %v3350, 4
        %v3352 = vadd.f32 %v3350, %v3351
        %v3353 = vrot.slane %v3352, 2
        %v3354 = vadd.f32 %v3352, %v3353
        %v3355 = vrot.slane %v3354, 1
        %v3356 = vadd.f32 %v3354, %v3355
        %v3357 = vsel %vm404, %v3297, 0.0
        %v3358 = vsel %vm404, %v3298, 0.0
        %v3359 = vadd.f32 %v3357, %v3358
        %v3360 = vsel %vm404, %v3299, 0.0
        %v3361 = vadd.f32 %v3359, %v3360
        %v3362 = vsel %vm404, %v3300, 0.0
        %v3363 = vadd.f32 %v3361, %v3362
        %v3364 = vsel %vm404, %v3301, 0.0
        %v3365 = vadd.f32 %v3363, %v3364
        %v3366 = vrot.slane %v3365, 4
        %v3367 = vadd.f32 %v3365, %v3366
        %v3368 = vrot.slane %v3367, 2
        %v3369 = vadd.f32 %v3367, %v3368
        %v3370 = vrot.slane %v3369, 1
        %v3371 = vadd.f32 %v3369, %v3370
        %v3372 = vsel %vm404, %v3302, 0.0
        %v3373 = vsel %vm404, %v3303, 0.0
        %v3374 = vadd.f32 %v3372, %v3373
        %v3375 = vsel %vm404, %v3304, 0.0
        %v3376 = vadd.f32 %v3374, %v3375
        %v3377 = vsel %vm404, %v3305, 0.0
        %v3378 = vadd.f32 %v3376, %v3377
        %v3379 = vsel %vm404, %v3306, 0.0
        %v3380 = vadd.f32 %v3378, %v3379
        %v3381 = vrot.slane %v3380, 4
        %v3382 = vadd.f32 %v3380, %v3381
        %v3383 = vrot.slane %v3382, 2
        %v3384 = vadd.f32 %v3382, %v3383
        %v3385 = vrot.slane %v3384, 1
        %v3386 = vadd.f32 %v3384, %v3385
        %v3387 = vsel %vm404, %v3307, 0.0
        %v3388 = vsel %vm404, %v3308, 0.0
        %v3389 = vadd.f32 %v3387, %v3388
        %v3390 = vsel %vm404, %v3309, 0.0
        %v3391 = vadd.f32 %v3389, %v3390
        %v3392 = vsel %vm404, %v3310, 0.0
        %v3393 = vadd.f32 %v3391, %v3392
        %v3394 = vsel %vm404, %v3311, 0.0
        %v3395 = vadd.f32 %v3393, %v3394
        %v3396 = vrot.slane %v3395, 4
        %v3397 = vadd.f32 %v3395, %v3396
        %v3398 = vrot.slane %v3397, 2
        %v3399 = vadd.f32 %v3397, %v3398
        %v3400 = vrot.slane %v3399, 1
        %v3401 = vadd.f32 %v3399, %v3400
        %v3402 = vsel %vm404, %v3312, 0.0
        %v3403 = vsel %vm404, %v3313, 0.0
        %v3404 = vadd.f32 %v3402, %v3403
        %v3405 = vsel %vm404, %v3314, 0.0
        %v3406 = vadd.f32 %v3404, %v3405
        %v3407 = vsel %vm404, %v3315, 0.0
        %v3408 = vadd.f32 %v3406, %v3407
        %v3409 = vsel %vm404, %v3316, 0.0
        %v3410 = vadd.f32 %v3408, %v3409
        %v3411 = vrot.slane %v3410, 4
        %v3412 = vadd.f32 %v3410, %v3411
        %v3413 = vrot.slane %v3412, 2
        %v3414 = vadd.f32 %v3412, %v3413
        %v3415 = vrot.slane %v3414, 1
        %v3416 = vadd.f32 %v3414, %v3415
        %v3417 = vsel %vm404, %v3317, 0.0
        %v3418 = vsel %vm404, %v3318, 0.0
        %v3419 = vadd.f32 %v3417, %v3418
        %v3420 = vsel %vm404, %v3319, 0.0
        %v3421 = vadd.f32 %v3419, %v3420
        %v3422 = vsel %vm404, %v3320, 0.0
        %v3423 = vadd.f32 %v3421, %v3422
        %v3424 = vsel %vm404, %v3321, 0.0
        %v3425 = vadd.f32 %v3423, %v3424
        %v3426 = vrot.slane %v3425, 4
        %v3427 = vadd.f32 %v3425, %v3426
        %v3428 = vrot.slane %v3427, 2
        %v3429 = vadd.f32 %v3427, %v3428
        %v3430 = vrot.slane %v3429, 1
        %v3431 = vadd.f32 %v3429, %v3430
        %v3432 = vsel %vm404, %v3322, 0.0
        %v3433 = vsel %vm404, %v3323, 0.0
        %v3434 = vadd.f32 %v3432, %v3433
        %v3435 = vsel %vm404, %v3324, 0.0
        %v3436 = vadd.f32 %v3434, %v3435
        %v3437 = vsel %vm404, %v3325, 0.0
        %v3438 = vadd.f32 %v3436, %v3437
        %v3439 = vsel %vm404, %v3326, 0.0
        %v3440 = vadd.f32 %v3438, %v3439
        %v3441 = vrot.slane %v3440, 4
        %v3442 = vadd.f32 %v3440, %v3441
        %v3443 = vrot.slane %v3442, 2
        %v3444 = vadd.f32 %v3442, %v3443
        %v3445 = vrot.slane %v3444, 1
        %v3446 = vadd.f32 %v3444, %v3445
        %v3447 = vrcp.pop %v3086
        %3449 = vset.pattern.permute.xlu0 0
        %3450 = vperm.xlu0 %3449, %v3447
        %v3451 = vpop.permute.xlu0 %3450
        %v3452 = vrot.slane %v3451, 1
        %v3453 = vrot.slane %v3451, 2
        %v3454 = vrot.slane %v3451, 3
        %v3455 = vrot.slane %v3451, 4
        %v3456 = vrot.slane %v3451, 5
        %v3457 = vrot.slane %v3451, 6
        %v3458 = vrot.slane %v3451, 7
        %v3467 = vmul.f32 %v3341, %v3451
        %v3468 = vmul.f32 %v3356, %v3452
        %v3469 = vmul.f32 %v3371, %v3453
        %v3470 = vmul.f32 %v3386, %v3454
        %v3471 = vmul.f32 %v3401, %v3455
        %v3472 = vmul.f32 %v3416, %v3456
        %v3473 = vmul.f32 %v3431, %v3457
        %v3474 = vmul.f32 %v3446, %v3458
        %v3475 = vld [vmem:[%s7] sm:$0xff]
        %v3476 = vld [vmem:[%s7 + $0x8] sm:$0xff]
        %v3477 = vld [vmem:[%s7 + $0x10] sm:$0xff]
        %v3478 = vld [vmem:[%s7 + $0x18] sm:$0xff]
        %v3479 = vld [vmem:[%s8] sm:$0x1]
        %v3481 = vlaneseq
        %v3482 = vshrl.u32 %v3481, 7
        %v3483 = vsub.s32 0, %v3482
        %v3484 = vrot.slane %v3479, %v3483
        %v3494 = vrot.slane %v3468, 7
        %v3495 = vsel %vm977, %v3494, %v3467
        %v3496 = vrot.slane %v3469, 6
        %v3497 = vsel %vm979, %v3496, %v3495
        %v3498 = vrot.slane %v3470, 5
        %v3499 = vsel %vm981, %v3498, %v3497
        %v3500 = vrot.slane %v3471, 4
        %v3501 = vsel %vm983, %v3500, %v3499
        %v3502 = vrot.slane %v3472, 3
        %v3503 = vsel %vm985, %v3502, %v3501
        %v3504 = vrot.slane %v3473, 2
        %v3505 = vsel %vm987, %v3504, %v3503
        %v3506 = vrot.slane %v3474, 1
        %v3507 = vsel %vm989, %v3506, %v3505
        %v3508 = vsel %vm404, %v3507, 0
        %3510 = vmatprep.subr.mxu0 0.0
        %3511 = vmatpush1.msra.mxu0 %v3475
        %3512 = vmatprep.subr.mxu0 0.0
        %3513 = vmatpush1.msra.mxu0 %v3476
        %3514 = vmatprep.subr.mxu0 0.0
        %3515 = vmatpush1.msra.mxu0 %v3477
        %3516 = vmatprep.subr.mxu0 0.0
        %3517 = vmatpush1.msra.mxu0 %v3478
        %3518 = vmatprep.subr.mxu0 0.0
        %3519 = vmatpush1.msra.mxu0 0.0
        %3520 = vmatprep.subr.mxu0 0.0
        %3521 = vmatpush1.msra.mxu0 0.0
        %3522 = vmatprep.subr.mxu0 0.0
        %3523 = vmatpush1.msra.mxu0 0.0
        %3524 = vmatprep.subr.mxu0 0.0
        %3525 = vmatpush1.msra.mxu0 0.0
        %3526 = vmatprep.subr.mxu0 0.0
        %3527 = vmatpush1.msra.mxu0 0.0
        %3528 = vmatprep.subr.mxu0 0.0
        %3529 = vmatpush1.msra.mxu0 0.0
        %3530 = vmatprep.subr.mxu0 0.0
        %3531 = vmatpush1.msra.mxu0 0.0
        %3532 = vmatprep.subr.mxu0 0.0
        %3533 = vmatpush1.msra.mxu0 0.0
        %3534 = vmatprep.subr.mxu0 0.0
        %3535 = vmatpush1.msra.mxu0 0.0
        %3536 = vmatprep.subr.mxu0 0.0
        %3537 = vmatpush1.msra.mxu0 0.0
        %3538 = vmatprep.subr.mxu0 0.0
        %3539 = vmatpush1.msra.mxu0 0.0
        %3540 = vmatprep.subr.mxu0 0.0
        %3541 = vmatpush1.msra.mxu0 0.0
        %3542 = vmatprep.subr.mxu0 0.0
        %3543 = vmatpush1.msra.mxu0 0.0
        %3544 = vmatprep.subr.mxu0 0.0
        %3545 = vmatpush1.msra.mxu0 0.0
        %3546 = vmatprep.subr.mxu0 0.0
        %3547 = vmatpush1.msra.mxu0 0.0
        %3548 = vmatprep.subr.mxu0 0.0
        %3549 = vmatpush1.msra.mxu0 0.0
        %3550 = vmatprep.subr.mxu0 0.0
        %3551 = vmatpush1.msra.mxu0 0.0
        %3552 = vmatprep.subr.mxu0 0.0
        %3553 = vmatpush1.msra.mxu0 0.0
        %3554 = vmatprep.subr.mxu0 0.0
        %3555 = vmatpush1.msra.mxu0 0.0
        %3556 = vmatprep.subr.mxu0 0.0
        %3557 = vmatpush1.msra.mxu0 0.0
        %3558 = vmatprep.subr.mxu0 0.0
        %3559 = vmatpush1.msra.mxu0 0.0
        %3560 = vmatprep.subr.mxu0 0.0
        %3561 = vmatpush1.msra.mxu0 0.0
        %3562 = vmatprep.subr.mxu0 0.0
        %3563 = vmatpush1.msra.mxu0 0.0
        %3564 = vmatprep.subr.mxu0 0.0
        %3565 = vmatpush1.msra.mxu0 0.0
        %3566 = vmatprep.subr.mxu0 0.0
        %3567 = vmatpush1.msra.mxu0 0.0
        %3568 = vmatprep.subr.mxu0 0.0
        %3569 = vmatpush1.msra.mxu0 0.0
        %3570 = vmatprep.subr.mxu0 0.0
        %3571 = vmatpush1.msra.mxu0 0.0
        %3572 = vmatprep.subr.mxu0 0.0
        %3573 = vmatpush1.msra.mxu0 0.0
        %3574 = vmatprep.mubr.f32.mxu0 0.0
        %3575 = vmatmul.mubr.f32.gmra.mrb[0].mxu0 %v3508
        %v3576 = vpop.f32.mrb[0].mxu0
        %v3577 = vadd.f32 %v3484, %v3576
        %v3578 = vpop.f32.mrb[0].mxu0
        %3579 = vdwg.mxu0
        %v3580 = vmul.f32 %v3577, %v3577
        %vm3581 = vcmask 130048
        %v3582 = vsel %vm3581, %v3580, 0.0
        %3583 = vadd.xlane.f32.xlu0 %v3582
        %v3584 = vpop.xlane.xlu0 %3583
        %v3585 = vrsqrt.pop %v3584
        %v3586 = vmul.f32 %v3584, %v3585
        %vm3587 = vcmp.eq.f32.partialorder %v3584, inf
        %v3588 = vsel %vm3587, %v3584, %v3586
        %vm3589 = vcmp.eq.f32.partialorder %v3584, 0.0
        %v3590 = vand.u32 %v3584, 2147483648
        %v3591 = vsel %vm3589, %v3590, %v3588
        %v3592 = vadd.f32 %v3591, 1e-08
        %v3593 = vrcp.pop %v3592
        %v3594 = vmul.f32 %v3577, %v3593
        %3595 = vst.msk [vmem:[%s341] sm:$0xff] %vm3581, %v3594
        %s3596 = sand.u32 %s230, 1
        %s3597 = scalar_lea.sflag [#allocation3], %s3596
        %s3598 = sand.u32 %s230, 1
        %s3599 = smul.addr %s3598, 8
        %s3600 = scalar_lea.vmem [#allocation2], %s3599
        // Predicated region
        $region57: #{tpu_custom_call.1} parent=55 // pred_check
          %p3601 = pneg %p240
        $region58: #{tpu_custom_call.1} parent=55 // pred_check_branch
          %3603 = sbr.rel (%p3601) target = $region60
        $region59: #{tpu_custom_call.1} parent=55 // pred_region
          %s3605 = ssub.s32 128, 128
          %3606 = vsyncadd %s3597, %s3605
          %s3607 = smul.addr %s23, 128
          %s3608 = scalar_lea.hbm %s9, %s3607
          %s3610 = sshll.u32 %s3600, 4
          %s3611 = int_to_ptr.vmem [resolvable:$true] %s3610
          %3613 = dma.vmem_to_hbm [thread:$0]  %s3611, 128, %s3608, %s3597
        $region60: #{tpu_custom_call.1} parent=55 // pred_fallthru
          _
      $region56: #{tpu_custom_call.1} parent=5 // pred_fallthru
        _
      %p3614 = scmp.le.s32.totalorder 2, %s18
      // Predicated region
      $region61: #{tpu_custom_call.1} parent=5 // pred_check
        %p3615 = pneg %p3614
      $region62: #{tpu_custom_call.1} parent=5 // pred_check_branch
        %3617 = sbr.rel (%p3615) target = $region64
      $region63: #{tpu_custom_call.1} parent=5 // pred_region
        %s3618 = ssub.s32 %s18, 2
        // Predicated region
        $region65: #{tpu_custom_call.1} parent=63 // pred_check
          %p3619 = pneg %p246
        $region66: #{tpu_custom_call.1} parent=63 // pred_check_branch
          %3621 = sbr.rel (%p3619) target = $region68
        $region67: #{tpu_custom_call.1} parent=63 // pred_region
          %s3622 = sand.u32 %s231, 1
          %s3623 = scalar_lea.sflag [#allocation3], %s3622
          %s3624 = sand.u32 %s231, 1
          %s3625 = smul.addr %s3624, 8
          %s3626 = scalar_lea.vmem [#allocation2], %s3625
          %3627 = dma.done %s3623, 128
        $region68: #{tpu_custom_call.1} parent=63 // pred_fallthru
          _
      $region64: #{tpu_custom_call.1} parent=5 // pred_fallthru
        _
    $region6: #{tpu_custom_call.1} parent=1 // loop_footer
      %s22 = sadd.s32 1, %s18
    $region7: #{tpu_custom_call.1} parent=1 // loop_footer_branch
      %17 = sbr.rel target = $region3
    $region8: #{tpu_custom_call.1} parent=1 // loop_exit
      _
    %3628 = vsyncpa [#allocation3], 1
    %s3629 = scalar_lea.sflag [#allocation3], 1
    %3630 = vsyncpa %s3629, 1

</llo_original>
